<compile_context>
chip_gen: v7x
topology: tpu7x:2x2x1
jax: 0.10.0
libtpu: 0.0.40
codegen_flags: <defaults>
</compile_context>

<pallas_src>
import math

import numpy as np
import jax
import jax.numpy as jnp
from jax.experimental import pallas as pl
from jax.experimental.pallas import tpu as pltpu

# ----------------------------- tiny DINO config -----------------------------
PATCH = 14
DINO_IMAGE_SIZE = 28            # 2x2 = 4 patches, S = 5 tokens
HIDDEN = 32
NUM_HEADS = 4
HEAD_DIM = HIDDEN // NUM_HEADS
NUM_LAYERS = 2
MLP_HIDDEN = 4 * HIDDEN
LN_EPS = 1e-6
IMAGENET_MEAN = np.array([0.485, 0.456, 0.406], dtype=np.float32)
IMAGENET_STD = np.array([0.229, 0.224, 0.225], dtype=np.float32)


# -------------------- bicubic interpolation weight matrices -----------------
def _cubic_weight(x, a=-0.75):
    x = abs(float(x))
    if x <= 1.0:
        return (a + 2.0) * x**3 - (a + 3.0) * x**2 + 1.0
    if x < 2.0:
        return a * x**3 - 5.0 * a * x**2 + 8.0 * a * x - 4.0 * a
    return 0.0


def bicubic_matrix(in_size, out_size):
    """(out_size, in_size) matrix matching F.interpolate(bicubic, align_corners=False)."""
    scale = in_size / out_size
    mat = np.zeros((out_size, in_size), dtype=np.float32)
    for i in range(out_size):
        src = (i + 0.5) * scale - 0.5
        f = math.floor(src)
        t = src - f
        for k in range(-1, 3):
            w = _cubic_weight(k - t)
            idx = int(np.clip(f + k, 0, in_size - 1))
            mat[i, idx] += w
    return mat


# ------------------------- parameter pre-composition -------------------------
def prepare_fused_params(params, image_h, image_w):
    """Fold resize+normalize+patch-embed+pos/cls, QKV concat, attention scale, layerscale
    and the LN1/LN2 affines into kernel-ready f32 tensors (done once, outside the kernel)."""
    hi = jax.lax.Precision.HIGHEST
    gh = gw = DINO_IMAGE_SIZE // PATCH
    p_tok = gh * gw
    s_tok = p_tok + 1

    wh = jnp.asarray(bicubic_matrix(image_h, DINO_IMAGE_SIZE))       # (28, H)
    ww = jnp.asarray(bicubic_matrix(image_w, DINO_IMAGE_SIZE))       # (28, W)
    whp = wh.reshape(gh, PATCH, image_h)
    wwp = ww.reshape(gw, PATCH, image_w)
    wp = params["patch_w"].reshape(3, PATCH, PATCH, HIDDEN)
    mean = jnp.asarray(IMAGENET_MEAN)
    std = jnp.asarray(IMAGENET_STD)

    # A[c,y,x,pr,pc,d] = sum_{i,j} Wp[c,i,j,d] * wh[pr*14+i, y] * ww[pc*14+j, x] / std[c]
    amap = jnp.einsum('cijd,riy,sjx->cyxrsd', wp, whp, wwp, precision=hi)
    amap = amap / std[:, None, None, None, None, None]
    a_patch = amap.reshape(3 * image_h * image_w, p_tok, HIDDEN)
    b_eff = params["patch_b"] - jnp.einsum('cijd,c->d', wp, mean / std, precision=hi)

    pos = params["pos_embed"][0]                                     # (S, HIDDEN)
    cls = params["cls_token"][0, 0]                                  # (HIDDEN,)
    a_full = jnp.concatenate(
        [jnp.zeros((3 * image_h * image_w, 1, HIDDEN), jnp.float32), a_patch],
        axis=1).reshape(3 * image_h * image_w, s_tok * HIDDEN)
    b_full = jnp.concatenate(
        [(cls + pos[0])[None, :], b_eff[None, :] + pos[1:]],
        axis=0).reshape(1, s_tok * HIDDEN)

    scale = 1.0 / math.sqrt(HEAD_DIM)
    keys = ["wqkv", "bqkv", "wo", "bo", "w1", "b1", "w2", "b2"]
    stacks = {k: [] for k in keys}
    for layer in params["layers"]:
        # fold attention scale into Wq/bq, then fuse QKV
        wq = layer["wq"] * scale
        bq = layer["bq"] * scale
        wqkv = jnp.concatenate([wq, layer["wk"], layer["wv"]], axis=1)        # (D, 3D)
        bqkv = jnp.concatenate([bq, layer["bk"], layer["bv"]])                # (3D,)
        # fold LN1 affine (gamma/beta) into the fused QKV projection
        wqkv_f = layer["ln1_g"][:, None] * wqkv
        bqkv_f = bqkv + jnp.einsum('d,dm->m', layer["ln1_b"], wqkv, precision=hi)
        stacks["wqkv"].append(wqkv_f)
        stacks["bqkv"].append(bqkv_f.reshape(1, 3 * HIDDEN))
        # fold layerscale 1 into Wo/bo
        stacks["wo"].append(layer["wo"] * layer["ls1"][None, :])
        stacks["bo"].append((layer["bo"] * layer["ls1"]).reshape(1, HIDDEN))
        # fold LN2 affine into the first MLP matmul
        w1_f = layer["ln2_g"][:, None] * layer["w1"]
        b1_f = layer["b1"] + jnp.einsum('d,dm->m', layer["ln2_b"], layer["w1"], precision=hi)
        stacks["w1"].append(w1_f)
        stacks["b1"].append(b1_f.reshape(1, MLP_HIDDEN))
        # fold layerscale 2 into W2/b2
        stacks["w2"].append(layer["w2"] * layer["ls2"][None, :])
        stacks["b2"].append((layer["b2"] * layer["ls2"]).reshape(1, HIDDEN))

    fused = {k: jnp.stack(v) for k, v in stacks.items()}
    fused["a_full"] = a_full
    fused["b_full"] = b_full
    fused["fln_g"] = params["final_ln_g"].reshape(1, HIDDEN)
    fused["fln_b"] = params["final_ln_b"].reshape(1, HIDDEN)
    return fused


# ------------------------------ fused Pallas kernel ---------------------------
def _fused_dino_kernel(img_ref, a_ref, b_ref,
                       wqkv_ref, bqkv_ref, wo_ref, bo_ref,
                       w1_ref, b1_ref, w2_ref, b2_ref,
                       flng_ref, flnb_ref,
                       feat_ref, attn_ref, x_sc):
    n, s_tok, d = x_sc.shape
    n_layers = wqkv_ref.shape[0]
    n_heads = NUM_HEADS
    dh = d // n_heads
    p_tok = s_tok - 1

    def normalize(v):
        # LN affine (gamma/beta) is folded into the following weight matrices.
        mu = jnp.mean(v, axis=-1, keepdims=True)
        var = jnp.mean(jnp.square(v - mu), axis=-1, keepdims=True)
        return (v - mu) * jax.lax.rsqrt(var + LN_EPS)

    def gelu(v):
        # TODO(synk): HF DINOv2 uses exact (erf) GELU; tanh approximation used here
        # (the pure-JAX reference below uses the same approximation).
        return 0.5 * v * (1.0 + jnp.tanh(
            0.7978845608028654 * (v + 0.044715 * v * v * v)))

    def matmul(lhs, w):
        # (n, s, k) @ (k, m) -> (n, s, m) via a batched MXU matmul (weights broadcast once).
        wb = jnp.broadcast_to(w[None], (n,) + tuple(w.shape))
        return jnp.einsum('nsk,nkm->nsm', lhs, wb,
                          preferred_element_type=jnp.float32)

    # Pre-composed resize + normalize + patch-embed + cls/pos: one (n,3HW)x(3HW,S*D) matmul.
    tok = jnp.dot(img_ref[...], a_ref[...],
                  preferred_element_type=jnp.float32) + b_ref[...]     # (n, S*D)
    for s in range(s_tok):
        x_sc[:, s:s + 1, :] = tok[:, s * d:(s + 1) * d][:, None, :]
    x = x_sc[...]                                                      # (n, S, D)

    cls_attn = jnp.zeros((n, 1, p_tok), jnp.float32)
    for l in range(n_layers):
        last_layer = (l == n_layers - 1)

        # --- attention block (pre-norm; scale + LN1 affine folded into Wqkv/bqkv,
        #     layerscale folded into Wo/bo) ---
        h1 = normalize(x)
        qkv = matmul(h1, wqkv_ref[l]) + bqkv_ref[l]                    # (n, S, 3D)
        ctx_parts = []
        attn_acc = jnp.zeros((n, 1, p_tok), jnp.float32)
        for h in range(n_heads):
            q = qkv[:, :, h * dh:(h + 1) * dh]
            k = qkv[:, :, d + h * dh:d + (h + 1) * dh]
            v = qkv[:, :, 2 * d + h * dh:2 * d + (h + 1) * dh]
            sc = jnp.einsum('nqd,nkd->nqk', q, k,
                            preferred_element_type=jnp.float32)        # (n, S, S)
            sc = sc - jnp.max(sc, axis=-1, keepdims=True)
            e = jnp.exp(sc)
            probs = e * pl.reciprocal(jnp.sum(e, axis=-1, keepdims=True), approx=True)
            if last_layer:                       # only the last layer's attention is emitted
                attn_acc = attn_acc + probs[:, 0:1, 1:]                # cls -> patch row
            ctx_parts.append(jnp.einsum('nqk,nkd->nqd', probs, v,
                                        preferred_element_type=jnp.float32))
        if last_layer:
            cls_attn = attn_acc * (1.0 / n_heads)
        ctx = jnp.concatenate(ctx_parts, axis=-1)                      # (n, S, D)
        x = x + matmul(ctx, wo_ref[l]) + bo_ref[l]

        # --- MLP block (LN2 affine folded into W1/b1, layerscale into W2/b2) ---
        h2 = normalize(x)
        m = gelu(matmul(h2, w1_ref[l]) + b1_ref[l])
        x = x + matmul(m, w2_ref[l]) + b2_ref[l]

    xf = normalize(x) * flng_ref[...] + flnb_ref[...]                  # final LN (affine kept)
    cls_tok = xf[:, 0:1, :]                                            # (n, 1, D)
    patch_mean = jnp.mean(xf[:, 1:, :], axis=1, keepdims=True)         # (n, 1, D)
    feat_ref[...] = jnp.concatenate([cls_tok, patch_mean], axis=-1)    # (n, 1, 2D)
    attn_ref[...] = cls_attn                                           # (n, 1, P)


@jax.jit
def image_dino_encoder(image, fused_params):
    n, c, h, w = image.shape
    assert c == 3
    gh = gw = DINO_IMAGE_SIZE // PATCH
    p_tok = gh * gw
    s_tok = p_tok + 1
    img_flat = image.reshape(n, c * h * w)

    feat, attn = pl.pallas_call(
        _fused_dino_kernel,
        out_shape=(jax.ShapeDtypeStruct((n, 1, 2 * HIDDEN), jnp.float32),
                   jax.ShapeDtypeStruct((n, 1, p_tok), jnp.float32)),
        scratch_shapes=[pltpu.VMEM((n, s_tok, HIDDEN), jnp.float32)],
    )(img_flat, fused_params["a_full"], fused_params["b_full"],
      fused_params["wqkv"], fused_params["bqkv"],
      fused_params["wo"], fused_params["bo"],
      fused_params["w1"], fused_params["b1"],
      fused_params["w2"], fused_params["b2"],
      fused_params["fln_g"], fused_params["fln_b"])

    return {"image_features": feat.reshape(n, 2 * HIDDEN),
            "image_attentions": attn.reshape(n, gh, gw)}


# ------------------------------ parameters ----------------------------------
def init_params(key):
    def nrm(k, shape, scale=0.02):
        return scale * jax.random.normal(k, shape, dtype=jnp.float32)

    keys = jax.random.split(key, 4 + NUM_LAYERS)
    num_patches = (DINO_IMAGE_SIZE // PATCH) ** 2
    fk = jax.random.split(keys[3], 2)
    params = {
        "patch_w": nrm(keys[0], (3 * PATCH * PATCH, HIDDEN)),
        "patch_b": jnp.zeros((HIDDEN,), jnp.float32),
        "cls_token": nrm(keys[1], (1, 1, HIDDEN)),
        "pos_embed": nrm(keys[2], (1, num_patches + 1, HIDDEN)),
        # non-trivial final-LN affine so the fused kernel is exercised end-to-end
        "final_ln_g": jax.random.uniform(fk[0], (HIDDEN,), jnp.float32, 0.8, 1.2),
        "final_ln_b": nrm(fk[1], (HIDDEN,), 0.05),
        "layers": [],
    }
    for li in range(NUM_LAYERS):
        lk = jax.random.split(keys[4 + li], 12)
        params["layers"].append({
            # non-trivial LN affines so the LN->weight folding is validated
            "ln1_g": jax.random.uniform(lk[8], (HIDDEN,), jnp.float32, 0.8, 1.2),
            "ln1_b": nrm(lk[9], (HIDDEN,), 0.05),
            "wq": nrm(lk[0], (HIDDEN, HIDDEN)), "bq": jnp.zeros((HIDDEN,), jnp.float32),
            "wk": nrm(lk[1], (HIDDEN, HIDDEN)), "bk": jnp.zeros((HIDDEN,), jnp.float32),
            "wv": nrm(lk[2], (HIDDEN, HIDDEN)), "bv": jnp.zeros((HIDDEN,), jnp.float32),
            "wo": nrm(lk[3], (HIDDEN, HIDDEN)), "bo": jnp.zeros((HIDDEN,), jnp.float32),
            "ls1": jax.random.uniform(lk[6], (HIDDEN,), jnp.float32, 0.5, 1.5),
            "ln2_g": jax.random.uniform(lk[10], (HIDDEN,), jnp.float32, 0.8, 1.2),
            "ln2_b": nrm(lk[11], (HIDDEN,), 0.05),
            "w1": nrm(lk[4], (HIDDEN, MLP_HIDDEN)), "b1": jnp.zeros((MLP_HIDDEN,), jnp.float32),
            "w2": nrm(lk[5], (MLP_HIDDEN, HIDDEN)), "b2": jnp.zeros((HIDDEN,), jnp.float32),
            "ls2": jax.random.uniform(lk[7], (HIDDEN,), jnp.float32, 0.5, 1.5),
        })
    return params


# --------------------- pure-JAX (unfused) reference forward ------------------
def reference_forward(image, params):
    hi = jax.lax.Precision.HIGHEST
    n, c, h, w = image.shape
    gh = gw = DINO_IMAGE_SIZE // PATCH
    p_tok = gh * gw
    s_tok = p_tok + 1

    wh = jnp.asarray(bicubic_matrix(h, DINO_IMAGE_SIZE))
    ww = jnp.asarray(bicubic_matrix(w, DINO_IMAGE_SIZE))
    proc = jnp.einsum('sy,ncyx,tx->ncst', wh, image, ww, precision=hi)
    proc = (proc - jnp.asarray(IMAGENET_MEAN).reshape(1, 3, 1, 1)) / \
           jnp.asarray(IMAGENET_STD).reshape(1, 3, 1, 1)

    patches = proc.reshape(n, 3, gh, PATCH, gw, PATCH).transpose(0, 2, 4, 1, 3, 5)
    patches = patches.reshape(n, p_tok, 3 * PATCH * PATCH)
    x = jnp.einsum('npf,fd->npd', patches, params["patch_w"], precision=hi) + params["patch_b"]
    cls = jnp.broadcast_to(params["cls_token"], (n, 1, HIDDEN))
    x = jnp.concatenate([cls, x], axis=1) + params["pos_embed"]

    def ln(v, g, b):
        mu = v.mean(-1, keepdims=True)
        var = ((v - mu) ** 2).mean(-1, keepdims=True)
        return (v - mu) * jax.lax.rsqrt(var + LN_EPS) * g + b

    def gelu(v):
        return 0.5 * v * (1.0 + jnp.tanh(0.7978845608028654 * (v + 0.044715 * v ** 3)))

    last_probs = None
    for layer in params["layers"]:
        h1 = ln(x, layer["ln1_g"], layer["ln1_b"])
        q = jnp.einsum('nsd,dk->nsk', h1, layer["wq"], precision=hi) + layer["bq"]
        k = jnp.einsum('nsd,dk->nsk', h1, layer["wk"], precision=hi) + layer["bk"]
        v = jnp.einsum('nsd,dk->nsk', h1, layer["wv"], precision=hi) + layer["bv"]

        def heads(t):
            return t.reshape(n, s_tok, NUM_HEADS, HEAD_DIM).transpose(0, 2, 1, 3)

        qh, kh, vh = heads(q), heads(k), heads(v)
        sc = jnp.einsum('nhqd,nhkd->nhqk', qh, kh, precision=hi) / math.sqrt(HEAD_DIM)
        sc = sc - sc.max(-1, keepdims=True)
        e = jnp.exp(sc)
        probs = e / e.sum(-1, keepdims=True)
        last_probs = probs
        ctx = jnp.einsum('nhqk,nhkd->nhqd', probs, vh, precision=hi)
        ctx = ctx.transpose(0, 2, 1, 3).reshape(n, s_tok, HIDDEN)
        attn_out = jnp.einsum('nsd,dk->nsk', ctx, layer["wo"], precision=hi) + layer["bo"]
        x = x + layer["ls1"] * attn_out

        h2 = ln(x, layer["ln2_g"], layer["ln2_b"])
        m = gelu(jnp.einsum('nsd,dk->nsk', h2, layer["w1"], precision=hi) + layer["b1"])
        m = jnp.einsum('nsd,dk->nsk', m, layer["w2"], precision=hi) + layer["b2"]
        x = x + layer["ls2"] * m

    xf = ln(x, params["final_ln_g"], params["final_ln_b"])
    features = jnp.concatenate([xf[:, 0], xf[:, 1:].mean(1)], axis=-1)
    cls_attn = last_probs.mean(1)[:, 0, 1:].reshape(n, gh, gw)
    return {"image_features": features, "image_attentions": cls_attn}


# ----------------------------------- main ------------------------------------
if __name__ == "__main__":
    key = jax.random.PRNGKey(0)
    k_img, k_params = jax.random.split(key)
    image = jax.random.uniform(k_img, (2, 3, 16, 16), dtype=jnp.float32)
    params = init_params(k_params)

    # One-time weight folding (resize+normalize+patch-embed composition, QKV fusion,
    # attention-scale, layerscale and LN-affine folds).
    fused = prepare_fused_params(params, image.shape[2], image.shape[3])

    out = image_dino_encoder(image, fused)
    jax.block_until_ready(out)

    gh = DINO_IMAGE_SIZE // PATCH
    assert out["image_features"].shape == (2, 2 * HIDDEN)
    assert out["image_attentions"].shape == (2, gh, gh)
    assert np.all(np.isfinite(np.asarray(out["image_features"])))
    assert np.all(np.isfinite(np.asarray(out["image_attentions"])))

    # Validate the fused kernel (and all weight folds) against the unfused JAX reference.
    ref = reference_forward(image, params)
    np.testing.assert_allclose(np.asarray(out["image_features"]),
                               np.asarray(ref["image_features"]), rtol=2e-2, atol=2e-2)
    np.testing.assert_allclose(np.asarray(out["image_attentions"]),
                               np.asarray(ref["image_attentions"]), rtol=2e-2, atol=2e-2)

    print("KERNEL_OK")
</pallas_src>

<mosaic_0001>
module attributes {stable_mosaic.version = 11 : i64} {
  func.func @_fused_dino_kernel(%arg0: memref<2x768xf32, #tpu.memory_space<vmem>>, %arg1: memref<768x160xf32, #tpu.memory_space<vmem>>, %arg2: memref<1x160xf32, #tpu.memory_space<vmem>>, %arg3: memref<2x32x96xf32, #tpu.memory_space<vmem>>, %arg4: memref<2x1x96xf32, #tpu.memory_space<vmem>>, %arg5: memref<2x32x32xf32, #tpu.memory_space<vmem>>, %arg6: memref<2x1x32xf32, #tpu.memory_space<vmem>>, %arg7: memref<2x32x128xf32, #tpu.memory_space<vmem>>, %arg8: memref<2x1x128xf32, #tpu.memory_space<vmem>>, %arg9: memref<2x128x32xf32, #tpu.memory_space<vmem>>, %arg10: memref<2x1x32xf32, #tpu.memory_space<vmem>>, %arg11: memref<1x32xf32, #tpu.memory_space<vmem>>, %arg12: memref<1x32xf32, #tpu.memory_space<vmem>>, %arg13: memref<2x1x64xf32, #tpu.memory_space<vmem>>, %arg14: memref<2x1x4xf32, #tpu.memory_space<vmem>>, %arg15: memref<2x5x32xf32, #tpu.memory_space<vmem>>) attributes {dimension_semantics = [], scalar_prefetch = 0 : i64, scratch_operands = 1 : i64, tpu.core_type = #tpu.core_type<tc>} {
    %c0 = arith.constant 0 : index
    %c0_0 = arith.constant 0 : index
    %0 = vector.load %arg0[%c0, %c0_0] : memref<2x768xf32, #tpu.memory_space<vmem>>, vector<2x768xf32>
    %c0_1 = arith.constant 0 : index
    %c0_2 = arith.constant 0 : index
    %1 = vector.load %arg1[%c0_1, %c0_2] : memref<768x160xf32, #tpu.memory_space<vmem>>, vector<768x160xf32>
    %cst = arith.constant dense<0.000000e+00> : vector<2x160xf32>
    %2 = tpu.matmul %0, %1, %cst {dimension_numbers = #tpu.dot_dimension_numbers<[1], [0], [0], [1], [0, 0, 1, 1], [], []>} : vector<2x768xf32>, vector<768x160xf32>, vector<2x160xf32> -> vector<2x160xf32>
    %c0_3 = arith.constant 0 : index
    %c0_4 = arith.constant 0 : index
    %3 = vector.load %arg2[%c0_3, %c0_4] : memref<1x160xf32, #tpu.memory_space<vmem>>, vector<1x160xf32>
    %4 = vector.broadcast %3 : vector<1x160xf32> to vector<2x160xf32>
    %5 = arith.addf %2, %4 : vector<2x160xf32>
    %6 = vector.extract_strided_slice %5 {offsets = [0, 0], sizes = [2, 32], strides = [1, 1]} : vector<2x160xf32> to vector<2x32xf32>
    %7 = vector.shape_cast %6 : vector<2x32xf32> to vector<2x1x32xf32>
    %c0_5 = arith.constant 0 : index
    %c0_6 = arith.constant 0 : index
    %c0_7 = arith.constant 0 : index
    %8 = vector.load %arg15[%c0_5, %c0_6, %c0_7] : memref<2x5x32xf32, #tpu.memory_space<vmem>>, vector<2x1x32xf32>
    tpu.vector_store %arg15[%c0_5, %c0_6, %c0_7], %7 {strides = array<i32>} : memref<2x5x32xf32, #tpu.memory_space<vmem>>, vector<2x1x32xf32>,
    %9 = vector.extract_strided_slice %5 {offsets = [0, 32], sizes = [2, 32], strides = [1, 1]} : vector<2x160xf32> to vector<2x32xf32>
    %10 = vector.shape_cast %9 : vector<2x32xf32> to vector<2x1x32xf32>
    %c0_8 = arith.constant 0 : index
    %c1 = arith.constant 1 : index
    %c0_9 = arith.constant 0 : index
    %11 = vector.load %arg15[%c0_8, %c1, %c0_9] : memref<2x5x32xf32, #tpu.memory_space<vmem>>, vector<2x1x32xf32>
    tpu.vector_store %arg15[%c0_8, %c1, %c0_9], %10 {strides = array<i32>} : memref<2x5x32xf32, #tpu.memory_space<vmem>>, vector<2x1x32xf32>,
    %12 = vector.extract_strided_slice %5 {offsets = [0, 64], sizes = [2, 32], strides = [1, 1]} : vector<2x160xf32> to vector<2x32xf32>
    %13 = vector.shape_cast %12 : vector<2x32xf32> to vector<2x1x32xf32>
    %c0_10 = arith.constant 0 : index
    %c2 = arith.constant 2 : index
    %c0_11 = arith.constant 0 : index
    %14 = vector.load %arg15[%c0_10, %c2, %c0_11] : memref<2x5x32xf32, #tpu.memory_space<vmem>>, vector<2x1x32xf32>
    tpu.vector_store %arg15[%c0_10, %c2, %c0_11], %13 {strides = array<i32>} : memref<2x5x32xf32, #tpu.memory_space<vmem>>, vector<2x1x32xf32>,
    %15 = vector.extract_strided_slice %5 {offsets = [0, 96], sizes = [2, 32], strides = [1, 1]} : vector<2x160xf32> to vector<2x32xf32>
    %16 = vector.shape_cast %15 : vector<2x32xf32> to vector<2x1x32xf32>
    %c0_12 = arith.constant 0 : index
    %c3 = arith.constant 3 : index
    %c0_13 = arith.constant 0 : index
    %17 = vector.load %arg15[%c0_12, %c3, %c0_13] : memref<2x5x32xf32, #tpu.memory_space<vmem>>, vector<2x1x32xf32>
    tpu.vector_store %arg15[%c0_12, %c3, %c0_13], %16 {strides = array<i32>} : memref<2x5x32xf32, #tpu.memory_space<vmem>>, vector<2x1x32xf32>,
    %18 = vector.extract_strided_slice %5 {offsets = [0, 128], sizes = [2, 32], strides = [1, 1]} : vector<2x160xf32> to vector<2x32xf32>
    %19 = vector.shape_cast %18 : vector<2x32xf32> to vector<2x1x32xf32>
    %c0_14 = arith.constant 0 : index
    %c4 = arith.constant 4 : index
    %c0_15 = arith.constant 0 : index
    %20 = vector.load %arg15[%c0_14, %c4, %c0_15] : memref<2x5x32xf32, #tpu.memory_space<vmem>>, vector<2x1x32xf32>
    tpu.vector_store %arg15[%c0_14, %c4, %c0_15], %19 {strides = array<i32>} : memref<2x5x32xf32, #tpu.memory_space<vmem>>, vector<2x1x32xf32>,
    %c0_16 = arith.constant 0 : index
    %c0_17 = arith.constant 0 : index
    %c0_18 = arith.constant 0 : index
    %21 = vector.load %arg15[%c0_16, %c0_17, %c0_18] : memref<2x5x32xf32, #tpu.memory_space<vmem>>, vector<2x5x32xf32>
    %cst_19 = arith.constant dense<0.000000e+00> : vector<2x5xf32>
    %22 = vector.multi_reduction <add>, %21, %cst_19 [2] : vector<2x5x32xf32> to vector<2x5xf32>
    %23 = vector.shape_cast %22 : vector<2x5xf32> to vector<2x5x1xf32>
    %cst_20 = arith.constant 3.200000e+01 : f32
    %24 = vector.broadcast %cst_20 : f32 to vector<2x5x1xf32>
    %25 = arith.divf %23, %24 : vector<2x5x1xf32>
    %26 = vector.broadcast %25 : vector<2x5x1xf32> to vector<2x5x32xf32>
    %27 = arith.subf %21, %26 : vector<2x5x32xf32>
    %28 = arith.mulf %27, %27 : vector<2x5x32xf32>
    %cst_21 = arith.constant dense<0.000000e+00> : vector<2x5xf32>
    %29 = vector.multi_reduction <add>, %28, %cst_21 [2] : vector<2x5x32xf32> to vector<2x5xf32>
    %30 = vector.shape_cast %29 : vector<2x5xf32> to vector<2x5x1xf32>
    %cst_22 = arith.constant 3.200000e+01 : f32
    %31 = vector.broadcast %cst_22 : f32 to vector<2x5x1xf32>
    %32 = arith.divf %30, %31 : vector<2x5x1xf32>
    %33 = vector.broadcast %25 : vector<2x5x1xf32> to vector<2x5x32xf32>
    %34 = arith.subf %21, %33 : vector<2x5x32xf32>
    %cst_23 = arith.constant 9.99999997E-7 : f32
    %35 = vector.broadcast %cst_23 : f32 to vector<2x5x1xf32>
    %36 = arith.addf %32, %35 : vector<2x5x1xf32>
    %37 = math.rsqrt %36 : vector<2x5x1xf32>
    %38 = vector.broadcast %37 : vector<2x5x1xf32> to vector<2x5x32xf32>
    %39 = arith.mulf %34, %38 : vector<2x5x32xf32>
    %c0_24 = arith.constant 0 : index
    %c0_25 = arith.constant 0 : index
    %c0_26 = arith.constant 0 : index
    %40 = vector.load %arg3[%c0_24, %c0_25, %c0_26] : memref<2x32x96xf32, #tpu.memory_space<vmem>>, vector<1x32x96xf32>
    %41 = vector.shape_cast %40 : vector<1x32x96xf32> to vector<32x96xf32>
    %42 = vector.shape_cast %41 : vector<32x96xf32> to vector<1x32x96xf32>
    %43 = vector.shape_cast %42 : vector<1x32x96xf32> to vector<1x32x96xf32>
    %44 = vector.broadcast %43 : vector<1x32x96xf32> to vector<2x32x96xf32>
    "tpu.trace_start"() <{level = 10 : i32, message = "nsk,nkm->nsm"}> : () -> ()
    %cst_27 = arith.constant dense<0.000000e+00> : vector<2x5x96xf32>
    %45 = tpu.matmul %39, %44, %cst_27 {dimension_numbers = #tpu.dot_dimension_numbers<[2], [1], [1], [2], [0, 0, 0, 1, 1, 2], [0], [0]>} : vector<2x5x32xf32>, vector<2x32x96xf32>, vector<2x5x96xf32> -> vector<2x5x96xf32>
    "tpu.trace_stop"() : () -> ()
    %c0_28 = arith.constant 0 : index
    %c0_29 = arith.constant 0 : index
    %c0_30 = arith.constant 0 : index
    %46 = vector.load %arg4[%c0_28, %c0_29, %c0_30] : memref<2x1x96xf32, #tpu.memory_space<vmem>>, vector<1x1x96xf32>
    %47 = vector.shape_cast %46 : vector<1x1x96xf32> to vector<1x96xf32>
    %48 = vector.shape_cast %47 : vector<1x96xf32> to vector<1x1x96xf32>
    %49 = vector.broadcast %48 : vector<1x1x96xf32> to vector<2x5x96xf32>
    %50 = arith.addf %45, %49 : vector<2x5x96xf32>
    %51 = vector.extract_strided_slice %50 {offsets = [0, 0, 0], sizes = [2, 5, 8], strides = [1, 1, 1]} : vector<2x5x96xf32> to vector<2x5x8xf32>
    %52 = vector.extract_strided_slice %50 {offsets = [0, 0, 32], sizes = [2, 5, 8], strides = [1, 1, 1]} : vector<2x5x96xf32> to vector<2x5x8xf32>
    %53 = vector.extract_strided_slice %50 {offsets = [0, 0, 64], sizes = [2, 5, 8], strides = [1, 1, 1]} : vector<2x5x96xf32> to vector<2x5x8xf32>
    "tpu.trace_start"() <{level = 10 : i32, message = "nqd,nkd->nqk"}> : () -> ()
    %cst_31 = arith.constant dense<0.000000e+00> : vector<2x5x5xf32>
    %54 = tpu.matmul %51, %52, %cst_31 {dimension_numbers = #tpu.dot_dimension_numbers<[2], [2], [1], [1], [0, 0, 0, 1, 1, 1], [0], [0]>} : vector<2x5x8xf32>, vector<2x5x8xf32>, vector<2x5x5xf32> -> vector<2x5x5xf32>
    "tpu.trace_stop"() : () -> ()
    %cst_32 = arith.constant dense<0xFF800000> : vector<2x5xf32>
    %55 = vector.multi_reduction <maximumf>, %54, %cst_32 [2] : vector<2x5x5xf32> to vector<2x5xf32>
    %56 = vector.shape_cast %55 : vector<2x5xf32> to vector<2x5x1xf32>
    %57 = vector.broadcast %56 : vector<2x5x1xf32> to vector<2x5x5xf32>
    %58 = arith.subf %54, %57 : vector<2x5x5xf32>
    %59 = math.exp %58 : vector<2x5x5xf32>
    %cst_33 = arith.constant dense<0.000000e+00> : vector<2x5xf32>
    %60 = vector.multi_reduction <add>, %59, %cst_33 [2] : vector<2x5x5xf32> to vector<2x5xf32>
    %61 = vector.shape_cast %60 : vector<2x5xf32> to vector<2x5x1xf32>
    %62 = tpu.reciprocal %61 {approx = true} : vector<2x5x1xf32> -> vector<2x5x1xf32>
    %63 = vector.broadcast %62 : vector<2x5x1xf32> to vector<2x5x5xf32>
    %64 = arith.mulf %59, %63 : vector<2x5x5xf32>
    "tpu.trace_start"() <{level = 10 : i32, message = "nqk,nkd->nqd"}> : () -> ()
    %cst_34 = arith.constant dense<0.000000e+00> : vector<2x5x8xf32>
    %65 = tpu.matmul %64, %53, %cst_34 {dimension_numbers = #tpu.dot_dimension_numbers<[2], [1], [1], [2], [0, 0, 0, 1, 1, 2], [0], [0]>} : vector<2x5x5xf32>, vector<2x5x8xf32>, vector<2x5x8xf32> -> vector<2x5x8xf32>
    "tpu.trace_stop"() : () -> ()
    %66 = vector.extract_strided_slice %50 {offsets = [0, 0, 8], sizes = [2, 5, 8], strides = [1, 1, 1]} : vector<2x5x96xf32> to vector<2x5x8xf32>
    %67 = vector.extract_strided_slice %50 {offsets = [0, 0, 40], sizes = [2, 5, 8], strides = [1, 1, 1]} : vector<2x5x96xf32> to vector<2x5x8xf32>
    %68 = vector.extract_strided_slice %50 {offsets = [0, 0, 72], sizes = [2, 5, 8], strides = [1, 1, 1]} : vector<2x5x96xf32> to vector<2x5x8xf32>
    "tpu.trace_start"() <{level = 10 : i32, message = "nqd,nkd->nqk"}> : () -> ()
    %cst_35 = arith.constant dense<0.000000e+00> : vector<2x5x5xf32>
    %69 = tpu.matmul %66, %67, %cst_35 {dimension_numbers = #tpu.dot_dimension_numbers<[2], [2], [1], [1], [0, 0, 0, 1, 1, 1], [0], [0]>} : vector<2x5x8xf32>, vector<2x5x8xf32>, vector<2x5x5xf32> -> vector<2x5x5xf32>
    "tpu.trace_stop"() : () -> ()
    %cst_36 = arith.constant dense<0xFF800000> : vector<2x5xf32>
    %70 = vector.multi_reduction <maximumf>, %69, %cst_36 [2] : vector<2x5x5xf32> to vector<2x5xf32>
    %71 = vector.shape_cast %70 : vector<2x5xf32> to vector<2x5x1xf32>
    %72 = vector.broadcast %71 : vector<2x5x1xf32> to vector<2x5x5xf32>
    %73 = arith.subf %69, %72 : vector<2x5x5xf32>
    %74 = math.exp %73 : vector<2x5x5xf32>
    %cst_37 = arith.constant dense<0.000000e+00> : vector<2x5xf32>
    %75 = vector.multi_reduction <add>, %74, %cst_37 [2] : vector<2x5x5xf32> to vector<2x5xf32>
    %76 = vector.shape_cast %75 : vector<2x5xf32> to vector<2x5x1xf32>
    %77 = tpu.reciprocal %76 {approx = true} : vector<2x5x1xf32> -> vector<2x5x1xf32>
    %78 = vector.broadcast %77 : vector<2x5x1xf32> to vector<2x5x5xf32>
    %79 = arith.mulf %74, %78 : vector<2x5x5xf32>
    "tpu.trace_start"() <{level = 10 : i32, message = "nqk,nkd->nqd"}> : () -> ()
    %cst_38 = arith.constant dense<0.000000e+00> : vector<2x5x8xf32>
    %80 = tpu.matmul %79, %68, %cst_38 {dimension_numbers = #tpu.dot_dimension_numbers<[2], [1], [1], [2], [0, 0, 0, 1, 1, 2], [0], [0]>} : vector<2x5x5xf32>, vector<2x5x8xf32>, vector<2x5x8xf32> -> vector<2x5x8xf32>
    "tpu.trace_stop"() : () -> ()
    %81 = vector.extract_strided_slice %50 {offsets = [0, 0, 16], sizes = [2, 5, 8], strides = [1, 1, 1]} : vector<2x5x96xf32> to vector<2x5x8xf32>
    %82 = vector.extract_strided_slice %50 {offsets = [0, 0, 48], sizes = [2, 5, 8], strides = [1, 1, 1]} : vector<2x5x96xf32> to vector<2x5x8xf32>
    %83 = vector.extract_strided_slice %50 {offsets = [0, 0, 80], sizes = [2, 5, 8], strides = [1, 1, 1]} : vector<2x5x96xf32> to vector<2x5x8xf32>
    "tpu.trace_start"() <{level = 10 : i32, message = "nqd,nkd->nqk"}> : () -> ()
    %cst_39 = arith.constant dense<0.000000e+00> : vector<2x5x5xf32>
    %84 = tpu.matmul %81, %82, %cst_39 {dimension_numbers = #tpu.dot_dimension_numbers<[2], [2], [1], [1], [0, 0, 0, 1, 1, 1], [0], [0]>} : vector<2x5x8xf32>, vector<2x5x8xf32>, vector<2x5x5xf32> -> vector<2x5x5xf32>
    "tpu.trace_stop"() : () -> ()
    %cst_40 = arith.constant dense<0xFF800000> : vector<2x5xf32>
    %85 = vector.multi_reduction <maximumf>, %84, %cst_40 [2] : vector<2x5x5xf32> to vector<2x5xf32>
    %86 = vector.shape_cast %85 : vector<2x5xf32> to vector<2x5x1xf32>
    %87 = vector.broadcast %86 : vector<2x5x1xf32> to vector<2x5x5xf32>
    %88 = arith.subf %84, %87 : vector<2x5x5xf32>
    %89 = math.exp %88 : vector<2x5x5xf32>
    %cst_41 = arith.constant dense<0.000000e+00> : vector<2x5xf32>
    %90 = vector.multi_reduction <add>, %89, %cst_41 [2] : vector<2x5x5xf32> to vector<2x5xf32>
    %91 = vector.shape_cast %90 : vector<2x5xf32> to vector<2x5x1xf32>
    %92 = tpu.reciprocal %91 {approx = true} : vector<2x5x1xf32> -> vector<2x5x1xf32>
    %93 = vector.broadcast %92 : vector<2x5x1xf32> to vector<2x5x5xf32>
    %94 = arith.mulf %89, %93 : vector<2x5x5xf32>
    "tpu.trace_start"() <{level = 10 : i32, message = "nqk,nkd->nqd"}> : () -> ()
    %cst_42 = arith.constant dense<0.000000e+00> : vector<2x5x8xf32>
    %95 = tpu.matmul %94, %83, %cst_42 {dimension_numbers = #tpu.dot_dimension_numbers<[2], [1], [1], [2], [0, 0, 0, 1, 1, 2], [0], [0]>} : vector<2x5x5xf32>, vector<2x5x8xf32>, vector<2x5x8xf32> -> vector<2x5x8xf32>
    "tpu.trace_stop"() : () -> ()
    %96 = vector.extract_strided_slice %50 {offsets = [0, 0, 24], sizes = [2, 5, 8], strides = [1, 1, 1]} : vector<2x5x96xf32> to vector<2x5x8xf32>
    %97 = vector.extract_strided_slice %50 {offsets = [0, 0, 56], sizes = [2, 5, 8], strides = [1, 1, 1]} : vector<2x5x96xf32> to vector<2x5x8xf32>
    %98 = vector.extract_strided_slice %50 {offsets = [0, 0, 88], sizes = [2, 5, 8], strides = [1, 1, 1]} : vector<2x5x96xf32> to vector<2x5x8xf32>
    "tpu.trace_start"() <{level = 10 : i32, message = "nqd,nkd->nqk"}> : () -> ()
    %cst_43 = arith.constant dense<0.000000e+00> : vector<2x5x5xf32>
    %99 = tpu.matmul %96, %97, %cst_43 {dimension_numbers = #tpu.dot_dimension_numbers<[2], [2], [1], [1], [0, 0, 0, 1, 1, 1], [0], [0]>} : vector<2x5x8xf32>, vector<2x5x8xf32>, vector<2x5x5xf32> -> vector<2x5x5xf32>
    "tpu.trace_stop"() : () -> ()
    %cst_44 = arith.constant dense<0xFF800000> : vector<2x5xf32>
    %100 = vector.multi_reduction <maximumf>, %99, %cst_44 [2] : vector<2x5x5xf32> to vector<2x5xf32>
    %101 = vector.shape_cast %100 : vector<2x5xf32> to vector<2x5x1xf32>
    %102 = vector.broadcast %101 : vector<2x5x1xf32> to vector<2x5x5xf32>
    %103 = arith.subf %99, %102 : vector<2x5x5xf32>
    %104 = math.exp %103 : vector<2x5x5xf32>
    %cst_45 = arith.constant dense<0.000000e+00> : vector<2x5xf32>
    %105 = vector.multi_reduction <add>, %104, %cst_45 [2] : vector<2x5x5xf32> to vector<2x5xf32>
    %106 = vector.shape_cast %105 : vector<2x5xf32> to vector<2x5x1xf32>
    %107 = tpu.reciprocal %106 {approx = true} : vector<2x5x1xf32> -> vector<2x5x1xf32>
    %108 = vector.broadcast %107 : vector<2x5x1xf32> to vector<2x5x5xf32>
    %109 = arith.mulf %104, %108 : vector<2x5x5xf32>
    "tpu.trace_start"() <{level = 10 : i32, message = "nqk,nkd->nqd"}> : () -> ()
    %cst_46 = arith.constant dense<0.000000e+00> : vector<2x5x8xf32>
    %110 = tpu.matmul %109, %98, %cst_46 {dimension_numbers = #tpu.dot_dimension_numbers<[2], [1], [1], [2], [0, 0, 0, 1, 1, 2], [0], [0]>} : vector<2x5x5xf32>, vector<2x5x8xf32>, vector<2x5x8xf32> -> vector<2x5x8xf32>
    "tpu.trace_stop"() : () -> ()
    %111 = tpu.concatenate %65, %80, %95, %110 in 2 : vector<2x5x8xf32>, vector<2x5x8xf32>, vector<2x5x8xf32>, vector<2x5x8xf32> -> vector<2x5x32xf32>
    %c0_47 = arith.constant 0 : index
    %c0_48 = arith.constant 0 : index
    %c0_49 = arith.constant 0 : index
    %112 = vector.load %arg5[%c0_47, %c0_48, %c0_49] : memref<2x32x32xf32, #tpu.memory_space<vmem>>, vector<1x32x32xf32>
    %113 = vector.shape_cast %112 : vector<1x32x32xf32> to vector<32x32xf32>
    %114 = vector.shape_cast %113 : vector<32x32xf32> to vector<1x32x32xf32>
    %115 = vector.shape_cast %114 : vector<1x32x32xf32> to vector<1x32x32xf32>
    %116 = vector.broadcast %115 : vector<1x32x32xf32> to vector<2x32x32xf32>
    "tpu.trace_start"() <{level = 10 : i32, message = "nsk,nkm->nsm"}> : () -> ()
    %cst_50 = arith.constant dense<0.000000e+00> : vector<2x5x32xf32>
    %117 = tpu.matmul %111, %116, %cst_50 {dimension_numbers = #tpu.dot_dimension_numbers<[2], [1], [1], [2], [0, 0, 0, 1, 1, 2], [0], [0]>} : vector<2x5x32xf32>, vector<2x32x32xf32>, vector<2x5x32xf32> -> vector<2x5x32xf32>
    "tpu.trace_stop"() : () -> ()
    %118 = arith.addf %21, %117 : vector<2x5x32xf32>
    %c0_51 = arith.constant 0 : index
    %c0_52 = arith.constant 0 : index
    %c0_53 = arith.constant 0 : index
    %119 = vector.load %arg6[%c0_51, %c0_52, %c0_53] : memref<2x1x32xf32, #tpu.memory_space<vmem>>, vector<1x1x32xf32>
    %120 = vector.shape_cast %119 : vector<1x1x32xf32> to vector<1x32xf32>
    %121 = vector.shape_cast %120 : vector<1x32xf32> to vector<1x1x32xf32>
    %122 = vector.broadcast %121 : vector<1x1x32xf32> to vector<2x5x32xf32>
    %123 = arith.addf %118, %122 : vector<2x5x32xf32>
    %cst_54 = arith.constant dense<0.000000e+00> : vector<2x5xf32>
    %124 = vector.multi_reduction <add>, %123, %cst_54 [2] : vector<2x5x32xf32> to vector<2x5xf32>
    %125 = vector.shape_cast %124 : vector<2x5xf32> to vector<2x5x1xf32>
    %cst_55 = arith.constant 3.200000e+01 : f32
    %126 = vector.broadcast %cst_55 : f32 to vector<2x5x1xf32>
    %127 = arith.divf %125, %126 : vector<2x5x1xf32>
    %128 = vector.broadcast %127 : vector<2x5x1xf32> to vector<2x5x32xf32>
    %129 = arith.subf %123, %128 : vector<2x5x32xf32>
    %130 = arith.mulf %129, %129 : vector<2x5x32xf32>
    %cst_56 = arith.constant dense<0.000000e+00> : vector<2x5xf32>
    %131 = vector.multi_reduction <add>, %130, %cst_56 [2] : vector<2x5x32xf32> to vector<2x5xf32>
    %132 = vector.shape_cast %131 : vector<2x5xf32> to vector<2x5x1xf32>
    %cst_57 = arith.constant 3.200000e+01 : f32
    %133 = vector.broadcast %cst_57 : f32 to vector<2x5x1xf32>
    %134 = arith.divf %132, %133 : vector<2x5x1xf32>
    %135 = vector.broadcast %127 : vector<2x5x1xf32> to vector<2x5x32xf32>
    %136 = arith.subf %123, %135 : vector<2x5x32xf32>
    %cst_58 = arith.constant 9.99999997E-7 : f32
    %137 = vector.broadcast %cst_58 : f32 to vector<2x5x1xf32>
    %138 = arith.addf %134, %137 : vector<2x5x1xf32>
    %139 = math.rsqrt %138 : vector<2x5x1xf32>
    %140 = vector.broadcast %139 : vector<2x5x1xf32> to vector<2x5x32xf32>
    %141 = arith.mulf %136, %140 : vector<2x5x32xf32>
    %c0_59 = arith.constant 0 : index
    %c0_60 = arith.constant 0 : index
    %c0_61 = arith.constant 0 : index
    %142 = vector.load %arg7[%c0_59, %c0_60, %c0_61] : memref<2x32x128xf32, #tpu.memory_space<vmem>>, vector<1x32x128xf32>
    %143 = vector.shape_cast %142 : vector<1x32x128xf32> to vector<32x128xf32>
    %144 = vector.shape_cast %143 : vector<32x128xf32> to vector<1x32x128xf32>
    %145 = vector.shape_cast %144 : vector<1x32x128xf32> to vector<1x32x128xf32>
    %146 = vector.broadcast %145 : vector<1x32x128xf32> to vector<2x32x128xf32>
    "tpu.trace_start"() <{level = 10 : i32, message = "nsk,nkm->nsm"}> : () -> ()
    %cst_62 = arith.constant dense<0.000000e+00> : vector<2x5x128xf32>
    %147 = tpu.matmul %141, %146, %cst_62 {dimension_numbers = #tpu.dot_dimension_numbers<[2], [1], [1], [2], [0, 0, 0, 1, 1, 2], [0], [0]>} : vector<2x5x32xf32>, vector<2x32x128xf32>, vector<2x5x128xf32> -> vector<2x5x128xf32>
    "tpu.trace_stop"() : () -> ()
    %c0_63 = arith.constant 0 : index
    %c0_64 = arith.constant 0 : index
    %c0_65 = arith.constant 0 : index
    %148 = vector.load %arg8[%c0_63, %c0_64, %c0_65] : memref<2x1x128xf32, #tpu.memory_space<vmem>>, vector<1x1x128xf32>
    %149 = vector.shape_cast %148 : vector<1x1x128xf32> to vector<1x128xf32>
    %150 = vector.shape_cast %149 : vector<1x128xf32> to vector<1x1x128xf32>
    %151 = vector.broadcast %150 : vector<1x1x128xf32> to vector<2x5x128xf32>
    %152 = arith.addf %147, %151 : vector<2x5x128xf32>
    %cst_66 = arith.constant 5.000000e-01 : f32
    %153 = vector.broadcast %cst_66 : f32 to vector<2x5x128xf32>
    %154 = arith.mulf %153, %152 : vector<2x5x128xf32>
    %cst_67 = arith.constant 4.471500e-02 : f32
    %155 = vector.broadcast %cst_67 : f32 to vector<2x5x128xf32>
    %156 = arith.mulf %155, %152 : vector<2x5x128xf32>
    %157 = arith.mulf %156, %152 : vector<2x5x128xf32>
    %158 = arith.mulf %157, %152 : vector<2x5x128xf32>
    %159 = arith.addf %152, %158 : vector<2x5x128xf32>
    %cst_68 = arith.constant 0.797884583 : f32
    %160 = vector.broadcast %cst_68 : f32 to vector<2x5x128xf32>
    %161 = arith.mulf %160, %159 : vector<2x5x128xf32>
    %162 = math.tanh %161 : vector<2x5x128xf32>
    %cst_69 = arith.constant 1.000000e+00 : f32
    %163 = vector.broadcast %cst_69 : f32 to vector<2x5x128xf32>
    %164 = arith.addf %163, %162 : vector<2x5x128xf32>
    %165 = arith.mulf %154, %164 : vector<2x5x128xf32>
    %c0_70 = arith.constant 0 : index
    %c0_71 = arith.constant 0 : index
    %c0_72 = arith.constant 0 : index
    %166 = vector.load %arg9[%c0_70, %c0_71, %c0_72] : memref<2x128x32xf32, #tpu.memory_space<vmem>>, vector<1x128x32xf32>
    %167 = vector.shape_cast %166 : vector<1x128x32xf32> to vector<128x32xf32>
    %168 = vector.shape_cast %167 : vector<128x32xf32> to vector<1x128x32xf32>
    %169 = vector.shape_cast %168 : vector<1x128x32xf32> to vector<1x128x32xf32>
    %170 = vector.broadcast %169 : vector<1x128x32xf32> to vector<2x128x32xf32>
    "tpu.trace_start"() <{level = 10 : i32, message = "nsk,nkm->nsm"}> : () -> ()
    %cst_73 = arith.constant dense<0.000000e+00> : vector<2x5x32xf32>
    %171 = tpu.matmul %165, %170, %cst_73 {dimension_numbers = #tpu.dot_dimension_numbers<[2], [1], [1], [2], [0, 0, 0, 1, 1, 2], [0], [0]>} : vector<2x5x128xf32>, vector<2x128x32xf32>, vector<2x5x32xf32> -> vector<2x5x32xf32>
    "tpu.trace_stop"() : () -> ()
    %172 = arith.addf %123, %171 : vector<2x5x32xf32>
    %c0_74 = arith.constant 0 : index
    %c0_75 = arith.constant 0 : index
    %c0_76 = arith.constant 0 : index
    %173 = vector.load %arg10[%c0_74, %c0_75, %c0_76] : memref<2x1x32xf32, #tpu.memory_space<vmem>>, vector<1x1x32xf32>
    %174 = vector.shape_cast %173 : vector<1x1x32xf32> to vector<1x32xf32>
    %175 = vector.shape_cast %174 : vector<1x32xf32> to vector<1x1x32xf32>
    %176 = vector.broadcast %175 : vector<1x1x32xf32> to vector<2x5x32xf32>
    %177 = arith.addf %172, %176 : vector<2x5x32xf32>
    %cst_77 = arith.constant dense<0.000000e+00> : vector<2x5xf32>
    %178 = vector.multi_reduction <add>, %177, %cst_77 [2] : vector<2x5x32xf32> to vector<2x5xf32>
    %179 = vector.shape_cast %178 : vector<2x5xf32> to vector<2x5x1xf32>
    %cst_78 = arith.constant 3.200000e+01 : f32
    %180 = vector.broadcast %cst_78 : f32 to vector<2x5x1xf32>
    %181 = arith.divf %179, %180 : vector<2x5x1xf32>
    %182 = vector.broadcast %181 : vector<2x5x1xf32> to vector<2x5x32xf32>
    %183 = arith.subf %177, %182 : vector<2x5x32xf32>
    %184 = arith.mulf %183, %183 : vector<2x5x32xf32>
    %cst_79 = arith.constant dense<0.000000e+00> : vector<2x5xf32>
    %185 = vector.multi_reduction <add>, %184, %cst_79 [2] : vector<2x5x32xf32> to vector<2x5xf32>
    %186 = vector.shape_cast %185 : vector<2x5xf32> to vector<2x5x1xf32>
    %cst_80 = arith.constant 3.200000e+01 : f32
    %187 = vector.broadcast %cst_80 : f32 to vector<2x5x1xf32>
    %188 = arith.divf %186, %187 : vector<2x5x1xf32>
    %189 = vector.broadcast %181 : vector<2x5x1xf32> to vector<2x5x32xf32>
    %190 = arith.subf %177, %189 : vector<2x5x32xf32>
    %cst_81 = arith.constant 9.99999997E-7 : f32
    %191 = vector.broadcast %cst_81 : f32 to vector<2x5x1xf32>
    %192 = arith.addf %188, %191 : vector<2x5x1xf32>
    %193 = math.rsqrt %192 : vector<2x5x1xf32>
    %194 = vector.broadcast %193 : vector<2x5x1xf32> to vector<2x5x32xf32>
    %195 = arith.mulf %190, %194 : vector<2x5x32xf32>
    %c1_82 = arith.constant 1 : index
    %c0_83 = arith.constant 0 : index
    %c0_84 = arith.constant 0 : index
    %196 = vector.load %arg3[%c1_82, %c0_83, %c0_84] : memref<2x32x96xf32, #tpu.memory_space<vmem>>, vector<1x32x96xf32>
    %197 = vector.shape_cast %196 : vector<1x32x96xf32> to vector<32x96xf32>
    %198 = vector.shape_cast %197 : vector<32x96xf32> to vector<1x32x96xf32>
    %199 = vector.shape_cast %198 : vector<1x32x96xf32> to vector<1x32x96xf32>
    %200 = vector.broadcast %199 : vector<1x32x96xf32> to vector<2x32x96xf32>
    "tpu.trace_start"() <{level = 10 : i32, message = "nsk,nkm->nsm"}> : () -> ()
    %cst_85 = arith.constant dense<0.000000e+00> : vector<2x5x96xf32>
    %201 = tpu.matmul %195, %200, %cst_85 {dimension_numbers = #tpu.dot_dimension_numbers<[2], [1], [1], [2], [0, 0, 0, 1, 1, 2], [0], [0]>} : vector<2x5x32xf32>, vector<2x32x96xf32>, vector<2x5x96xf32> -> vector<2x5x96xf32>
    "tpu.trace_stop"() : () -> ()
    %c1_86 = arith.constant 1 : index
    %c0_87 = arith.constant 0 : index
    %c0_88 = arith.constant 0 : index
    %202 = vector.load %arg4[%c1_86, %c0_87, %c0_88] : memref<2x1x96xf32, #tpu.memory_space<vmem>>, vector<1x1x96xf32>
    %203 = vector.shape_cast %202 : vector<1x1x96xf32> to vector<1x96xf32>
    %204 = vector.shape_cast %203 : vector<1x96xf32> to vector<1x1x96xf32>
    %205 = vector.broadcast %204 : vector<1x1x96xf32> to vector<2x5x96xf32>
    %206 = arith.addf %201, %205 : vector<2x5x96xf32>
    %cst_89 = arith.constant 0.000000e+00 : f32
    %207 = vector.broadcast %cst_89 : f32 to vector<2x1x4xf32>
    %208 = vector.extract_strided_slice %206 {offsets = [0, 0, 0], sizes = [2, 5, 8], strides = [1, 1, 1]} : vector<2x5x96xf32> to vector<2x5x8xf32>
    %209 = vector.extract_strided_slice %206 {offsets = [0, 0, 32], sizes = [2, 5, 8], strides = [1, 1, 1]} : vector<2x5x96xf32> to vector<2x5x8xf32>
    %210 = vector.extract_strided_slice %206 {offsets = [0, 0, 64], sizes = [2, 5, 8], strides = [1, 1, 1]} : vector<2x5x96xf32> to vector<2x5x8xf32>
    "tpu.trace_start"() <{level = 10 : i32, message = "nqd,nkd->nqk"}> : () -> ()
    %cst_90 = arith.constant dense<0.000000e+00> : vector<2x5x5xf32>
    %211 = tpu.matmul %208, %209, %cst_90 {dimension_numbers = #tpu.dot_dimension_numbers<[2], [2], [1], [1], [0, 0, 0, 1, 1, 1], [0], [0]>} : vector<2x5x8xf32>, vector<2x5x8xf32>, vector<2x5x5xf32> -> vector<2x5x5xf32>
    "tpu.trace_stop"() : () -> ()
    %cst_91 = arith.constant dense<0xFF800000> : vector<2x5xf32>
    %212 = vector.multi_reduction <maximumf>, %211, %cst_91 [2] : vector<2x5x5xf32> to vector<2x5xf32>
    %213 = vector.shape_cast %212 : vector<2x5xf32> to vector<2x5x1xf32>
    %214 = vector.broadcast %213 : vector<2x5x1xf32> to vector<2x5x5xf32>
    %215 = arith.subf %211, %214 : vector<2x5x5xf32>
    %216 = math.exp %215 : vector<2x5x5xf32>
    %cst_92 = arith.constant dense<0.000000e+00> : vector<2x5xf32>
    %217 = vector.multi_reduction <add>, %216, %cst_92 [2] : vector<2x5x5xf32> to vector<2x5xf32>
    %218 = vector.shape_cast %217 : vector<2x5xf32> to vector<2x5x1xf32>
    %219 = tpu.reciprocal %218 {approx = true} : vector<2x5x1xf32> -> vector<2x5x1xf32>
    %220 = vector.broadcast %219 : vector<2x5x1xf32> to vector<2x5x5xf32>
    %221 = arith.mulf %216, %220 : vector<2x5x5xf32>
    %222 = vector.extract_strided_slice %221 {offsets = [0, 0, 1], sizes = [2, 1, 4], strides = [1, 1, 1]} : vector<2x5x5xf32> to vector<2x1x4xf32>
    %223 = arith.addf %207, %222 : vector<2x1x4xf32>
    "tpu.trace_start"() <{level = 10 : i32, message = "nqk,nkd->nqd"}> : () -> ()
    %cst_93 = arith.constant dense<0.000000e+00> : vector<2x5x8xf32>
    %224 = tpu.matmul %221, %210, %cst_93 {dimension_numbers = #tpu.dot_dimension_numbers<[2], [1], [1], [2], [0, 0, 0, 1, 1, 2], [0], [0]>} : vector<2x5x5xf32>, vector<2x5x8xf32>, vector<2x5x8xf32> -> vector<2x5x8xf32>
    "tpu.trace_stop"() : () -> ()
    %225 = vector.extract_strided_slice %206 {offsets = [0, 0, 8], sizes = [2, 5, 8], strides = [1, 1, 1]} : vector<2x5x96xf32> to vector<2x5x8xf32>
    %226 = vector.extract_strided_slice %206 {offsets = [0, 0, 40], sizes = [2, 5, 8], strides = [1, 1, 1]} : vector<2x5x96xf32> to vector<2x5x8xf32>
    %227 = vector.extract_strided_slice %206 {offsets = [0, 0, 72], sizes = [2, 5, 8], strides = [1, 1, 1]} : vector<2x5x96xf32> to vector<2x5x8xf32>
    "tpu.trace_start"() <{level = 10 : i32, message = "nqd,nkd->nqk"}> : () -> ()
    %cst_94 = arith.constant dense<0.000000e+00> : vector<2x5x5xf32>
    %228 = tpu.matmul %225, %226, %cst_94 {dimension_numbers = #tpu.dot_dimension_numbers<[2], [2], [1], [1], [0, 0, 0, 1, 1, 1], [0], [0]>} : vector<2x5x8xf32>, vector<2x5x8xf32>, vector<2x5x5xf32> -> vector<2x5x5xf32>
    "tpu.trace_stop"() : () -> ()
    %cst_95 = arith.constant dense<0xFF800000> : vector<2x5xf32>
    %229 = vector.multi_reduction <maximumf>, %228, %cst_95 [2] : vector<2x5x5xf32> to vector<2x5xf32>
    %230 = vector.shape_cast %229 : vector<2x5xf32> to vector<2x5x1xf32>
    %231 = vector.broadcast %230 : vector<2x5x1xf32> to vector<2x5x5xf32>
    %232 = arith.subf %228, %231 : vector<2x5x5xf32>
    %233 = math.exp %232 : vector<2x5x5xf32>
    %cst_96 = arith.constant dense<0.000000e+00> : vector<2x5xf32>
    %234 = vector.multi_reduction <add>, %233, %cst_96 [2] : vector<2x5x5xf32> to vector<2x5xf32>
    %235 = vector.shape_cast %234 : vector<2x5xf32> to vector<2x5x1xf32>
    %236 = tpu.reciprocal %235 {approx = true} : vector<2x5x1xf32> -> vector<2x5x1xf32>
    %237 = vector.broadcast %236 : vector<2x5x1xf32> to vector<2x5x5xf32>
    %238 = arith.mulf %233, %237 : vector<2x5x5xf32>
    %239 = vector.extract_strided_slice %238 {offsets = [0, 0, 1], sizes = [2, 1, 4], strides = [1, 1, 1]} : vector<2x5x5xf32> to vector<2x1x4xf32>
    %240 = arith.addf %223, %239 : vector<2x1x4xf32>
    "tpu.trace_start"() <{level = 10 : i32, message = "nqk,nkd->nqd"}> : () -> ()
    %cst_97 = arith.constant dense<0.000000e+00> : vector<2x5x8xf32>
    %241 = tpu.matmul %238, %227, %cst_97 {dimension_numbers = #tpu.dot_dimension_numbers<[2], [1], [1], [2], [0, 0, 0, 1, 1, 2], [0], [0]>} : vector<2x5x5xf32>, vector<2x5x8xf32>, vector<2x5x8xf32> -> vector<2x5x8xf32>
    "tpu.trace_stop"() : () -> ()
    %242 = vector.extract_strided_slice %206 {offsets = [0, 0, 16], sizes = [2, 5, 8], strides = [1, 1, 1]} : vector<2x5x96xf32> to vector<2x5x8xf32>
    %243 = vector.extract_strided_slice %206 {offsets = [0, 0, 48], sizes = [2, 5, 8], strides = [1, 1, 1]} : vector<2x5x96xf32> to vector<2x5x8xf32>
    %244 = vector.extract_strided_slice %206 {offsets = [0, 0, 80], sizes = [2, 5, 8], strides = [1, 1, 1]} : vector<2x5x96xf32> to vector<2x5x8xf32>
    "tpu.trace_start"() <{level = 10 : i32, message = "nqd,nkd->nqk"}> : () -> ()
    %cst_98 = arith.constant dense<0.000000e+00> : vector<2x5x5xf32>
    %245 = tpu.matmul %242, %243, %cst_98 {dimension_numbers = #tpu.dot_dimension_numbers<[2], [2], [1], [1], [0, 0, 0, 1, 1, 1], [0], [0]>} : vector<2x5x8xf32>, vector<2x5x8xf32>, vector<2x5x5xf32> -> vector<2x5x5xf32>
    "tpu.trace_stop"() : () -> ()
    %cst_99 = arith.constant dense<0xFF800000> : vector<2x5xf32>
    %246 = vector.multi_reduction <maximumf>, %245, %cst_99 [2] : vector<2x5x5xf32> to vector<2x5xf32>
    %247 = vector.shape_cast %246 : vector<2x5xf32> to vector<2x5x1xf32>
    %248 = vector.broadcast %247 : vector<2x5x1xf32> to vector<2x5x5xf32>
    %249 = arith.subf %245, %248 : vector<2x5x5xf32>
    %250 = math.exp %249 : vector<2x5x5xf32>
    %cst_100 = arith.constant dense<0.000000e+00> : vector<2x5xf32>
    %251 = vector.multi_reduction <add>, %250, %cst_100 [2] : vector<2x5x5xf32> to vector<2x5xf32>
    %252 = vector.shape_cast %251 : vector<2x5xf32> to vector<2x5x1xf32>
    %253 = tpu.reciprocal %252 {approx = true} : vector<2x5x1xf32> -> vector<2x5x1xf32>
    %254 = vector.broadcast %253 : vector<2x5x1xf32> to vector<2x5x5xf32>
    %255 = arith.mulf %250, %254 : vector<2x5x5xf32>
    %256 = vector.extract_strided_slice %255 {offsets = [0, 0, 1], sizes = [2, 1, 4], strides = [1, 1, 1]} : vector<2x5x5xf32> to vector<2x1x4xf32>
    %257 = arith.addf %240, %256 : vector<2x1x4xf32>
    "tpu.trace_start"() <{level = 10 : i32, message = "nqk,nkd->nqd"}> : () -> ()
    %cst_101 = arith.constant dense<0.000000e+00> : vector<2x5x8xf32>
    %258 = tpu.matmul %255, %244, %cst_101 {dimension_numbers = #tpu.dot_dimension_numbers<[2], [1], [1], [2], [0, 0, 0, 1, 1, 2], [0], [0]>} : vector<2x5x5xf32>, vector<2x5x8xf32>, vector<2x5x8xf32> -> vector<2x5x8xf32>
    "tpu.trace_stop"() : () -> ()
    %259 = vector.extract_strided_slice %206 {offsets = [0, 0, 24], sizes = [2, 5, 8], strides = [1, 1, 1]} : vector<2x5x96xf32> to vector<2x5x8xf32>
    %260 = vector.extract_strided_slice %206 {offsets = [0, 0, 56], sizes = [2, 5, 8], strides = [1, 1, 1]} : vector<2x5x96xf32> to vector<2x5x8xf32>
    %261 = vector.extract_strided_slice %206 {offsets = [0, 0, 88], sizes = [2, 5, 8], strides = [1, 1, 1]} : vector<2x5x96xf32> to vector<2x5x8xf32>
    "tpu.trace_start"() <{level = 10 : i32, message = "nqd,nkd->nqk"}> : () -> ()
    %cst_102 = arith.constant dense<0.000000e+00> : vector<2x5x5xf32>
    %262 = tpu.matmul %259, %260, %cst_102 {dimension_numbers = #tpu.dot_dimension_numbers<[2], [2], [1], [1], [0, 0, 0, 1, 1, 1], [0], [0]>} : vector<2x5x8xf32>, vector<2x5x8xf32>, vector<2x5x5xf32> -> vector<2x5x5xf32>
    "tpu.trace_stop"() : () -> ()
    %cst_103 = arith.constant dense<0xFF800000> : vector<2x5xf32>
    %263 = vector.multi_reduction <maximumf>, %262, %cst_103 [2] : vector<2x5x5xf32> to vector<2x5xf32>
    %264 = vector.shape_cast %263 : vector<2x5xf32> to vector<2x5x1xf32>
    %265 = vector.broadcast %264 : vector<2x5x1xf32> to vector<2x5x5xf32>
    %266 = arith.subf %262, %265 : vector<2x5x5xf32>
    %267 = math.exp %266 : vector<2x5x5xf32>
    %cst_104 = arith.constant dense<0.000000e+00> : vector<2x5xf32>
    %268 = vector.multi_reduction <add>, %267, %cst_104 [2] : vector<2x5x5xf32> to vector<2x5xf32>
    %269 = vector.shape_cast %268 : vector<2x5xf32> to vector<2x5x1xf32>
    %270 = tpu.reciprocal %269 {approx = true} : vector<2x5x1xf32> -> vector<2x5x1xf32>
    %271 = vector.broadcast %270 : vector<2x5x1xf32> to vector<2x5x5xf32>
    %272 = arith.mulf %267, %271 : vector<2x5x5xf32>
    %273 = vector.extract_strided_slice %272 {offsets = [0, 0, 1], sizes = [2, 1, 4], strides = [1, 1, 1]} : vector<2x5x5xf32> to vector<2x1x4xf32>
    %274 = arith.addf %257, %273 : vector<2x1x4xf32>
    "tpu.trace_start"() <{level = 10 : i32, message = "nqk,nkd->nqd"}> : () -> ()
    %cst_105 = arith.constant dense<0.000000e+00> : vector<2x5x8xf32>
    %275 = tpu.matmul %272, %261, %cst_105 {dimension_numbers = #tpu.dot_dimension_numbers<[2], [1], [1], [2], [0, 0, 0, 1, 1, 2], [0], [0]>} : vector<2x5x5xf32>, vector<2x5x8xf32>, vector<2x5x8xf32> -> vector<2x5x8xf32>
    "tpu.trace_stop"() : () -> ()
    %cst_106 = arith.constant 2.500000e-01 : f32
    %276 = vector.broadcast %cst_106 : f32 to vector<2x1x4xf32>
    %277 = arith.mulf %274, %276 : vector<2x1x4xf32>
    %278 = tpu.concatenate %224, %241, %258, %275 in 2 : vector<2x5x8xf32>, vector<2x5x8xf32>, vector<2x5x8xf32>, vector<2x5x8xf32> -> vector<2x5x32xf32>
    %c1_107 = arith.constant 1 : index
    %c0_108 = arith.constant 0 : index
    %c0_109 = arith.constant 0 : index
    %279 = vector.load %arg5[%c1_107, %c0_108, %c0_109] : memref<2x32x32xf32, #tpu.memory_space<vmem>>, vector<1x32x32xf32>
    %280 = vector.shape_cast %279 : vector<1x32x32xf32> to vector<32x32xf32>
    %281 = vector.shape_cast %280 : vector<32x32xf32> to vector<1x32x32xf32>
    %282 = vector.shape_cast %281 : vector<1x32x32xf32> to vector<1x32x32xf32>
    %283 = vector.broadcast %282 : vector<1x32x32xf32> to vector<2x32x32xf32>
    "tpu.trace_start"() <{level = 10 : i32, message = "nsk,nkm->nsm"}> : () -> ()
    %cst_110 = arith.constant dense<0.000000e+00> : vector<2x5x32xf32>
    %284 = tpu.matmul %278, %283, %cst_110 {dimension_numbers = #tpu.dot_dimension_numbers<[2], [1], [1], [2], [0, 0, 0, 1, 1, 2], [0], [0]>} : vector<2x5x32xf32>, vector<2x32x32xf32>, vector<2x5x32xf32> -> vector<2x5x32xf32>
    "tpu.trace_stop"() : () -> ()
    %285 = arith.addf %177, %284 : vector<2x5x32xf32>
    %c1_111 = arith.constant 1 : index
    %c0_112 = arith.constant 0 : index
    %c0_113 = arith.constant 0 : index
    %286 = vector.load %arg6[%c1_111, %c0_112, %c0_113] : memref<2x1x32xf32, #tpu.memory_space<vmem>>, vector<1x1x32xf32>
    %287 = vector.shape_cast %286 : vector<1x1x32xf32> to vector<1x32xf32>
    %288 = vector.shape_cast %287 : vector<1x32xf32> to vector<1x1x32xf32>
    %289 = vector.broadcast %288 : vector<1x1x32xf32> to vector<2x5x32xf32>
    %290 = arith.addf %285, %289 : vector<2x5x32xf32>
    %cst_114 = arith.constant dense<0.000000e+00> : vector<2x5xf32>
    %291 = vector.multi_reduction <add>, %290, %cst_114 [2] : vector<2x5x32xf32> to vector<2x5xf32>
    %292 = vector.shape_cast %291 : vector<2x5xf32> to vector<2x5x1xf32>
    %cst_115 = arith.constant 3.200000e+01 : f32
    %293 = vector.broadcast %cst_115 : f32 to vector<2x5x1xf32>
    %294 = arith.divf %292, %293 : vector<2x5x1xf32>
    %295 = vector.broadcast %294 : vector<2x5x1xf32> to vector<2x5x32xf32>
    %296 = arith.subf %290, %295 : vector<2x5x32xf32>
    %297 = arith.mulf %296, %296 : vector<2x5x32xf32>
    %cst_116 = arith.constant dense<0.000000e+00> : vector<2x5xf32>
    %298 = vector.multi_reduction <add>, %297, %cst_116 [2] : vector<2x5x32xf32> to vector<2x5xf32>
    %299 = vector.shape_cast %298 : vector<2x5xf32> to vector<2x5x1xf32>
    %cst_117 = arith.constant 3.200000e+01 : f32
    %300 = vector.broadcast %cst_117 : f32 to vector<2x5x1xf32>
    %301 = arith.divf %299, %300 : vector<2x5x1xf32>
    %302 = vector.broadcast %294 : vector<2x5x1xf32> to vector<2x5x32xf32>
    %303 = arith.subf %290, %302 : vector<2x5x32xf32>
    %cst_118 = arith.constant 9.99999997E-7 : f32
    %304 = vector.broadcast %cst_118 : f32 to vector<2x5x1xf32>
    %305 = arith.addf %301, %304 : vector<2x5x1xf32>
    %306 = math.rsqrt %305 : vector<2x5x1xf32>
    %307 = vector.broadcast %306 : vector<2x5x1xf32> to vector<2x5x32xf32>
    %308 = arith.mulf %303, %307 : vector<2x5x32xf32>
    %c1_119 = arith.constant 1 : index
    %c0_120 = arith.constant 0 : index
    %c0_121 = arith.constant 0 : index
    %309 = vector.load %arg7[%c1_119, %c0_120, %c0_121] : memref<2x32x128xf32, #tpu.memory_space<vmem>>, vector<1x32x128xf32>
    %310 = vector.shape_cast %309 : vector<1x32x128xf32> to vector<32x128xf32>
    %311 = vector.shape_cast %310 : vector<32x128xf32> to vector<1x32x128xf32>
    %312 = vector.shape_cast %311 : vector<1x32x128xf32> to vector<1x32x128xf32>
    %313 = vector.broadcast %312 : vector<1x32x128xf32> to vector<2x32x128xf32>
    "tpu.trace_start"() <{level = 10 : i32, message = "nsk,nkm->nsm"}> : () -> ()
    %cst_122 = arith.constant dense<0.000000e+00> : vector<2x5x128xf32>
    %314 = tpu.matmul %308, %313, %cst_122 {dimension_numbers = #tpu.dot_dimension_numbers<[2], [1], [1], [2], [0, 0, 0, 1, 1, 2], [0], [0]>} : vector<2x5x32xf32>, vector<2x32x128xf32>, vector<2x5x128xf32> -> vector<2x5x128xf32>
    "tpu.trace_stop"() : () -> ()
    %c1_123 = arith.constant 1 : index
    %c0_124 = arith.constant 0 : index
    %c0_125 = arith.constant 0 : index
    %315 = vector.load %arg8[%c1_123, %c0_124, %c0_125] : memref<2x1x128xf32, #tpu.memory_space<vmem>>, vector<1x1x128xf32>
    %316 = vector.shape_cast %315 : vector<1x1x128xf32> to vector<1x128xf32>
    %317 = vector.shape_cast %316 : vector<1x128xf32> to vector<1x1x128xf32>
    %318 = vector.broadcast %317 : vector<1x1x128xf32> to vector<2x5x128xf32>
    %319 = arith.addf %314, %318 : vector<2x5x128xf32>
    %cst_126 = arith.constant 5.000000e-01 : f32
    %320 = vector.broadcast %cst_126 : f32 to vector<2x5x128xf32>
    %321 = arith.mulf %320, %319 : vector<2x5x128xf32>
    %cst_127 = arith.constant 4.471500e-02 : f32
    %322 = vector.broadcast %cst_127 : f32 to vector<2x5x128xf32>
    %323 = arith.mulf %322, %319 : vector<2x5x128xf32>
    %324 = arith.mulf %323, %319 : vector<2x5x128xf32>
    %325 = arith.mulf %324, %319 : vector<2x5x128xf32>
    %326 = arith.addf %319, %325 : vector<2x5x128xf32>
    %cst_128 = arith.constant 0.797884583 : f32
    %327 = vector.broadcast %cst_128 : f32 to vector<2x5x128xf32>
    %328 = arith.mulf %327, %326 : vector<2x5x128xf32>
    %329 = math.tanh %328 : vector<2x5x128xf32>
    %cst_129 = arith.constant 1.000000e+00 : f32
    %330 = vector.broadcast %cst_129 : f32 to vector<2x5x128xf32>
    %331 = arith.addf %330, %329 : vector<2x5x128xf32>
    %332 = arith.mulf %321, %331 : vector<2x5x128xf32>
    %c1_130 = arith.constant 1 : index
    %c0_131 = arith.constant 0 : index
    %c0_132 = arith.constant 0 : index
    %333 = vector.load %arg9[%c1_130, %c0_131, %c0_132] : memref<2x128x32xf32, #tpu.memory_space<vmem>>, vector<1x128x32xf32>
    %334 = vector.shape_cast %333 : vector<1x128x32xf32> to vector<128x32xf32>
    %335 = vector.shape_cast %334 : vector<128x32xf32> to vector<1x128x32xf32>
    %336 = vector.shape_cast %335 : vector<1x128x32xf32> to vector<1x128x32xf32>
    %337 = vector.broadcast %336 : vector<1x128x32xf32> to vector<2x128x32xf32>
    "tpu.trace_start"() <{level = 10 : i32, message = "nsk,nkm->nsm"}> : () -> ()
    %cst_133 = arith.constant dense<0.000000e+00> : vector<2x5x32xf32>
    %338 = tpu.matmul %332, %337, %cst_133 {dimension_numbers = #tpu.dot_dimension_numbers<[2], [1], [1], [2], [0, 0, 0, 1, 1, 2], [0], [0]>} : vector<2x5x128xf32>, vector<2x128x32xf32>, vector<2x5x32xf32> -> vector<2x5x32xf32>
    "tpu.trace_stop"() : () -> ()
    %339 = arith.addf %290, %338 : vector<2x5x32xf32>
    %c1_134 = arith.constant 1 : index
    %c0_135 = arith.constant 0 : index
    %c0_136 = arith.constant 0 : index
    %340 = vector.load %arg10[%c1_134, %c0_135, %c0_136] : memref<2x1x32xf32, #tpu.memory_space<vmem>>, vector<1x1x32xf32>
    %341 = vector.shape_cast %340 : vector<1x1x32xf32> to vector<1x32xf32>
    %342 = vector.shape_cast %341 : vector<1x32xf32> to vector<1x1x32xf32>
    %343 = vector.broadcast %342 : vector<1x1x32xf32> to vector<2x5x32xf32>
    %344 = arith.addf %339, %343 : vector<2x5x32xf32>
    %cst_137 = arith.constant dense<0.000000e+00> : vector<2x5xf32>
    %345 = vector.multi_reduction <add>, %344, %cst_137 [2] : vector<2x5x32xf32> to vector<2x5xf32>
    %346 = vector.shape_cast %345 : vector<2x5xf32> to vector<2x5x1xf32>
    %cst_138 = arith.constant 3.200000e+01 : f32
    %347 = vector.broadcast %cst_138 : f32 to vector<2x5x1xf32>
    %348 = arith.divf %346, %347 : vector<2x5x1xf32>
    %349 = vector.broadcast %348 : vector<2x5x1xf32> to vector<2x5x32xf32>
    %350 = arith.subf %344, %349 : vector<2x5x32xf32>
    %351 = arith.mulf %350, %350 : vector<2x5x32xf32>
    %cst_139 = arith.constant dense<0.000000e+00> : vector<2x5xf32>
    %352 = vector.multi_reduction <add>, %351, %cst_139 [2] : vector<2x5x32xf32> to vector<2x5xf32>
    %353 = vector.shape_cast %352 : vector<2x5xf32> to vector<2x5x1xf32>
    %cst_140 = arith.constant 3.200000e+01 : f32
    %354 = vector.broadcast %cst_140 : f32 to vector<2x5x1xf32>
    %355 = arith.divf %353, %354 : vector<2x5x1xf32>
    %356 = vector.broadcast %348 : vector<2x5x1xf32> to vector<2x5x32xf32>
    %357 = arith.subf %344, %356 : vector<2x5x32xf32>
    %cst_141 = arith.constant 9.99999997E-7 : f32
    %358 = vector.broadcast %cst_141 : f32 to vector<2x5x1xf32>
    %359 = arith.addf %355, %358 : vector<2x5x1xf32>
    %360 = math.rsqrt %359 : vector<2x5x1xf32>
    %361 = vector.broadcast %360 : vector<2x5x1xf32> to vector<2x5x32xf32>
    %362 = arith.mulf %357, %361 : vector<2x5x32xf32>
    %c0_142 = arith.constant 0 : index
    %c0_143 = arith.constant 0 : index
    %363 = vector.load %arg11[%c0_142, %c0_143] : memref<1x32xf32, #tpu.memory_space<vmem>>, vector<1x32xf32>
    %364 = vector.shape_cast %363 : vector<1x32xf32> to vector<1x1x32xf32>
    %365 = vector.broadcast %364 : vector<1x1x32xf32> to vector<2x5x32xf32>
    %366 = arith.mulf %362, %365 : vector<2x5x32xf32>
    %c0_144 = arith.constant 0 : index
    %c0_145 = arith.constant 0 : index
    %367 = vector.load %arg12[%c0_144, %c0_145] : memref<1x32xf32, #tpu.memory_space<vmem>>, vector<1x32xf32>
    %368 = vector.shape_cast %367 : vector<1x32xf32> to vector<1x1x32xf32>
    %369 = vector.broadcast %368 : vector<1x1x32xf32> to vector<2x5x32xf32>
    %370 = arith.addf %366, %369 : vector<2x5x32xf32>
    %371 = vector.extract_strided_slice %370 {offsets = [0, 0, 0], sizes = [2, 1, 32], strides = [1, 1, 1]} : vector<2x5x32xf32> to vector<2x1x32xf32>
    %372 = vector.extract_strided_slice %370 {offsets = [0, 1, 0], sizes = [2, 4, 32], strides = [1, 1, 1]} : vector<2x5x32xf32> to vector<2x4x32xf32>
    %cst_146 = arith.constant dense<0.000000e+00> : vector<2x32xf32>
    %373 = vector.multi_reduction <add>, %372, %cst_146 [1] : vector<2x4x32xf32> to vector<2x32xf32>
    %374 = vector.shape_cast %373 : vector<2x32xf32> to vector<2x1x32xf32>
    %cst_147 = arith.constant 4.000000e+00 : f32
    %375 = vector.broadcast %cst_147 : f32 to vector<2x1x32xf32>
    %376 = arith.divf %374, %375 : vector<2x1x32xf32>
    %377 = tpu.concatenate %371, %376 in 2 : vector<2x1x32xf32>, vector<2x1x32xf32> -> vector<2x1x64xf32>
    %c0_148 = arith.constant 0 : index
    %c0_149 = arith.constant 0 : index
    %c0_150 = arith.constant 0 : index
    %378 = vector.load %arg13[%c0_148, %c0_149, %c0_150] : memref<2x1x64xf32, #tpu.memory_space<vmem>>, vector<2x1x64xf32>
    tpu.vector_store %arg13[%c0_148, %c0_149, %c0_150], %377 {strides = array<i32>} : memref<2x1x64xf32, #tpu.memory_space<vmem>>, vector<2x1x64xf32>,
    %c0_151 = arith.constant 0 : index
    %c0_152 = arith.constant 0 : index
    %c0_153 = arith.constant 0 : index
    %379 = vector.load %arg14[%c0_151, %c0_152, %c0_153] : memref<2x1x4xf32, #tpu.memory_space<vmem>>, vector<2x1x4xf32>
    tpu.vector_store %arg14[%c0_151, %c0_152, %c0_153], %277 {strides = array<i32>} : memref<2x1x4xf32, #tpu.memory_space<vmem>>, vector<2x1x4xf32>,
    return
  }
}

</mosaic_0001>

<llo_original>
// kernel: image_dino_encoder.1
$region0: #{image_dino_encoder.1}
  #allocation0 [shape = 'u32[]', space=smem, size = 0x4, offset = 0x4, fixed_abs, tag = 'smem constant byte address 0x4 - core index']
  #allocation1 [shape = 'u32[144,128]{1,0:T(1,128)}', space=vmem, size = 0x12000, scoped, tag = 'internal scratch']
  #allocation2 [shape = 'f32[2,5,32]{2,1,0:T(8,128)}', space=vmem, size = 0x2000, scoped, tag = 'scratch operand']
  %s0 = inlined_call_operand.vmem [shape: f32[2,768], index: 0, kind: input, shape index: {}]
  %s1 = inlined_call_operand.vmem [shape: f32[768,160], index: 1, kind: input, shape index: {}]
  %s2 = inlined_call_operand.vmem [shape: f32[1,160], index: 2, kind: input, shape index: {}]
  %s3 = inlined_call_operand.vmem [shape: f32[2,32,96], index: 3, kind: input, shape index: {}]
  %s4 = inlined_call_operand.vmem [shape: f32[2,1,96], index: 4, kind: input, shape index: {}]
  %s5 = inlined_call_operand.vmem [shape: f32[2,32,32], index: 5, kind: input, shape index: {}]
  %s6 = inlined_call_operand.vmem [shape: f32[2,1,32], index: 6, kind: input, shape index: {}]
  %s7 = inlined_call_operand.vmem [shape: f32[2,32,128], index: 7, kind: input, shape index: {}]
  %s8 = inlined_call_operand.vmem [shape: f32[2,1,128], index: 8, kind: input, shape index: {}]
  %s9 = inlined_call_operand.vmem [shape: f32[2,128,32], index: 9, kind: input, shape index: {}]
  %s10 = inlined_call_operand.vmem [shape: f32[2,1,32], index: 10, kind: input, shape index: {}]
  %s11 = inlined_call_operand.vmem [shape: f32[1,32], index: 11, kind: input, shape index: {}]
  %s12 = inlined_call_operand.vmem [shape: f32[1,32], index: 12, kind: input, shape index: {}]
  %s13 = inlined_call_operand.hbm [shape: f32[2,1,64], index: 13, kind: output, shape index: {0}]
  %s14 = inlined_call_operand.vmem [shape: f32[2,1,4], index: 14, kind: output, shape index: {1}]
  %15 = xla_tuple %s13, %s14
  %s16 = sld [smem:[#allocation0]]
  $region70: #{image_dino_encoder.1} parent=0
    _
  %s18 = ssub.s32 1, %s16
  %s19 = scalar_select 0, %s18, %s16
  $region1: #{image_dino_encoder.1} parent=0
    #allocation3 [shape = 'u8[1024]{0}', space=vmem, size = 0x400, scoped, tag = 'output window, operand 0, single buffered']
    #allocation4 [shape = 's32[1]{0}', space=sflag, size = 0x4, scoped, tag = 'scoped memory for image_dino_encoder.1']
    %20 = vsyncpa [#allocation4], 0
    // Predicated region
    $region2: #{image_dino_encoder.1} parent=1 // pred_check
      _
    $region3: #{image_dino_encoder.1} parent=1 // pred_check_branch
      %22 = sbr.rel (0) target = $region5
    $region4: #{image_dino_encoder.1} parent=1 // pred_region
      _
    $region5: #{image_dino_encoder.1} parent=1 // pred_fallthru
      _
    // Predicated region
    $region6: #{image_dino_encoder.1} parent=1 // pred_check
      _
    $region7: #{image_dino_encoder.1} parent=1 // pred_check_branch
      %24 = sbr.rel (0) target = $region9
    $region8: #{image_dino_encoder.1} parent=1 // pred_region
      _
    $region9: #{image_dino_encoder.1} parent=1 // pred_fallthru
      _
    // Predicated region
    $region10: #{image_dino_encoder.1} parent=1 // pred_check
      _
    $region11: #{image_dino_encoder.1} parent=1 // pred_check_branch
      %26 = sbr.rel (0) target = $region13
    $region12: #{image_dino_encoder.1} parent=1 // pred_region
      _
    $region13: #{image_dino_encoder.1} parent=1 // pred_fallthru
      _
    // Predicated region
    $region14: #{image_dino_encoder.1} parent=1 // pred_check
      _
    $region15: #{image_dino_encoder.1} parent=1 // pred_check_branch
      %28 = sbr.rel (0) target = $region17
    $region16: #{image_dino_encoder.1} parent=1 // pred_region
      _
    $region17: #{image_dino_encoder.1} parent=1 // pred_fallthru
      _
    // Predicated region
    $region18: #{image_dino_encoder.1} parent=1 // pred_check
      _
    $region19: #{image_dino_encoder.1} parent=1 // pred_check_branch
      %30 = sbr.rel (0) target = $region21
    $region20: #{image_dino_encoder.1} parent=1 // pred_region
      _
    $region21: #{image_dino_encoder.1} parent=1 // pred_fallthru
      _
    // Predicated region
    $region22: #{image_dino_encoder.1} parent=1 // pred_check
      _
    $region23: #{image_dino_encoder.1} parent=1 // pred_check_branch
      %32 = sbr.rel (0) target = $region25
    $region24: #{image_dino_encoder.1} parent=1 // pred_region
      _
    $region25: #{image_dino_encoder.1} parent=1 // pred_fallthru
      _
    // Predicated region
    $region26: #{image_dino_encoder.1} parent=1 // pred_check
      _
    $region27: #{image_dino_encoder.1} parent=1 // pred_check_branch
      %34 = sbr.rel (0) target = $region29
    $region28: #{image_dino_encoder.1} parent=1 // pred_region
      _
    $region29: #{image_dino_encoder.1} parent=1 // pred_fallthru
      _
    // Predicated region
    $region30: #{image_dino_encoder.1} parent=1 // pred_check
      _
    $region31: #{image_dino_encoder.1} parent=1 // pred_check_branch
      %36 = sbr.rel (0) target = $region33
    $region32: #{image_dino_encoder.1} parent=1 // pred_region
      _
    $region33: #{image_dino_encoder.1} parent=1 // pred_fallthru
      _
    // Predicated region
    $region34: #{image_dino_encoder.1} parent=1 // pred_check
      _
    $region35: #{image_dino_encoder.1} parent=1 // pred_check_branch
      %38 = sbr.rel (0) target = $region37
    $region36: #{image_dino_encoder.1} parent=1 // pred_region
      _
    $region37: #{image_dino_encoder.1} parent=1 // pred_fallthru
      _
    // Predicated region
    $region38: #{image_dino_encoder.1} parent=1 // pred_check
      _
    $region39: #{image_dino_encoder.1} parent=1 // pred_check_branch
      %40 = sbr.rel (0) target = $region41
    $region40: #{image_dino_encoder.1} parent=1 // pred_region
      _
    $region41: #{image_dino_encoder.1} parent=1 // pred_fallthru
      _
    // Predicated region
    $region42: #{image_dino_encoder.1} parent=1 // pred_check
      _
    $region43: #{image_dino_encoder.1} parent=1 // pred_check_branch
      %42 = sbr.rel (0) target = $region45
    $region44: #{image_dino_encoder.1} parent=1 // pred_region
      _
    $region45: #{image_dino_encoder.1} parent=1 // pred_fallthru
      _
    // Predicated region
    $region46: #{image_dino_encoder.1} parent=1 // pred_check
      _
    $region47: #{image_dino_encoder.1} parent=1 // pred_check_branch
      %44 = sbr.rel (0) target = $region49
    $region48: #{image_dino_encoder.1} parent=1 // pred_region
      _
    $region49: #{image_dino_encoder.1} parent=1 // pred_fallthru
      _
    // Predicated region
    $region50: #{image_dino_encoder.1} parent=1 // pred_check
      _
    $region51: #{image_dino_encoder.1} parent=1 // pred_check_branch
      %46 = sbr.rel (0) target = $region53
    $region52: #{image_dino_encoder.1} parent=1 // pred_region
      _
    $region53: #{image_dino_encoder.1} parent=1 // pred_fallthru
      _
    %v47 = vld [vmem:[%s0] sm:$0xff]
    %v48 = vld [vmem:[%s0 + $0x8] sm:$0xf]
    %v49 = vld [vmem:[%s1] sm:$0xff]
    %v50 = vld [vmem:[%s1 + $0x8] sm:$0xff]
    %v51 = vld [vmem:[%s1 + $0x10] sm:$0xff]
    %v52 = vld [vmem:[%s1 + $0x18] sm:$0xff]
    %v53 = vld [vmem:[%s1 + $0x20] sm:$0xff]
    %v54 = vld [vmem:[%s1 + $0x28] sm:$0xff]
    %v55 = vld [vmem:[%s1 + $0x30] sm:$0xff]
    %v56 = vld [vmem:[%s1 + $0x38] sm:$0xff]
    %v57 = vld [vmem:[%s1 + $0x40] sm:$0xff]
    %v58 = vld [vmem:[%s1 + $0x48] sm:$0xff]
    %v59 = vld [vmem:[%s1 + $0x50] sm:$0xff]
    %v60 = vld [vmem:[%s1 + $0x58] sm:$0xff]
    %v61 = vld [vmem:[%s1 + $0x60] sm:$0xff]
    %v62 = vld [vmem:[%s1 + $0x68] sm:$0xff]
    %v63 = vld [vmem:[%s1 + $0x70] sm:$0xff]
    %v64 = vld [vmem:[%s1 + $0x78] sm:$0xff]
    %v65 = vld [vmem:[%s1 + $0x80] sm:$0xff]
    %v66 = vld [vmem:[%s1 + $0x88] sm:$0xff]
    %v67 = vld [vmem:[%s1 + $0x90] sm:$0xff]
    %v68 = vld [vmem:[%s1 + $0x98] sm:$0xff]
    %v69 = vld [vmem:[%s1 + $0xa0] sm:$0xff]
    %v70 = vld [vmem:[%s1 + $0xa8] sm:$0xff]
    %v71 = vld [vmem:[%s1 + $0xb0] sm:$0xff]
    %v72 = vld [vmem:[%s1 + $0xb8] sm:$0xff]
    %v73 = vld [vmem:[%s1 + $0xc0] sm:$0xff]
    %v74 = vld [vmem:[%s1 + $0xc8] sm:$0xff]
    %v75 = vld [vmem:[%s1 + $0xd0] sm:$0xff]
    %v76 = vld [vmem:[%s1 + $0xd8] sm:$0xff]
    %v77 = vld [vmem:[%s1 + $0xe0] sm:$0xff]
    %v78 = vld [vmem:[%s1 + $0xe8] sm:$0xff]
    %v79 = vld [vmem:[%s1 + $0xf0] sm:$0xff]
    %v80 = vld [vmem:[%s1 + $0xf8] sm:$0xff]
    %v81 = vld [vmem:[%s1 + $0x100] sm:$0xff]
    %v82 = vld [vmem:[%s1 + $0x108] sm:$0xff]
    %v83 = vld [vmem:[%s1 + $0x110] sm:$0xff]
    %v84 = vld [vmem:[%s1 + $0x118] sm:$0xff]
    %v85 = vld [vmem:[%s1 + $0x120] sm:$0xff]
    %v86 = vld [vmem:[%s1 + $0x128] sm:$0xff]
    %v87 = vld [vmem:[%s1 + $0x130] sm:$0xff]
    %v88 = vld [vmem:[%s1 + $0x138] sm:$0xff]
    %v89 = vld [vmem:[%s1 + $0x140] sm:$0xff]
    %v90 = vld [vmem:[%s1 + $0x148] sm:$0xff]
    %v91 = vld [vmem:[%s1 + $0x150] sm:$0xff]
    %v92 = vld [vmem:[%s1 + $0x158] sm:$0xff]
    %v93 = vld [vmem:[%s1 + $0x160] sm:$0xff]
    %v94 = vld [vmem:[%s1 + $0x168] sm:$0xff]
    %v95 = vld [vmem:[%s1 + $0x170] sm:$0xff]
    %v96 = vld [vmem:[%s1 + $0x178] sm:$0xff]
    %v97 = vld [vmem:[%s1 + $0x180] sm:$0xff]
    %v98 = vld [vmem:[%s1 + $0x188] sm:$0xff]
    %v99 = vld [vmem:[%s1 + $0x190] sm:$0xff]
    %v100 = vld [vmem:[%s1 + $0x198] sm:$0xff]
    %v101 = vld [vmem:[%s1 + $0x1a0] sm:$0xff]
    %v102 = vld [vmem:[%s1 + $0x1a8] sm:$0xff]
    %v103 = vld [vmem:[%s1 + $0x1b0] sm:$0xff]
    %v104 = vld [vmem:[%s1 + $0x1b8] sm:$0xff]
    %v105 = vld [vmem:[%s1 + $0x1c0] sm:$0xff]
    %v106 = vld [vmem:[%s1 + $0x1c8] sm:$0xff]
    %v107 = vld [vmem:[%s1 + $0x1d0] sm:$0xff]
    %v108 = vld [vmem:[%s1 + $0x1d8] sm:$0xff]
    %v109 = vld [vmem:[%s1 + $0x1e0] sm:$0xff]
    %v110 = vld [vmem:[%s1 + $0x1e8] sm:$0xff]
    %v111 = vld [vmem:[%s1 + $0x1f0] sm:$0xff]
    %v112 = vld [vmem:[%s1 + $0x1f8] sm:$0xff]
    %v113 = vld [vmem:[%s1 + $0x200] sm:$0xff]
    %v114 = vld [vmem:[%s1 + $0x208] sm:$0xff]
    %v115 = vld [vmem:[%s1 + $0x210] sm:$0xff]
    %v116 = vld [vmem:[%s1 + $0x218] sm:$0xff]
    %v117 = vld [vmem:[%s1 + $0x220] sm:$0xff]
    %v118 = vld [vmem:[%s1 + $0x228] sm:$0xff]
    %v119 = vld [vmem:[%s1 + $0x230] sm:$0xff]
    %v120 = vld [vmem:[%s1 + $0x238] sm:$0xff]
    %v121 = vld [vmem:[%s1 + $0x240] sm:$0xff]
    %v122 = vld [vmem:[%s1 + $0x248] sm:$0xff]
    %v123 = vld [vmem:[%s1 + $0x250] sm:$0xff]
    %v124 = vld [vmem:[%s1 + $0x258] sm:$0xff]
    %v125 = vld [vmem:[%s1 + $0x260] sm:$0xff]
    %v126 = vld [vmem:[%s1 + $0x268] sm:$0xff]
    %v127 = vld [vmem:[%s1 + $0x270] sm:$0xff]
    %v128 = vld [vmem:[%s1 + $0x278] sm:$0xff]
    %v129 = vld [vmem:[%s1 + $0x280] sm:$0xff]
    %v130 = vld [vmem:[%s1 + $0x288] sm:$0xff]
    %v131 = vld [vmem:[%s1 + $0x290] sm:$0xff]
    %v132 = vld [vmem:[%s1 + $0x298] sm:$0xff]
    %v133 = vld [vmem:[%s1 + $0x2a0] sm:$0xff]
    %v134 = vld [vmem:[%s1 + $0x2a8] sm:$0xff]
    %v135 = vld [vmem:[%s1 + $0x2b0] sm:$0xff]
    %v136 = vld [vmem:[%s1 + $0x2b8] sm:$0xff]
    %v137 = vld [vmem:[%s1 + $0x2c0] sm:$0xff]
    %v138 = vld [vmem:[%s1 + $0x2c8] sm:$0xff]
    %v139 = vld [vmem:[%s1 + $0x2d0] sm:$0xff]
    %v140 = vld [vmem:[%s1 + $0x2d8] sm:$0xff]
    %v141 = vld [vmem:[%s1 + $0x2e0] sm:$0xff]
    %v142 = vld [vmem:[%s1 + $0x2e8] sm:$0xff]
    %v143 = vld [vmem:[%s1 + $0x2f0] sm:$0xff]
    %v144 = vld [vmem:[%s1 + $0x2f8] sm:$0xff]
    %v145 = vld [vmem:[%s1 + $0x300] sm:$0xff]
    %v146 = vld [vmem:[%s1 + $0x308] sm:$0xff]
    %v147 = vld [vmem:[%s1 + $0x310] sm:$0xff]
    %v148 = vld [vmem:[%s1 + $0x318] sm:$0xff]
    %v149 = vld [vmem:[%s1 + $0x320] sm:$0xff]
    %v150 = vld [vmem:[%s1 + $0x328] sm:$0xff]
    %v151 = vld [vmem:[%s1 + $0x330] sm:$0xff]
    %v152 = vld [vmem:[%s1 + $0x338] sm:$0xff]
    %v153 = vld [vmem:[%s1 + $0x340] sm:$0xff]
    %v154 = vld [vmem:[%s1 + $0x348] sm:$0xff]
    %v155 = vld [vmem:[%s1 + $0x350] sm:$0xff]
    %v156 = vld [vmem:[%s1 + $0x358] sm:$0xff]
    %v157 = vld [vmem:[%s1 + $0x360] sm:$0xff]
    %v158 = vld [vmem:[%s1 + $0x368] sm:$0xff]
    %v159 = vld [vmem:[%s1 + $0x370] sm:$0xff]
    %v160 = vld [vmem:[%s1 + $0x378] sm:$0xff]
    %v161 = vld [vmem:[%s1 + $0x380] sm:$0xff]
    %v162 = vld [vmem:[%s1 + $0x388] sm:$0xff]
    %v163 = vld [vmem:[%s1 + $0x390] sm:$0xff]
    %v164 = vld [vmem:[%s1 + $0x398] sm:$0xff]
    %v165 = vld [vmem:[%s1 + $0x3a0] sm:$0xff]
    %v166 = vld [vmem:[%s1 + $0x3a8] sm:$0xff]
    %v167 = vld [vmem:[%s1 + $0x3b0] sm:$0xff]
    %v168 = vld [vmem:[%s1 + $0x3b8] sm:$0xff]
    %v169 = vld [vmem:[%s1 + $0x3c0] sm:$0xff]
    %v170 = vld [vmem:[%s1 + $0x3c8] sm:$0xff]
    %v171 = vld [vmem:[%s1 + $0x3d0] sm:$0xff]
    %v172 = vld [vmem:[%s1 + $0x3d8] sm:$0xff]
    %v173 = vld [vmem:[%s1 + $0x3e0] sm:$0xff]
    %v174 = vld [vmem:[%s1 + $0x3e8] sm:$0xff]
    %v175 = vld [vmem:[%s1 + $0x3f0] sm:$0xff]
    %v176 = vld [vmem:[%s1 + $0x3f8] sm:$0xff]
    %v177 = vld [vmem:[%s1 + $0x400] sm:$0xff]
    %v178 = vld [vmem:[%s1 + $0x408] sm:$0xff]
    %v179 = vld [vmem:[%s1 + $0x410] sm:$0xff]
    %v180 = vld [vmem:[%s1 + $0x418] sm:$0xff]
    %v181 = vld [vmem:[%s1 + $0x420] sm:$0xff]
    %v182 = vld [vmem:[%s1 + $0x428] sm:$0xff]
    %v183 = vld [vmem:[%s1 + $0x430] sm:$0xff]
    %v184 = vld [vmem:[%s1 + $0x438] sm:$0xff]
    %v185 = vld [vmem:[%s1 + $0x440] sm:$0xff]
    %v186 = vld [vmem:[%s1 + $0x448] sm:$0xff]
    %v187 = vld [vmem:[%s1 + $0x450] sm:$0xff]
    %v188 = vld [vmem:[%s1 + $0x458] sm:$0xff]
    %v189 = vld [vmem:[%s1 + $0x460] sm:$0xff]
    %v190 = vld [vmem:[%s1 + $0x468] sm:$0xff]
    %v191 = vld [vmem:[%s1 + $0x470] sm:$0xff]
    %v192 = vld [vmem:[%s1 + $0x478] sm:$0xff]
    %v193 = vld [vmem:[%s1 + $0x480] sm:$0xff]
    %v194 = vld [vmem:[%s1 + $0x488] sm:$0xff]
    %v195 = vld [vmem:[%s1 + $0x490] sm:$0xff]
    %v196 = vld [vmem:[%s1 + $0x498] sm:$0xff]
    %v197 = vld [vmem:[%s1 + $0x4a0] sm:$0xff]
    %v198 = vld [vmem:[%s1 + $0x4a8] sm:$0xff]
    %v199 = vld [vmem:[%s1 + $0x4b0] sm:$0xff]
    %v200 = vld [vmem:[%s1 + $0x4b8] sm:$0xff]
    %v201 = vld [vmem:[%s1 + $0x4c0] sm:$0xff]
    %v202 = vld [vmem:[%s1 + $0x4c8] sm:$0xff]
    %v203 = vld [vmem:[%s1 + $0x4d0] sm:$0xff]
    %v204 = vld [vmem:[%s1 + $0x4d8] sm:$0xff]
    %v205 = vld [vmem:[%s1 + $0x4e0] sm:$0xff]
    %v206 = vld [vmem:[%s1 + $0x4e8] sm:$0xff]
    %v207 = vld [vmem:[%s1 + $0x4f0] sm:$0xff]
    %v208 = vld [vmem:[%s1 + $0x4f8] sm:$0xff]
    %v209 = vld [vmem:[%s1 + $0x500] sm:$0xff]
    %v210 = vld [vmem:[%s1 + $0x508] sm:$0xff]
    %v211 = vld [vmem:[%s1 + $0x510] sm:$0xff]
    %v212 = vld [vmem:[%s1 + $0x518] sm:$0xff]
    %v213 = vld [vmem:[%s1 + $0x520] sm:$0xff]
    %v214 = vld [vmem:[%s1 + $0x528] sm:$0xff]
    %v215 = vld [vmem:[%s1 + $0x530] sm:$0xff]
    %v216 = vld [vmem:[%s1 + $0x538] sm:$0xff]
    %v217 = vld [vmem:[%s1 + $0x540] sm:$0xff]
    %v218 = vld [vmem:[%s1 + $0x548] sm:$0xff]
    %v219 = vld [vmem:[%s1 + $0x550] sm:$0xff]
    %v220 = vld [vmem:[%s1 + $0x558] sm:$0xff]
    %v221 = vld [vmem:[%s1 + $0x560] sm:$0xff]
    %v222 = vld [vmem:[%s1 + $0x568] sm:$0xff]
    %v223 = vld [vmem:[%s1 + $0x570] sm:$0xff]
    %v224 = vld [vmem:[%s1 + $0x578] sm:$0xff]
    %v225 = vld [vmem:[%s1 + $0x580] sm:$0xff]
    %v226 = vld [vmem:[%s1 + $0x588] sm:$0xff]
    %v227 = vld [vmem:[%s1 + $0x590] sm:$0xff]
    %v228 = vld [vmem:[%s1 + $0x598] sm:$0xff]
    %v229 = vld [vmem:[%s1 + $0x5a0] sm:$0xff]
    %v230 = vld [vmem:[%s1 + $0x5a8] sm:$0xff]
    %v231 = vld [vmem:[%s1 + $0x5b0] sm:$0xff]
    %v232 = vld [vmem:[%s1 + $0x5b8] sm:$0xff]
    %v233 = vld [vmem:[%s1 + $0x5c0] sm:$0xff]
    %v234 = vld [vmem:[%s1 + $0x5c8] sm:$0xff]
    %v235 = vld [vmem:[%s1 + $0x5d0] sm:$0xff]
    %v236 = vld [vmem:[%s1 + $0x5d8] sm:$0xff]
    %v237 = vld [vmem:[%s1 + $0x5e0] sm:$0xff]
    %v238 = vld [vmem:[%s1 + $0x5e8] sm:$0xff]
    %v239 = vld [vmem:[%s1 + $0x5f0] sm:$0xff]
    %v240 = vld [vmem:[%s1 + $0x5f8] sm:$0xff]
    %v241 = vld [vmem:[%s2] sm:$0x3]
    %v243 = vlaneseq
    %v244 = vshrl.u32 %v243, 7
    %v245 = vsub.s32 0, %v244
    %v246 = vrot.slane %v241, %v245
    %v247 = vlaneseq
    %v248 = vshrl.u32 %v247, 7
    %v249 = vsub.s32 1, %v248
    %v250 = vrot.slane %v241, %v249
    %v255 = vcombine.high %v47, %v47
    %v257 = vunpack.c.l.s4 1983009808
    %v258 = vunpack.c.0.s8 %v257
    %v259 = vlaneseq
    %v260 = vshrl.u32 %v259, 7
    %v261 = vsub.s32 %v258, %v260
    %v262 = vrot.slane %v47, %v261
    %v264 = vunpack.c.l.s4 1983009808
    %v265 = vunpack.c.0.s8 %v264
    %v266 = vlaneseq
    %v267 = vshrl.u32 %v266, 7
    %v268 = vsub.s32 %v265, %v267
    %v269 = vrot.slane %v255, %v268
    %v270 = vcombine.high %v262, %v262
    %v271 = vcombine.high %v269, %v269
    %v273 = vunpack.c.l.s4 1983009808
    %v274 = vunpack.c.0.s8 %v273
    %v275 = vlaneseq
    %v276 = vshrl.u32 %v275, 7
    %v277 = vsub.s32 %v274, %v276
    %v278 = vrot.slane %v48, %v277
    %v279 = vcombine.high %v278, %v278
    %286 = vmatprep.subr.mxu0 %v50
    %287 = vmatpush1.msra.mxu0 %v49
    %288 = vmatprep.subr.mxu0 %v52
    %289 = vmatpush1.msra.mxu0 %v51
    %290 = vmatprep.subr.mxu0 %v54
    %291 = vmatpush1.msra.mxu0 %v53
    %292 = vmatprep.subr.mxu0 %v56
    %293 = vmatpush1.msra.mxu0 %v55
    %294 = vmatprep.subr.mxu0 %v58
    %295 = vmatpush1.msra.mxu0 %v57
    %296 = vmatprep.subr.mxu0 %v60
    %297 = vmatpush1.msra.mxu0 %v59
    %298 = vmatprep.subr.mxu0 %v62
    %299 = vmatpush1.msra.mxu0 %v61
    %300 = vmatprep.subr.mxu0 %v64
    %301 = vmatpush1.msra.mxu0 %v63
    %302 = vmatprep.subr.mxu0 %v66
    %303 = vmatpush1.msra.mxu0 %v65
    %304 = vmatprep.subr.mxu0 %v68
    %305 = vmatpush1.msra.mxu0 %v67
    %306 = vmatprep.subr.mxu0 %v70
    %307 = vmatpush1.msra.mxu0 %v69
    %308 = vmatprep.subr.mxu0 %v72
    %309 = vmatpush1.msra.mxu0 %v71
    %310 = vmatprep.subr.mxu0 %v74
    %311 = vmatpush1.msra.mxu0 %v73
    %312 = vmatprep.subr.mxu0 %v76
    %313 = vmatpush1.msra.mxu0 %v75
    %314 = vmatprep.subr.mxu0 %v78
    %315 = vmatpush1.msra.mxu0 %v77
    %316 = vmatprep.subr.mxu0 %v80
    %317 = vmatpush1.msra.mxu0 %v79
    %318 = vmatprep.subr.mxu0 %v82
    %319 = vmatpush1.msra.mxu0 %v81
    %320 = vmatprep.subr.mxu0 %v84
    %321 = vmatpush1.msra.mxu0 %v83
    %322 = vmatprep.subr.mxu0 %v86
    %323 = vmatpush1.msra.mxu0 %v85
    %324 = vmatprep.subr.mxu0 %v88
    %325 = vmatpush1.msra.mxu0 %v87
    %326 = vmatprep.subr.mxu0 %v90
    %327 = vmatpush1.msra.mxu0 %v89
    %328 = vmatprep.subr.mxu0 %v92
    %329 = vmatpush1.msra.mxu0 %v91
    %330 = vmatprep.subr.mxu0 %v94
    %331 = vmatpush1.msra.mxu0 %v93
    %332 = vmatprep.subr.mxu0 %v96
    %333 = vmatpush1.msra.mxu0 %v95
    %334 = vmatprep.subr.mxu0 %v98
    %335 = vmatpush1.msra.mxu0 %v97
    %336 = vmatprep.subr.mxu0 %v100
    %337 = vmatpush1.msra.mxu0 %v99
    %338 = vmatprep.subr.mxu0 %v102
    %339 = vmatpush1.msra.mxu0 %v101
    %340 = vmatprep.subr.mxu0 %v104
    %341 = vmatpush1.msra.mxu0 %v103
    %342 = vmatprep.subr.mxu0 %v106
    %343 = vmatpush1.msra.mxu0 %v105
    %344 = vmatprep.subr.mxu0 %v108
    %345 = vmatpush1.msra.mxu0 %v107
    %346 = vmatprep.subr.mxu0 %v110
    %347 = vmatpush1.msra.mxu0 %v109
    %348 = vmatprep.subr.mxu0 %v112
    %349 = vmatpush1.msra.mxu0 %v111
    %350 = vmatprep.mubr.f32.mxu0 %v270
    %351 = vmatmul.mubr.f32.gmra.mrb[0].mxu0 %v262
    %v352 = vpop.f32.mrb[0].mxu0
    %v353 = vadd.f32 %v246, %v352
    %v354 = vpop.f32.mrb[0].mxu0
    %v355 = vadd.f32 %v250, %v354
    %356 = vdwg.mxu0
    %357 = vmatprep.subr.mxu0 %v114
    %358 = vmatpush1.msra.mxu0 %v113
    %359 = vmatprep.subr.mxu0 %v116
    %360 = vmatpush1.msra.mxu0 %v115
    %361 = vmatprep.subr.mxu0 %v118
    %362 = vmatpush1.msra.mxu0 %v117
    %363 = vmatprep.subr.mxu0 %v120
    %364 = vmatpush1.msra.mxu0 %v119
    %365 = vmatprep.subr.mxu0 %v122
    %366 = vmatpush1.msra.mxu0 %v121
    %367 = vmatprep.subr.mxu0 %v124
    %368 = vmatpush1.msra.mxu0 %v123
    %369 = vmatprep.subr.mxu0 %v126
    %370 = vmatpush1.msra.mxu0 %v125
    %371 = vmatprep.subr.mxu0 %v128
    %372 = vmatpush1.msra.mxu0 %v127
    %373 = vmatprep.subr.mxu0 %v130
    %374 = vmatpush1.msra.mxu0 %v129
    %375 = vmatprep.subr.mxu0 %v132
    %376 = vmatpush1.msra.mxu0 %v131
    %377 = vmatprep.subr.mxu0 %v134
    %378 = vmatpush1.msra.mxu0 %v133
    %379 = vmatprep.subr.mxu0 %v136
    %380 = vmatpush1.msra.mxu0 %v135
    %381 = vmatprep.subr.mxu0 %v138
    %382 = vmatpush1.msra.mxu0 %v137
    %383 = vmatprep.subr.mxu0 %v140
    %384 = vmatpush1.msra.mxu0 %v139
    %385 = vmatprep.subr.mxu0 %v142
    %386 = vmatpush1.msra.mxu0 %v141
    %387 = vmatprep.subr.mxu0 %v144
    %388 = vmatpush1.msra.mxu0 %v143
    %389 = vmatprep.subr.mxu0 %v146
    %390 = vmatpush1.msra.mxu0 %v145
    %391 = vmatprep.subr.mxu0 %v148
    %392 = vmatpush1.msra.mxu0 %v147
    %393 = vmatprep.subr.mxu0 %v150
    %394 = vmatpush1.msra.mxu0 %v149
    %395 = vmatprep.subr.mxu0 %v152
    %396 = vmatpush1.msra.mxu0 %v151
    %397 = vmatprep.subr.mxu0 %v154
    %398 = vmatpush1.msra.mxu0 %v153
    %399 = vmatprep.subr.mxu0 %v156
    %400 = vmatpush1.msra.mxu0 %v155
    %401 = vmatprep.subr.mxu0 %v158
    %402 = vmatpush1.msra.mxu0 %v157
    %403 = vmatprep.subr.mxu0 %v160
    %404 = vmatpush1.msra.mxu0 %v159
    %405 = vmatprep.subr.mxu0 %v162
    %406 = vmatpush1.msra.mxu0 %v161
    %407 = vmatprep.subr.mxu0 %v164
    %408 = vmatpush1.msra.mxu0 %v163
    %409 = vmatprep.subr.mxu0 %v166
    %410 = vmatpush1.msra.mxu0 %v165
    %411 = vmatprep.subr.mxu0 %v168
    %412 = vmatpush1.msra.mxu0 %v167
    %413 = vmatprep.subr.mxu0 %v170
    %414 = vmatpush1.msra.mxu0 %v169
    %415 = vmatprep.subr.mxu0 %v172
    %416 = vmatpush1.msra.mxu0 %v171
    %417 = vmatprep.subr.mxu0 %v174
    %418 = vmatpush1.msra.mxu0 %v173
    %419 = vmatprep.subr.mxu0 %v176
    %420 = vmatpush1.msra.mxu0 %v175
    %421 = vmatprep.mubr.f32.mxu0 %v271
    %422 = vmatmul.mubr.f32.gmra.mrb[0].mxu0 %v269
    %v423 = vpop.f32.mrb[0].mxu0
    %v424 = vadd.f32 %v353, %v423
    %v425 = vpop.f32.mrb[0].mxu0
    %v426 = vadd.f32 %v355, %v425
    %427 = vdwg.mxu0
    %428 = vmatprep.subr.mxu0 %v178
    %429 = vmatpush1.msra.mxu0 %v177
    %430 = vmatprep.subr.mxu0 %v180
    %431 = vmatpush1.msra.mxu0 %v179
    %432 = vmatprep.subr.mxu0 %v182
    %433 = vmatpush1.msra.mxu0 %v181
    %434 = vmatprep.subr.mxu0 %v184
    %435 = vmatpush1.msra.mxu0 %v183
    %436 = vmatprep.subr.mxu0 %v186
    %437 = vmatpush1.msra.mxu0 %v185
    %438 = vmatprep.subr.mxu0 %v188
    %439 = vmatpush1.msra.mxu0 %v187
    %440 = vmatprep.subr.mxu0 %v190
    %441 = vmatpush1.msra.mxu0 %v189
    %442 = vmatprep.subr.mxu0 %v192
    %443 = vmatpush1.msra.mxu0 %v191
    %444 = vmatprep.subr.mxu0 %v194
    %445 = vmatpush1.msra.mxu0 %v193
    %446 = vmatprep.subr.mxu0 %v196
    %447 = vmatpush1.msra.mxu0 %v195
    %448 = vmatprep.subr.mxu0 %v198
    %449 = vmatpush1.msra.mxu0 %v197
    %450 = vmatprep.subr.mxu0 %v200
    %451 = vmatpush1.msra.mxu0 %v199
    %452 = vmatprep.subr.mxu0 %v202
    %453 = vmatpush1.msra.mxu0 %v201
    %454 = vmatprep.subr.mxu0 %v204
    %455 = vmatpush1.msra.mxu0 %v203
    %456 = vmatprep.subr.mxu0 %v206
    %457 = vmatpush1.msra.mxu0 %v205
    %458 = vmatprep.subr.mxu0 %v208
    %459 = vmatpush1.msra.mxu0 %v207
    %460 = vmatprep.subr.mxu0 %v210
    %461 = vmatpush1.msra.mxu0 %v209
    %462 = vmatprep.subr.mxu0 %v212
    %463 = vmatpush1.msra.mxu0 %v211
    %464 = vmatprep.subr.mxu0 %v214
    %465 = vmatpush1.msra.mxu0 %v213
    %466 = vmatprep.subr.mxu0 %v216
    %467 = vmatpush1.msra.mxu0 %v215
    %468 = vmatprep.subr.mxu0 %v218
    %469 = vmatpush1.msra.mxu0 %v217
    %470 = vmatprep.subr.mxu0 %v220
    %471 = vmatpush1.msra.mxu0 %v219
    %472 = vmatprep.subr.mxu0 %v222
    %473 = vmatpush1.msra.mxu0 %v221
    %474 = vmatprep.subr.mxu0 %v224
    %475 = vmatpush1.msra.mxu0 %v223
    %476 = vmatprep.subr.mxu0 %v226
    %477 = vmatpush1.msra.mxu0 %v225
    %478 = vmatprep.subr.mxu0 %v228
    %479 = vmatpush1.msra.mxu0 %v227
    %480 = vmatprep.subr.mxu0 %v230
    %481 = vmatpush1.msra.mxu0 %v229
    %482 = vmatprep.subr.mxu0 %v232
    %483 = vmatpush1.msra.mxu0 %v231
    %484 = vmatprep.subr.mxu0 %v234
    %485 = vmatpush1.msra.mxu0 %v233
    %486 = vmatprep.subr.mxu0 %v236
    %487 = vmatpush1.msra.mxu0 %v235
    %488 = vmatprep.subr.mxu0 %v238
    %489 = vmatpush1.msra.mxu0 %v237
    %490 = vmatprep.subr.mxu0 %v240
    %491 = vmatpush1.msra.mxu0 %v239
    %492 = vmatprep.mubr.f32.mxu0 %v279
    %493 = vmatmul.mubr.f32.gmra.mrb[0].mxu0 %v278
    %v494 = vpop.f32.mrb[0].mxu0
    %v495 = vadd.f32 %v424, %v494
    %v496 = vpop.f32.mrb[0].mxu0
    %v497 = vadd.f32 %v426, %v496
    %498 = vdwg.mxu0
    %v501 = vunpack.c.l.s4 1966171168
    %v502 = vunpack.c.0.s8 %v501
    %v503 = vlaneseq
    %v504 = vshrl.u32 %v503, 7
    %v505 = vsub.s32 %v502, %v504
    %v506 = vrot.slane %v495, %v505
    %v507 = vcombine.high %v506, %v506
    %v509 = vunpack.c.l.s4 1966171168
    %v510 = vunpack.c.0.s8 %v509
    %v511 = vlaneseq
    %v512 = vshrl.u32 %v511, 7
    %v513 = vsub.s32 %v510, %v512
    %v514 = vrot.slane %v506, %v513
    %v516 = vunpack.c.l.s4 1966171168
    %v517 = vunpack.c.0.s8 %v516
    %v518 = vlaneseq
    %v519 = vshrl.u32 %v518, 7
    %v520 = vsub.s32 %v517, %v519
    %v521 = vrot.slane %v507, %v520
    %vm524 = vcmask 253952
    %525 = vst.msk [vmem:[#allocation2] sm:$0x1] %vm524, %v514
    %526 = vst.msk [vmem:[#allocation2 + $0x8] sm:$0x1] %vm524, %v521
    %v527 = vlaneseq
    %v528 = vshrl.u32 %v527, 7
    %v529 = vsub.s32 0, %v528
    %v530 = vrot.slane %v514, %v529
    %v531 = vlaneseq
    %v532 = vshrl.u32 %v531, 7
    %v533 = vsub.s32 0, %v532
    %v534 = vrot.slane %v521, %v533
    %535 = vrot.lane.b32.xlu0 %v530, 96
    %v536 = vpop.permute.xlu0 %535
    %537 = vrot.lane.b32.xlu0 %v534, 96
    %v538 = vpop.permute.xlu0 %537
    %541 = vst.msk [vmem:[#allocation2 + $0x1] sm:$0x1] %vm524, %v536
    %542 = vst.msk [vmem:[#allocation2 + $0x9] sm:$0x1] %vm524, %v538
    %543 = vrot.lane.b32.xlu0 %v530, 64
    %v544 = vpop.permute.xlu0 %543
    %545 = vrot.lane.b32.xlu0 %v534, 64
    %v546 = vpop.permute.xlu0 %545
    %549 = vst.msk [vmem:[#allocation2 + $0x2] sm:$0x1] %vm524, %v544
    %550 = vst.msk [vmem:[#allocation2 + $0xa] sm:$0x1] %vm524, %v546
    %551 = vrot.lane.b32.xlu0 %v530, 32
    %v552 = vpop.permute.xlu0 %551
    %553 = vrot.lane.b32.xlu0 %v534, 32
    %v554 = vpop.permute.xlu0 %553
    %557 = vst.msk [vmem:[#allocation2 + $0x3] sm:$0x1] %vm524, %v552
    %558 = vst.msk [vmem:[#allocation2 + $0xb] sm:$0x1] %vm524, %v554
    %v561 = vunpack.c.l.s4 1966171168
    %v562 = vunpack.c.0.s8 %v561
    %v563 = vlaneseq
    %v564 = vshrl.u32 %v563, 7
    %v565 = vsub.s32 %v562, %v564
    %v566 = vrot.slane %v497, %v565
    %v567 = vcombine.high %v566, %v566
    %v569 = vunpack.c.l.s4 1966171168
    %v570 = vunpack.c.0.s8 %v569
    %v571 = vlaneseq
    %v572 = vshrl.u32 %v571, 7
    %v573 = vsub.s32 %v570, %v572
    %v574 = vrot.slane %v566, %v573
    %v576 = vunpack.c.l.s4 1966171168
    %v577 = vunpack.c.0.s8 %v576
    %v578 = vlaneseq
    %v579 = vshrl.u32 %v578, 7
    %v580 = vsub.s32 %v577, %v579
    %v581 = vrot.slane %v567, %v580
    %584 = vst.msk [vmem:[#allocation2 + $0x4] sm:$0x1] %vm524, %v574
    %585 = vst.msk [vmem:[#allocation2 + $0xc] sm:$0x1] %vm524, %v581
    %v586 = vld [vmem:[#allocation2] sm:$0x1f]
    %v587 = vld [vmem:[#allocation2 + $0x8] sm:$0x1f]
    %vm588 = vcmask 258048
    %v589 = vsel %vm588, %v586, 0.0
    %590 = vadd.xlane.f32.xlu0 %v589
    %v591 = vpop.xlane.xlu0 %590
    %v592 = vsel %vm588, %v587, 0.0
    %593 = vadd.xlane.f32.xlu0 %v592
    %v594 = vpop.xlane.xlu0 %593
    %v595 = vrcp.pop 32.0
    %v596 = vmul.f32 %v591, %v595
    %v597 = vmul.f32 %v594, %v595
    %v598 = vsub.f32 %v586, %v596
    %v599 = vsub.f32 %v587, %v597
    %v600 = vmul.f32 %v598, %v598
    %v601 = vmul.f32 %v599, %v599
    %v602 = vsel %vm588, %v600, 0.0
    %603 = vadd.xlane.f32.xlu0 %v602
    %v604 = vpop.xlane.xlu0 %603
    %v605 = vsel %vm588, %v601, 0.0
    %606 = vadd.xlane.f32.xlu0 %v605
    %v607 = vpop.xlane.xlu0 %606
    %v608 = vmul.f32 %v604, %v595
    %v609 = vmul.f32 %v607, %v595
    %v610 = vadd.f32 %v608, 1e-06
    %v611 = vadd.f32 %v609, 1e-06
    %v612 = vrsqrt.pop %v610
    %v613 = vrsqrt.pop %v611
    %v614 = vmul.f32 %v598, %v612
    %v615 = vmul.f32 %v599, %v613
    %v616 = vld [vmem:[%s3] sm:$0xff]
    %v617 = vld [vmem:[%s3 + $0x8] sm:$0xff]
    %v618 = vld [vmem:[%s3 + $0x10] sm:$0xff]
    %v619 = vld [vmem:[%s3 + $0x18] sm:$0xff]
    %v620 = vld [vmem:[%s4] sm:$0x1]
    %v622 = vlaneseq
    %v623 = vshrl.u32 %v622, 7
    %v624 = vsub.s32 0, %v623
    %v625 = vrot.slane %v620, %v624
    %vm627 = vcmask 261120
    %v629 = vsel %vm627, %v614, 0
    %631 = vmatprep.subr.mxu0 0.0
    %632 = vmatpush1.msra.mxu0 %v616
    %633 = vmatprep.subr.mxu0 0.0
    %634 = vmatpush1.msra.mxu0 %v617
    %635 = vmatprep.subr.mxu0 0.0
    %636 = vmatpush1.msra.mxu0 %v618
    %637 = vmatprep.subr.mxu0 0.0
    %638 = vmatpush1.msra.mxu0 %v619
    %639 = vmatprep.subr.mxu0 0.0
    %640 = vmatpush1.msra.mxu0 0.0
    %641 = vmatprep.subr.mxu0 0.0
    %642 = vmatpush1.msra.mxu0 0.0
    %643 = vmatprep.subr.mxu0 0.0
    %644 = vmatpush1.msra.mxu0 0.0
    %645 = vmatprep.subr.mxu0 0.0
    %646 = vmatpush1.msra.mxu0 0.0
    %647 = vmatprep.subr.mxu0 0.0
    %648 = vmatpush1.msra.mxu0 0.0
    %649 = vmatprep.subr.mxu0 0.0
    %650 = vmatpush1.msra.mxu0 0.0
    %651 = vmatprep.subr.mxu0 0.0
    %652 = vmatpush1.msra.mxu0 0.0
    %653 = vmatprep.subr.mxu0 0.0
    %654 = vmatpush1.msra.mxu0 0.0
    %655 = vmatprep.subr.mxu0 0.0
    %656 = vmatpush1.msra.mxu0 0.0
    %657 = vmatprep.subr.mxu0 0.0
    %658 = vmatpush1.msra.mxu0 0.0
    %659 = vmatprep.subr.mxu0 0.0
    %660 = vmatpush1.msra.mxu0 0.0
    %661 = vmatprep.subr.mxu0 0.0
    %662 = vmatpush1.msra.mxu0 0.0
    %663 = vmatprep.subr.mxu0 0.0
    %664 = vmatpush1.msra.mxu0 0.0
    %665 = vmatprep.subr.mxu0 0.0
    %666 = vmatpush1.msra.mxu0 0.0
    %667 = vmatprep.subr.mxu0 0.0
    %668 = vmatpush1.msra.mxu0 0.0
    %669 = vmatprep.subr.mxu0 0.0
    %670 = vmatpush1.msra.mxu0 0.0
    %671 = vmatprep.subr.mxu0 0.0
    %672 = vmatpush1.msra.mxu0 0.0
    %673 = vmatprep.subr.mxu0 0.0
    %674 = vmatpush1.msra.mxu0 0.0
    %675 = vmatprep.subr.mxu0 0.0
    %676 = vmatpush1.msra.mxu0 0.0
    %677 = vmatprep.subr.mxu0 0.0
    %678 = vmatpush1.msra.mxu0 0.0
    %679 = vmatprep.subr.mxu0 0.0
    %680 = vmatpush1.msra.mxu0 0.0
    %681 = vmatprep.subr.mxu0 0.0
    %682 = vmatpush1.msra.mxu0 0.0
    %683 = vmatprep.subr.mxu0 0.0
    %684 = vmatpush1.msra.mxu0 0.0
    %685 = vmatprep.subr.mxu0 0.0
    %686 = vmatpush1.msra.mxu0 0.0
    %687 = vmatprep.subr.mxu0 0.0
    %688 = vmatpush1.msra.mxu0 0.0
    %689 = vmatprep.subr.mxu0 0.0
    %690 = vmatpush1.msra.mxu0 0.0
    %691 = vmatprep.subr.mxu0 0.0
    %692 = vmatpush1.msra.mxu0 0.0
    %693 = vmatprep.subr.mxu0 0.0
    %694 = vmatpush1.msra.mxu0 0.0
    %695 = vmatprep.mubr.f32.mxu0 0.0
    %696 = vmatmul.mubr.f32.gmra.mrb[0].mxu0 %v629
    %v697 = vpop.f32.mrb[0].mxu0
    %v698 = vadd.f32 %v625, %v697
    %v699 = vpop.f32.mrb[0].mxu0
    %700 = vdwg.mxu0
    %v702 = vsel %vm627, %v615, 0
    %704 = vmatprep.subr.mxu0 0.0
    %705 = vmatpush1.msra.mxu0 %v616
    %706 = vmatprep.subr.mxu0 0.0
    %707 = vmatpush1.msra.mxu0 %v617
    %708 = vmatprep.subr.mxu0 0.0
    %709 = vmatpush1.msra.mxu0 %v618
    %710 = vmatprep.subr.mxu0 0.0
    %711 = vmatpush1.msra.mxu0 %v619
    %712 = vmatprep.subr.mxu0 0.0
    %713 = vmatpush1.msra.mxu0 0.0
    %714 = vmatprep.subr.mxu0 0.0
    %715 = vmatpush1.msra.mxu0 0.0
    %716 = vmatprep.subr.mxu0 0.0
    %717 = vmatpush1.msra.mxu0 0.0
    %718 = vmatprep.subr.mxu0 0.0
    %719 = vmatpush1.msra.mxu0 0.0
    %720 = vmatprep.subr.mxu0 0.0
    %721 = vmatpush1.msra.mxu0 0.0
    %722 = vmatprep.subr.mxu0 0.0
    %723 = vmatpush1.msra.mxu0 0.0
    %724 = vmatprep.subr.mxu0 0.0
    %725 = vmatpush1.msra.mxu0 0.0
    %726 = vmatprep.subr.mxu0 0.0
    %727 = vmatpush1.msra.mxu0 0.0
    %728 = vmatprep.subr.mxu0 0.0
    %729 = vmatpush1.msra.mxu0 0.0
    %730 = vmatprep.subr.mxu0 0.0
    %731 = vmatpush1.msra.mxu0 0.0
    %732 = vmatprep.subr.mxu0 0.0
    %733 = vmatpush1.msra.mxu0 0.0
    %734 = vmatprep.subr.mxu0 0.0
    %735 = vmatpush1.msra.mxu0 0.0
    %736 = vmatprep.subr.mxu0 0.0
    %737 = vmatpush1.msra.mxu0 0.0
    %738 = vmatprep.subr.mxu0 0.0
    %739 = vmatpush1.msra.mxu0 0.0
    %740 = vmatprep.subr.mxu0 0.0
    %741 = vmatpush1.msra.mxu0 0.0
    %742 = vmatprep.subr.mxu0 0.0
    %743 = vmatpush1.msra.mxu0 0.0
    %744 = vmatprep.subr.mxu0 0.0
    %745 = vmatpush1.msra.mxu0 0.0
    %746 = vmatprep.subr.mxu0 0.0
    %747 = vmatpush1.msra.mxu0 0.0
    %748 = vmatprep.subr.mxu0 0.0
    %749 = vmatpush1.msra.mxu0 0.0
    %750 = vmatprep.subr.mxu0 0.0
    %751 = vmatpush1.msra.mxu0 0.0
    %752 = vmatprep.subr.mxu0 0.0
    %753 = vmatpush1.msra.mxu0 0.0
    %754 = vmatprep.subr.mxu0 0.0
    %755 = vmatpush1.msra.mxu0 0.0
    %756 = vmatprep.subr.mxu0 0.0
    %757 = vmatpush1.msra.mxu0 0.0
    %758 = vmatprep.subr.mxu0 0.0
    %759 = vmatpush1.msra.mxu0 0.0
    %760 = vmatprep.subr.mxu0 0.0
    %761 = vmatpush1.msra.mxu0 0.0
    %762 = vmatprep.subr.mxu0 0.0
    %763 = vmatpush1.msra.mxu0 0.0
    %764 = vmatprep.subr.mxu0 0.0
    %765 = vmatpush1.msra.mxu0 0.0
    %766 = vmatprep.subr.mxu0 0.0
    %767 = vmatpush1.msra.mxu0 0.0
    %768 = vmatprep.mubr.f32.mxu0 0.0
    %769 = vmatmul.mubr.f32.gmra.mrb[0].mxu0 %v702
    %v770 = vpop.f32.mrb[0].mxu0
    %v771 = vadd.f32 %v625, %v770
    %v772 = vpop.f32.mrb[0].mxu0
    %773 = vdwg.mxu0
    %775 = vrot.lane.b32.xlu0 %v698, 96
    %v776 = vpop.permute.xlu0 %775
    %vm777 = vcmask 64512
    %v778 = vsel %vm777, %v698, 0
    %v780 = vsel %vm777, %v776, 0
    %782 = vmatprep.subr.mxu0 0.0
    %783 = vmatpush1.xpose.msra.mxu0 %v780
    %784 = vmatprep.subr.mxu0 0.0
    %785 = vmatpush1.xpose.msra.mxu0 0.0
    %786 = vmatprep.subr.mxu0 0.0
    %787 = vmatpush1.xpose.msra.mxu0 0.0
    %788 = vmatprep.subr.mxu0 0.0
    %789 = vmatpush1.xpose.msra.mxu0 0.0
    %790 = vmatprep.subr.mxu0 0.0
    %791 = vmatpush1.xpose.msra.mxu0 0.0
    %792 = vmatprep.subr.mxu0 0.0
    %793 = vmatpush1.xpose.msra.mxu0 0.0
    %794 = vmatprep.subr.mxu0 0.0
    %795 = vmatpush1.xpose.msra.mxu0 0.0
    %796 = vmatprep.subr.mxu0 0.0
    %797 = vmatpush1.xpose.msra.mxu0 0.0
    %798 = vmatprep.subr.mxu0 0.0
    %799 = vmatpush1.xpose.msra.mxu0 0.0
    %800 = vmatprep.subr.mxu0 0.0
    %801 = vmatpush1.xpose.msra.mxu0 0.0
    %802 = vmatprep.subr.mxu0 0.0
    %803 = vmatpush1.xpose.msra.mxu0 0.0
    %804 = vmatprep.subr.mxu0 0.0
    %805 = vmatpush1.xpose.msra.mxu0 0.0
    %806 = vmatprep.subr.mxu0 0.0
    %807 = vmatpush1.xpose.msra.mxu0 0.0
    %808 = vmatprep.subr.mxu0 0.0
    %809 = vmatpush1.xpose.msra.mxu0 0.0
    %810 = vmatprep.subr.mxu0 0.0
    %811 = vmatpush1.xpose.msra.mxu0 0.0
    %812 = vmatprep.subr.mxu0 0.0
    %813 = vmatpush1.xpose.msra.mxu0 0.0
    %814 = vmatprep.subr.mxu0 0.0
    %815 = vmatpush1.xpose.msra.mxu0 0.0
    %816 = vmatprep.subr.mxu0 0.0
    %817 = vmatpush1.xpose.msra.mxu0 0.0
    %818 = vmatprep.subr.mxu0 0.0
    %819 = vmatpush1.xpose.msra.mxu0 0.0
    %820 = vmatprep.subr.mxu0 0.0
    %821 = vmatpush1.xpose.msra.mxu0 0.0
    %822 = vmatprep.subr.mxu0 0.0
    %823 = vmatpush1.xpose.msra.mxu0 0.0
    %824 = vmatprep.subr.mxu0 0.0
    %825 = vmatpush1.xpose.msra.mxu0 0.0
    %826 = vmatprep.subr.mxu0 0.0
    %827 = vmatpush1.xpose.msra.mxu0 0.0
    %828 = vmatprep.subr.mxu0 0.0
    %829 = vmatpush1.xpose.msra.mxu0 0.0
    %830 = vmatprep.subr.mxu0 0.0
    %831 = vmatpush1.xpose.msra.mxu0 0.0
    %832 = vmatprep.subr.mxu0 0.0
    %833 = vmatpush1.xpose.msra.mxu0 0.0
    %834 = vmatprep.subr.mxu0 0.0
    %835 = vmatpush1.xpose.msra.mxu0 0.0
    %836 = vmatprep.subr.mxu0 0.0
    %837 = vmatpush1.xpose.msra.mxu0 0.0
    %838 = vmatprep.subr.mxu0 0.0
    %839 = vmatpush1.xpose.msra.mxu0 0.0
    %840 = vmatprep.subr.mxu0 0.0
    %841 = vmatpush1.xpose.msra.mxu0 0.0
    %842 = vmatprep.subr.mxu0 0.0
    %843 = vmatpush1.xpose.msra.mxu0 0.0
    %844 = vmatprep.subr.mxu0 0.0
    %845 = vmatpush1.xpose.msra.mxu0 0.0
    %846 = vmatprep.mubr.f32.mxu0 0.0
    %847 = vmatmul.mubr.f32.gmra.mrb[0].mxu0 %v778
    %v848 = vpop.f32.mrb[0].mxu0
    %v849 = vadd.f32 0.0, %v848
    %v850 = vpop.f32.mrb[0].mxu0
    %851 = vdwg.mxu0
    %853 = vrot.lane.b32.xlu0 %v771, 96
    %v854 = vpop.permute.xlu0 %853
    %v855 = vsel %vm777, %v771, 0
    %v857 = vsel %vm777, %v854, 0
    %859 = vmatprep.subr.mxu0 0.0
    %860 = vmatpush1.xpose.msra.mxu0 %v857
    %861 = vmatprep.subr.mxu0 0.0
    %862 = vmatpush1.xpose.msra.mxu0 0.0
    %863 = vmatprep.subr.mxu0 0.0
    %864 = vmatpush1.xpose.msra.mxu0 0.0
    %865 = vmatprep.subr.mxu0 0.0
    %866 = vmatpush1.xpose.msra.mxu0 0.0
    %867 = vmatprep.subr.mxu0 0.0
    %868 = vmatpush1.xpose.msra.mxu0 0.0
    %869 = vmatprep.subr.mxu0 0.0
    %870 = vmatpush1.xpose.msra.mxu0 0.0
    %871 = vmatprep.subr.mxu0 0.0
    %872 = vmatpush1.xpose.msra.mxu0 0.0
    %873 = vmatprep.subr.mxu0 0.0
    %874 = vmatpush1.xpose.msra.mxu0 0.0
    %875 = vmatprep.subr.mxu0 0.0
    %876 = vmatpush1.xpose.msra.mxu0 0.0
    %877 = vmatprep.subr.mxu0 0.0
    %878 = vmatpush1.xpose.msra.mxu0 0.0
    %879 = vmatprep.subr.mxu0 0.0
    %880 = vmatpush1.xpose.msra.mxu0 0.0
    %881 = vmatprep.subr.mxu0 0.0
    %882 = vmatpush1.xpose.msra.mxu0 0.0
    %883 = vmatprep.subr.mxu0 0.0
    %884 = vmatpush1.xpose.msra.mxu0 0.0
    %885 = vmatprep.subr.mxu0 0.0
    %886 = vmatpush1.xpose.msra.mxu0 0.0
    %887 = vmatprep.subr.mxu0 0.0
    %888 = vmatpush1.xpose.msra.mxu0 0.0
    %889 = vmatprep.subr.mxu0 0.0
    %890 = vmatpush1.xpose.msra.mxu0 0.0
    %891 = vmatprep.subr.mxu0 0.0
    %892 = vmatpush1.xpose.msra.mxu0 0.0
    %893 = vmatprep.subr.mxu0 0.0
    %894 = vmatpush1.xpose.msra.mxu0 0.0
    %895 = vmatprep.subr.mxu0 0.0
    %896 = vmatpush1.xpose.msra.mxu0 0.0
    %897 = vmatprep.subr.mxu0 0.0
    %898 = vmatpush1.xpose.msra.mxu0 0.0
    %899 = vmatprep.subr.mxu0 0.0
    %900 = vmatpush1.xpose.msra.mxu0 0.0
    %901 = vmatprep.subr.mxu0 0.0
    %902 = vmatpush1.xpose.msra.mxu0 0.0
    %903 = vmatprep.subr.mxu0 0.0
    %904 = vmatpush1.xpose.msra.mxu0 0.0
    %905 = vmatprep.subr.mxu0 0.0
    %906 = vmatpush1.xpose.msra.mxu0 0.0
    %907 = vmatprep.subr.mxu0 0.0
    %908 = vmatpush1.xpose.msra.mxu0 0.0
    %909 = vmatprep.subr.mxu0 0.0
    %910 = vmatpush1.xpose.msra.mxu0 0.0
    %911 = vmatprep.subr.mxu0 0.0
    %912 = vmatpush1.xpose.msra.mxu0 0.0
    %913 = vmatprep.subr.mxu0 0.0
    %914 = vmatpush1.xpose.msra.mxu0 0.0
    %915 = vmatprep.subr.mxu0 0.0
    %916 = vmatpush1.xpose.msra.mxu0 0.0
    %917 = vmatprep.subr.mxu0 0.0
    %918 = vmatpush1.xpose.msra.mxu0 0.0
    %919 = vmatprep.subr.mxu0 0.0
    %920 = vmatpush1.xpose.msra.mxu0 0.0
    %921 = vmatprep.subr.mxu0 0.0
    %922 = vmatpush1.xpose.msra.mxu0 0.0
    %923 = vmatprep.mubr.f32.mxu0 0.0
    %924 = vmatmul.mubr.f32.gmra.mrb[0].mxu0 %v855
    %v925 = vpop.f32.mrb[0].mxu0
    %v926 = vadd.f32 0.0, %v925
    %v927 = vpop.f32.mrb[0].mxu0
    %928 = vdwg.mxu0
    %vm929 = vcmask 36864
    %v930 = vsel %vm929, %v849, -inf
    %931 = vmax.xlane.f32.xlu0 %v930
    %v932 = vpop.xlane.xlu0 %931
    %v933 = vsel %vm929, %v926, -inf
    %934 = vmax.xlane.f32.xlu0 %v933
    %v935 = vpop.xlane.xlu0 %934
    %v936 = vsub.f32 %v849, %v932
    %v937 = vsub.f32 %v926, %v935
    %v938 = vmul.f32 %v936, 1.442695
    %v939 = vpow.pop %v938
    %v940 = vmul.f32 %v937, 1.442695
    %v941 = vpow.pop %v940
    %v942 = vsel %vm929, %v939, 0.0
    %943 = vadd.xlane.f32.xlu0 %v942
    %v944 = vpop.xlane.xlu0 %943
    %v945 = vsel %vm929, %v941, 0.0
    %946 = vadd.xlane.f32.xlu0 %v945
    %v947 = vpop.xlane.xlu0 %946
    %v948 = vrcp.pop %v944
    %v949 = vrcp.pop %v947
    %v950 = vmul.f32 %v939, %v948
    %v951 = vmul.f32 %v941, %v949
    %952 = vrot.lane.b32.xlu0 %v698, 64
    %v953 = vpop.permute.xlu0 %952
    %vm954 = vcmask 39936
    %v956 = vsel %vm954, %v950, 0
    %vm958 = vcmask 1044480
    %v959 = vsel %vm958, %v953, 0
    %961 = vmatprep.subr.mxu0 0.0
    %962 = vmatpush1.msra.mxu0 %v959
    %963 = vmatprep.subr.mxu0 0.0
    %964 = vmatpush1.msra.mxu0 0.0
    %965 = vmatprep.subr.mxu0 0.0
    %966 = vmatpush1.msra.mxu0 0.0
    %967 = vmatprep.subr.mxu0 0.0
    %968 = vmatpush1.msra.mxu0 0.0
    %969 = vmatprep.subr.mxu0 0.0
    %970 = vmatpush1.msra.mxu0 0.0
    %971 = vmatprep.subr.mxu0 0.0
    %972 = vmatpush1.msra.mxu0 0.0
    %973 = vmatprep.subr.mxu0 0.0
    %974 = vmatpush1.msra.mxu0 0.0
    %975 = vmatprep.subr.mxu0 0.0
    %976 = vmatpush1.msra.mxu0 0.0
    %977 = vmatprep.subr.mxu0 0.0
    %978 = vmatpush1.msra.mxu0 0.0
    %979 = vmatprep.subr.mxu0 0.0
    %980 = vmatpush1.msra.mxu0 0.0
    %981 = vmatprep.subr.mxu0 0.0
    %982 = vmatpush1.msra.mxu0 0.0
    %983 = vmatprep.subr.mxu0 0.0
    %984 = vmatpush1.msra.mxu0 0.0
    %985 = vmatprep.subr.mxu0 0.0
    %986 = vmatpush1.msra.mxu0 0.0
    %987 = vmatprep.subr.mxu0 0.0
    %988 = vmatpush1.msra.mxu0 0.0
    %989 = vmatprep.subr.mxu0 0.0
    %990 = vmatpush1.msra.mxu0 0.0
    %991 = vmatprep.subr.mxu0 0.0
    %992 = vmatpush1.msra.mxu0 0.0
    %993 = vmatprep.subr.mxu0 0.0
    %994 = vmatpush1.msra.mxu0 0.0
    %995 = vmatprep.subr.mxu0 0.0
    %996 = vmatpush1.msra.mxu0 0.0
    %997 = vmatprep.subr.mxu0 0.0
    %998 = vmatpush1.msra.mxu0 0.0
    %999 = vmatprep.subr.mxu0 0.0
    %1000 = vmatpush1.msra.mxu0 0.0
    %1001 = vmatprep.subr.mxu0 0.0
    %1002 = vmatpush1.msra.mxu0 0.0
    %1003 = vmatprep.subr.mxu0 0.0
    %1004 = vmatpush1.msra.mxu0 0.0
    %1005 = vmatprep.subr.mxu0 0.0
    %1006 = vmatpush1.msra.mxu0 0.0
    %1007 = vmatprep.subr.mxu0 0.0
    %1008 = vmatpush1.msra.mxu0 0.0
    %1009 = vmatprep.subr.mxu0 0.0
    %1010 = vmatpush1.msra.mxu0 0.0
    %1011 = vmatprep.subr.mxu0 0.0
    %1012 = vmatpush1.msra.mxu0 0.0
    %1013 = vmatprep.subr.mxu0 0.0
    %1014 = vmatpush1.msra.mxu0 0.0
    %1015 = vmatprep.subr.mxu0 0.0
    %1016 = vmatpush1.msra.mxu0 0.0
    %1017 = vmatprep.subr.mxu0 0.0
    %1018 = vmatpush1.msra.mxu0 0.0
    %1019 = vmatprep.subr.mxu0 0.0
    %1020 = vmatpush1.msra.mxu0 0.0
    %1021 = vmatprep.subr.mxu0 0.0
    %1022 = vmatpush1.msra.mxu0 0.0
    %1023 = vmatprep.subr.mxu0 0.0
    %1024 = vmatpush1.msra.mxu0 0.0
    %1025 = vmatprep.mubr.f32.mxu0 0.0
    %1026 = vmatmul.mubr.f32.gmra.mrb[0].mxu0 %v956
    %v1027 = vpop.f32.mrb[0].mxu0
    %v1028 = vadd.f32 0.0, %v1027
    %v1029 = vpop.f32.mrb[0].mxu0
    %1030 = vdwg.mxu0
    %1031 = vrot.lane.b32.xlu0 %v771, 64
    %v1032 = vpop.permute.xlu0 %1031
    %v1034 = vsel %vm954, %v951, 0
    %v1036 = vsel %vm958, %v1032, 0
    %1038 = vmatprep.subr.mxu0 0.0
    %1039 = vmatpush1.msra.mxu0 %v1036
    %1040 = vmatprep.subr.mxu0 0.0
    %1041 = vmatpush1.msra.mxu0 0.0
    %1042 = vmatprep.subr.mxu0 0.0
    %1043 = vmatpush1.msra.mxu0 0.0
    %1044 = vmatprep.subr.mxu0 0.0
    %1045 = vmatpush1.msra.mxu0 0.0
    %1046 = vmatprep.subr.mxu0 0.0
    %1047 = vmatpush1.msra.mxu0 0.0
    %1048 = vmatprep.subr.mxu0 0.0
    %1049 = vmatpush1.msra.mxu0 0.0
    %1050 = vmatprep.subr.mxu0 0.0
    %1051 = vmatpush1.msra.mxu0 0.0
    %1052 = vmatprep.subr.mxu0 0.0
    %1053 = vmatpush1.msra.mxu0 0.0
    %1054 = vmatprep.subr.mxu0 0.0
    %1055 = vmatpush1.msra.mxu0 0.0
    %1056 = vmatprep.subr.mxu0 0.0
    %1057 = vmatpush1.msra.mxu0 0.0
    %1058 = vmatprep.subr.mxu0 0.0
    %1059 = vmatpush1.msra.mxu0 0.0
    %1060 = vmatprep.subr.mxu0 0.0
    %1061 = vmatpush1.msra.mxu0 0.0
    %1062 = vmatprep.subr.mxu0 0.0
    %1063 = vmatpush1.msra.mxu0 0.0
    %1064 = vmatprep.subr.mxu0 0.0
    %1065 = vmatpush1.msra.mxu0 0.0
    %1066 = vmatprep.subr.mxu0 0.0
    %1067 = vmatpush1.msra.mxu0 0.0
    %1068 = vmatprep.subr.mxu0 0.0
    %1069 = vmatpush1.msra.mxu0 0.0
    %1070 = vmatprep.subr.mxu0 0.0
    %1071 = vmatpush1.msra.mxu0 0.0
    %1072 = vmatprep.subr.mxu0 0.0
    %1073 = vmatpush1.msra.mxu0 0.0
    %1074 = vmatprep.subr.mxu0 0.0
    %1075 = vmatpush1.msra.mxu0 0.0
    %1076 = vmatprep.subr.mxu0 0.0
    %1077 = vmatpush1.msra.mxu0 0.0
    %1078 = vmatprep.subr.mxu0 0.0
    %1079 = vmatpush1.msra.mxu0 0.0
    %1080 = vmatprep.subr.mxu0 0.0
    %1081 = vmatpush1.msra.mxu0 0.0
    %1082 = vmatprep.subr.mxu0 0.0
    %1083 = vmatpush1.msra.mxu0 0.0
    %1084 = vmatprep.subr.mxu0 0.0
    %1085 = vmatpush1.msra.mxu0 0.0
    %1086 = vmatprep.subr.mxu0 0.0
    %1087 = vmatpush1.msra.mxu0 0.0
    %1088 = vmatprep.subr.mxu0 0.0
    %1089 = vmatpush1.msra.mxu0 0.0
    %1090 = vmatprep.subr.mxu0 0.0
    %1091 = vmatpush1.msra.mxu0 0.0
    %1092 = vmatprep.subr.mxu0 0.0
    %1093 = vmatpush1.msra.mxu0 0.0
    %1094 = vmatprep.subr.mxu0 0.0
    %1095 = vmatpush1.msra.mxu0 0.0
    %1096 = vmatprep.subr.mxu0 0.0
    %1097 = vmatpush1.msra.mxu0 0.0
    %1098 = vmatprep.subr.mxu0 0.0
    %1099 = vmatpush1.msra.mxu0 0.0
    %1100 = vmatprep.subr.mxu0 0.0
    %1101 = vmatpush1.msra.mxu0 0.0
    %1102 = vmatprep.mubr.f32.mxu0 0.0
    %1103 = vmatmul.mubr.f32.gmra.mrb[0].mxu0 %v1034
    %v1104 = vpop.f32.mrb[0].mxu0
    %v1105 = vadd.f32 0.0, %v1104
    %v1106 = vpop.f32.mrb[0].mxu0
    %1107 = vdwg.mxu0
    %1108 = vrot.lane.b32.xlu0 %v698, 120
    %v1109 = vpop.permute.xlu0 %1108
    %1110 = vrot.lane.b32.xlu0 %v698, 88
    %v1111 = vpop.permute.xlu0 %1110
    %v1112 = vsel %vm777, %v1109, 0
    %v1114 = vsel %vm777, %v1111, 0
    %1116 = vmatprep.subr.mxu0 0.0
    %1117 = vmatpush1.xpose.msra.mxu0 %v1114
    %1118 = vmatprep.subr.mxu0 0.0
    %1119 = vmatpush1.xpose.msra.mxu0 0.0
    %1120 = vmatprep.subr.mxu0 0.0
    %1121 = vmatpush1.xpose.msra.mxu0 0.0
    %1122 = vmatprep.subr.mxu0 0.0
    %1123 = vmatpush1.xpose.msra.mxu0 0.0
    %1124 = vmatprep.subr.mxu0 0.0
    %1125 = vmatpush1.xpose.msra.mxu0 0.0
    %1126 = vmatprep.subr.mxu0 0.0
    %1127 = vmatpush1.xpose.msra.mxu0 0.0
    %1128 = vmatprep.subr.mxu0 0.0
    %1129 = vmatpush1.xpose.msra.mxu0 0.0
    %1130 = vmatprep.subr.mxu0 0.0
    %1131 = vmatpush1.xpose.msra.mxu0 0.0
    %1132 = vmatprep.subr.mxu0 0.0
    %1133 = vmatpush1.xpose.msra.mxu0 0.0
    %1134 = vmatprep.subr.mxu0 0.0
    %1135 = vmatpush1.xpose.msra.mxu0 0.0
    %1136 = vmatprep.subr.mxu0 0.0
    %1137 = vmatpush1.xpose.msra.mxu0 0.0
    %1138 = vmatprep.subr.mxu0 0.0
    %1139 = vmatpush1.xpose.msra.mxu0 0.0
    %1140 = vmatprep.subr.mxu0 0.0
    %1141 = vmatpush1.xpose.msra.mxu0 0.0
    %1142 = vmatprep.subr.mxu0 0.0
    %1143 = vmatpush1.xpose.msra.mxu0 0.0
    %1144 = vmatprep.subr.mxu0 0.0
    %1145 = vmatpush1.xpose.msra.mxu0 0.0
    %1146 = vmatprep.subr.mxu0 0.0
    %1147 = vmatpush1.xpose.msra.mxu0 0.0
    %1148 = vmatprep.subr.mxu0 0.0
    %1149 = vmatpush1.xpose.msra.mxu0 0.0
    %1150 = vmatprep.subr.mxu0 0.0
    %1151 = vmatpush1.xpose.msra.mxu0 0.0
    %1152 = vmatprep.subr.mxu0 0.0
    %1153 = vmatpush1.xpose.msra.mxu0 0.0
    %1154 = vmatprep.subr.mxu0 0.0
    %1155 = vmatpush1.xpose.msra.mxu0 0.0
    %1156 = vmatprep.subr.mxu0 0.0
    %1157 = vmatpush1.xpose.msra.mxu0 0.0
    %1158 = vmatprep.subr.mxu0 0.0
    %1159 = vmatpush1.xpose.msra.mxu0 0.0
    %1160 = vmatprep.subr.mxu0 0.0
    %1161 = vmatpush1.xpose.msra.mxu0 0.0
    %1162 = vmatprep.subr.mxu0 0.0
    %1163 = vmatpush1.xpose.msra.mxu0 0.0
    %1164 = vmatprep.subr.mxu0 0.0
    %1165 = vmatpush1.xpose.msra.mxu0 0.0
    %1166 = vmatprep.subr.mxu0 0.0
    %1167 = vmatpush1.xpose.msra.mxu0 0.0
    %1168 = vmatprep.subr.mxu0 0.0
    %1169 = vmatpush1.xpose.msra.mxu0 0.0
    %1170 = vmatprep.subr.mxu0 0.0
    %1171 = vmatpush1.xpose.msra.mxu0 0.0
    %1172 = vmatprep.subr.mxu0 0.0
    %1173 = vmatpush1.xpose.msra.mxu0 0.0
    %1174 = vmatprep.subr.mxu0 0.0
    %1175 = vmatpush1.xpose.msra.mxu0 0.0
    %1176 = vmatprep.subr.mxu0 0.0
    %1177 = vmatpush1.xpose.msra.mxu0 0.0
    %1178 = vmatprep.subr.mxu0 0.0
    %1179 = vmatpush1.xpose.msra.mxu0 0.0
    %1180 = vmatprep.mubr.f32.mxu0 0.0
    %1181 = vmatmul.mubr.f32.gmra.mrb[0].mxu0 %v1112
    %v1182 = vpop.f32.mrb[0].mxu0
    %v1183 = vadd.f32 0.0, %v1182
    %v1184 = vpop.f32.mrb[0].mxu0
    %1185 = vdwg.mxu0
    %1186 = vrot.lane.b32.xlu0 %v771, 120
    %v1187 = vpop.permute.xlu0 %1186
    %1188 = vrot.lane.b32.xlu0 %v771, 88
    %v1189 = vpop.permute.xlu0 %1188
    %v1190 = vsel %vm777, %v1187, 0
    %v1192 = vsel %vm777, %v1189, 0
    %1194 = vmatprep.subr.mxu0 0.0
    %1195 = vmatpush1.xpose.msra.mxu0 %v1192
    %1196 = vmatprep.subr.mxu0 0.0
    %1197 = vmatpush1.xpose.msra.mxu0 0.0
    %1198 = vmatprep.subr.mxu0 0.0
    %1199 = vmatpush1.xpose.msra.mxu0 0.0
    %1200 = vmatprep.subr.mxu0 0.0
    %1201 = vmatpush1.xpose.msra.mxu0 0.0
    %1202 = vmatprep.subr.mxu0 0.0
    %1203 = vmatpush1.xpose.msra.mxu0 0.0
    %1204 = vmatprep.subr.mxu0 0.0
    %1205 = vmatpush1.xpose.msra.mxu0 0.0
    %1206 = vmatprep.subr.mxu0 0.0
    %1207 = vmatpush1.xpose.msra.mxu0 0.0
    %1208 = vmatprep.subr.mxu0 0.0
    %1209 = vmatpush1.xpose.msra.mxu0 0.0
    %1210 = vmatprep.subr.mxu0 0.0
    %1211 = vmatpush1.xpose.msra.mxu0 0.0
    %1212 = vmatprep.subr.mxu0 0.0
    %1213 = vmatpush1.xpose.msra.mxu0 0.0
    %1214 = vmatprep.subr.mxu0 0.0
    %1215 = vmatpush1.xpose.msra.mxu0 0.0
    %1216 = vmatprep.subr.mxu0 0.0
    %1217 = vmatpush1.xpose.msra.mxu0 0.0
    %1218 = vmatprep.subr.mxu0 0.0
    %1219 = vmatpush1.xpose.msra.mxu0 0.0
    %1220 = vmatprep.subr.mxu0 0.0
    %1221 = vmatpush1.xpose.msra.mxu0 0.0
    %1222 = vmatprep.subr.mxu0 0.0
    %1223 = vmatpush1.xpose.msra.mxu0 0.0
    %1224 = vmatprep.subr.mxu0 0.0
    %1225 = vmatpush1.xpose.msra.mxu0 0.0
    %1226 = vmatprep.subr.mxu0 0.0
    %1227 = vmatpush1.xpose.msra.mxu0 0.0
    %1228 = vmatprep.subr.mxu0 0.0
    %1229 = vmatpush1.xpose.msra.mxu0 0.0
    %1230 = vmatprep.subr.mxu0 0.0
    %1231 = vmatpush1.xpose.msra.mxu0 0.0
    %1232 = vmatprep.subr.mxu0 0.0
    %1233 = vmatpush1.xpose.msra.mxu0 0.0
    %1234 = vmatprep.subr.mxu0 0.0
    %1235 = vmatpush1.xpose.msra.mxu0 0.0
    %1236 = vmatprep.subr.mxu0 0.0
    %1237 = vmatpush1.xpose.msra.mxu0 0.0
    %1238 = vmatprep.subr.mxu0 0.0
    %1239 = vmatpush1.xpose.msra.mxu0 0.0
    %1240 = vmatprep.subr.mxu0 0.0
    %1241 = vmatpush1.xpose.msra.mxu0 0.0
    %1242 = vmatprep.subr.mxu0 0.0
    %1243 = vmatpush1.xpose.msra.mxu0 0.0
    %1244 = vmatprep.subr.mxu0 0.0
    %1245 = vmatpush1.xpose.msra.mxu0 0.0
    %1246 = vmatprep.subr.mxu0 0.0
    %1247 = vmatpush1.xpose.msra.mxu0 0.0
    %1248 = vmatprep.subr.mxu0 0.0
    %1249 = vmatpush1.xpose.msra.mxu0 0.0
    %1250 = vmatprep.subr.mxu0 0.0
    %1251 = vmatpush1.xpose.msra.mxu0 0.0
    %1252 = vmatprep.subr.mxu0 0.0
    %1253 = vmatpush1.xpose.msra.mxu0 0.0
    %1254 = vmatprep.subr.mxu0 0.0
    %1255 = vmatpush1.xpose.msra.mxu0 0.0
    %1256 = vmatprep.subr.mxu0 0.0
    %1257 = vmatpush1.xpose.msra.mxu0 0.0
    %1258 = vmatprep.mubr.f32.mxu0 0.0
    %1259 = vmatmul.mubr.f32.gmra.mrb[0].mxu0 %v1190
    %v1260 = vpop.f32.mrb[0].mxu0
    %v1261 = vadd.f32 0.0, %v1260
    %v1262 = vpop.f32.mrb[0].mxu0
    %1263 = vdwg.mxu0
    %v1264 = vsel %vm929, %v1183, -inf
    %1265 = vmax.xlane.f32.xlu0 %v1264
    %v1266 = vpop.xlane.xlu0 %1265
    %v1267 = vsel %vm929, %v1261, -inf
    %1268 = vmax.xlane.f32.xlu0 %v1267
    %v1269 = vpop.xlane.xlu0 %1268
    %v1270 = vsub.f32 %v1183, %v1266
    %v1271 = vsub.f32 %v1261, %v1269
    %v1272 = vmul.f32 %v1270, 1.442695
    %v1273 = vpow.pop %v1272
    %v1274 = vmul.f32 %v1271, 1.442695
    %v1275 = vpow.pop %v1274
    %v1276 = vsel %vm929, %v1273, 0.0
    %1277 = vadd.xlane.f32.xlu0 %v1276
    %v1278 = vpop.xlane.xlu0 %1277
    %v1279 = vsel %vm929, %v1275, 0.0
    %1280 = vadd.xlane.f32.xlu0 %v1279
    %v1281 = vpop.xlane.xlu0 %1280
    %v1282 = vrcp.pop %v1278
    %v1283 = vrcp.pop %v1281
    %v1284 = vmul.f32 %v1273, %v1282
    %v1285 = vmul.f32 %v1275, %v1283
    %1286 = vrot.lane.b32.xlu0 %v698, 56
    %v1287 = vpop.permute.xlu0 %1286
    %v1289 = vsel %vm954, %v1284, 0
    %v1291 = vsel %vm958, %v1287, 0
    %1293 = vmatprep.subr.mxu0 0.0
    %1294 = vmatpush1.msra.mxu0 %v1291
    %1295 = vmatprep.subr.mxu0 0.0
    %1296 = vmatpush1.msra.mxu0 0.0
    %1297 = vmatprep.subr.mxu0 0.0
    %1298 = vmatpush1.msra.mxu0 0.0
    %1299 = vmatprep.subr.mxu0 0.0
    %1300 = vmatpush1.msra.mxu0 0.0
    %1301 = vmatprep.subr.mxu0 0.0
    %1302 = vmatpush1.msra.mxu0 0.0
    %1303 = vmatprep.subr.mxu0 0.0
    %1304 = vmatpush1.msra.mxu0 0.0
    %1305 = vmatprep.subr.mxu0 0.0
    %1306 = vmatpush1.msra.mxu0 0.0
    %1307 = vmatprep.subr.mxu0 0.0
    %1308 = vmatpush1.msra.mxu0 0.0
    %1309 = vmatprep.subr.mxu0 0.0
    %1310 = vmatpush1.msra.mxu0 0.0
    %1311 = vmatprep.subr.mxu0 0.0
    %1312 = vmatpush1.msra.mxu0 0.0
    %1313 = vmatprep.subr.mxu0 0.0
    %1314 = vmatpush1.msra.mxu0 0.0
    %1315 = vmatprep.subr.mxu0 0.0
    %1316 = vmatpush1.msra.mxu0 0.0
    %1317 = vmatprep.subr.mxu0 0.0
    %1318 = vmatpush1.msra.mxu0 0.0
    %1319 = vmatprep.subr.mxu0 0.0
    %1320 = vmatpush1.msra.mxu0 0.0
    %1321 = vmatprep.subr.mxu0 0.0
    %1322 = vmatpush1.msra.mxu0 0.0
    %1323 = vmatprep.subr.mxu0 0.0
    %1324 = vmatpush1.msra.mxu0 0.0
    %1325 = vmatprep.subr.mxu0 0.0
    %1326 = vmatpush1.msra.mxu0 0.0
    %1327 = vmatprep.subr.mxu0 0.0
    %1328 = vmatpush1.msra.mxu0 0.0
    %1329 = vmatprep.subr.mxu0 0.0
    %1330 = vmatpush1.msra.mxu0 0.0
    %1331 = vmatprep.subr.mxu0 0.0
    %1332 = vmatpush1.msra.mxu0 0.0
    %1333 = vmatprep.subr.mxu0 0.0
    %1334 = vmatpush1.msra.mxu0 0.0
    %1335 = vmatprep.subr.mxu0 0.0
    %1336 = vmatpush1.msra.mxu0 0.0
    %1337 = vmatprep.subr.mxu0 0.0
    %1338 = vmatpush1.msra.mxu0 0.0
    %1339 = vmatprep.subr.mxu0 0.0
    %1340 = vmatpush1.msra.mxu0 0.0
    %1341 = vmatprep.subr.mxu0 0.0
    %1342 = vmatpush1.msra.mxu0 0.0
    %1343 = vmatprep.subr.mxu0 0.0
    %1344 = vmatpush1.msra.mxu0 0.0
    %1345 = vmatprep.subr.mxu0 0.0
    %1346 = vmatpush1.msra.mxu0 0.0
    %1347 = vmatprep.subr.mxu0 0.0
    %1348 = vmatpush1.msra.mxu0 0.0
    %1349 = vmatprep.subr.mxu0 0.0
    %1350 = vmatpush1.msra.mxu0 0.0
    %1351 = vmatprep.subr.mxu0 0.0
    %1352 = vmatpush1.msra.mxu0 0.0
    %1353 = vmatprep.subr.mxu0 0.0
    %1354 = vmatpush1.msra.mxu0 0.0
    %1355 = vmatprep.subr.mxu0 0.0
    %1356 = vmatpush1.msra.mxu0 0.0
    %1357 = vmatprep.mubr.f32.mxu0 0.0
    %1358 = vmatmul.mubr.f32.gmra.mrb[0].mxu0 %v1289
    %v1359 = vpop.f32.mrb[0].mxu0
    %v1360 = vadd.f32 0.0, %v1359
    %v1361 = vpop.f32.mrb[0].mxu0
    %1362 = vdwg.mxu0
    %1363 = vrot.lane.b32.xlu0 %v771, 56
    %v1364 = vpop.permute.xlu0 %1363
    %v1366 = vsel %vm954, %v1285, 0
    %v1368 = vsel %vm958, %v1364, 0
    %1370 = vmatprep.subr.mxu0 0.0
    %1371 = vmatpush1.msra.mxu0 %v1368
    %1372 = vmatprep.subr.mxu0 0.0
    %1373 = vmatpush1.msra.mxu0 0.0
    %1374 = vmatprep.subr.mxu0 0.0
    %1375 = vmatpush1.msra.mxu0 0.0
    %1376 = vmatprep.subr.mxu0 0.0
    %1377 = vmatpush1.msra.mxu0 0.0
    %1378 = vmatprep.subr.mxu0 0.0
    %1379 = vmatpush1.msra.mxu0 0.0
    %1380 = vmatprep.subr.mxu0 0.0
    %1381 = vmatpush1.msra.mxu0 0.0
    %1382 = vmatprep.subr.mxu0 0.0
    %1383 = vmatpush1.msra.mxu0 0.0
    %1384 = vmatprep.subr.mxu0 0.0
    %1385 = vmatpush1.msra.mxu0 0.0
    %1386 = vmatprep.subr.mxu0 0.0
    %1387 = vmatpush1.msra.mxu0 0.0
    %1388 = vmatprep.subr.mxu0 0.0
    %1389 = vmatpush1.msra.mxu0 0.0
    %1390 = vmatprep.subr.mxu0 0.0
    %1391 = vmatpush1.msra.mxu0 0.0
    %1392 = vmatprep.subr.mxu0 0.0
    %1393 = vmatpush1.msra.mxu0 0.0
    %1394 = vmatprep.subr.mxu0 0.0
    %1395 = vmatpush1.msra.mxu0 0.0
    %1396 = vmatprep.subr.mxu0 0.0
    %1397 = vmatpush1.msra.mxu0 0.0
    %1398 = vmatprep.subr.mxu0 0.0
    %1399 = vmatpush1.msra.mxu0 0.0
    %1400 = vmatprep.subr.mxu0 0.0
    %1401 = vmatpush1.msra.mxu0 0.0
    %1402 = vmatprep.subr.mxu0 0.0
    %1403 = vmatpush1.msra.mxu0 0.0
    %1404 = vmatprep.subr.mxu0 0.0
    %1405 = vmatpush1.msra.mxu0 0.0
    %1406 = vmatprep.subr.mxu0 0.0
    %1407 = vmatpush1.msra.mxu0 0.0
    %1408 = vmatprep.subr.mxu0 0.0
    %1409 = vmatpush1.msra.mxu0 0.0
    %1410 = vmatprep.subr.mxu0 0.0
    %1411 = vmatpush1.msra.mxu0 0.0
    %1412 = vmatprep.subr.mxu0 0.0
    %1413 = vmatpush1.msra.mxu0 0.0
    %1414 = vmatprep.subr.mxu0 0.0
    %1415 = vmatpush1.msra.mxu0 0.0
    %1416 = vmatprep.subr.mxu0 0.0
    %1417 = vmatpush1.msra.mxu0 0.0
    %1418 = vmatprep.subr.mxu0 0.0
    %1419 = vmatpush1.msra.mxu0 0.0
    %1420 = vmatprep.subr.mxu0 0.0
    %1421 = vmatpush1.msra.mxu0 0.0
    %1422 = vmatprep.subr.mxu0 0.0
    %1423 = vmatpush1.msra.mxu0 0.0
    %1424 = vmatprep.subr.mxu0 0.0
    %1425 = vmatpush1.msra.mxu0 0.0
    %1426 = vmatprep.subr.mxu0 0.0
    %1427 = vmatpush1.msra.mxu0 0.0
    %1428 = vmatprep.subr.mxu0 0.0
    %1429 = vmatpush1.msra.mxu0 0.0
    %1430 = vmatprep.subr.mxu0 0.0
    %1431 = vmatpush1.msra.mxu0 0.0
    %1432 = vmatprep.subr.mxu0 0.0
    %1433 = vmatpush1.msra.mxu0 0.0
    %1434 = vmatprep.mubr.f32.mxu0 0.0
    %1435 = vmatmul.mubr.f32.gmra.mrb[0].mxu0 %v1366
    %v1436 = vpop.f32.mrb[0].mxu0
    %v1437 = vadd.f32 0.0, %v1436
    %v1438 = vpop.f32.mrb[0].mxu0
    %1439 = vdwg.mxu0
    %1440 = vrot.lane.b32.xlu0 %v698, 112
    %v1441 = vpop.permute.xlu0 %1440
    %1442 = vrot.lane.b32.xlu0 %v698, 80
    %v1443 = vpop.permute.xlu0 %1442
    %v1444 = vsel %vm777, %v1441, 0
    %v1446 = vsel %vm777, %v1443, 0
    %1448 = vmatprep.subr.mxu0 0.0
    %1449 = vmatpush1.xpose.msra.mxu0 %v1446
    %1450 = vmatprep.subr.mxu0 0.0
    %1451 = vmatpush1.xpose.msra.mxu0 0.0
    %1452 = vmatprep.subr.mxu0 0.0
    %1453 = vmatpush1.xpose.msra.mxu0 0.0
    %1454 = vmatprep.subr.mxu0 0.0
    %1455 = vmatpush1.xpose.msra.mxu0 0.0
    %1456 = vmatprep.subr.mxu0 0.0
    %1457 = vmatpush1.xpose.msra.mxu0 0.0
    %1458 = vmatprep.subr.mxu0 0.0
    %1459 = vmatpush1.xpose.msra.mxu0 0.0
    %1460 = vmatprep.subr.mxu0 0.0
    %1461 = vmatpush1.xpose.msra.mxu0 0.0
    %1462 = vmatprep.subr.mxu0 0.0
    %1463 = vmatpush1.xpose.msra.mxu0 0.0
    %1464 = vmatprep.subr.mxu0 0.0
    %1465 = vmatpush1.xpose.msra.mxu0 0.0
    %1466 = vmatprep.subr.mxu0 0.0
    %1467 = vmatpush1.xpose.msra.mxu0 0.0
    %1468 = vmatprep.subr.mxu0 0.0
    %1469 = vmatpush1.xpose.msra.mxu0 0.0
    %1470 = vmatprep.subr.mxu0 0.0
    %1471 = vmatpush1.xpose.msra.mxu0 0.0
    %1472 = vmatprep.subr.mxu0 0.0
    %1473 = vmatpush1.xpose.msra.mxu0 0.0
    %1474 = vmatprep.subr.mxu0 0.0
    %1475 = vmatpush1.xpose.msra.mxu0 0.0
    %1476 = vmatprep.subr.mxu0 0.0
    %1477 = vmatpush1.xpose.msra.mxu0 0.0
    %1478 = vmatprep.subr.mxu0 0.0
    %1479 = vmatpush1.xpose.msra.mxu0 0.0
    %1480 = vmatprep.subr.mxu0 0.0
    %1481 = vmatpush1.xpose.msra.mxu0 0.0
    %1482 = vmatprep.subr.mxu0 0.0
    %1483 = vmatpush1.xpose.msra.mxu0 0.0
    %1484 = vmatprep.subr.mxu0 0.0
    %1485 = vmatpush1.xpose.msra.mxu0 0.0
    %1486 = vmatprep.subr.mxu0 0.0
    %1487 = vmatpush1.xpose.msra.mxu0 0.0
    %1488 = vmatprep.subr.mxu0 0.0
    %1489 = vmatpush1.xpose.msra.mxu0 0.0
    %1490 = vmatprep.subr.mxu0 0.0
    %1491 = vmatpush1.xpose.msra.mxu0 0.0
    %1492 = vmatprep.subr.mxu0 0.0
    %1493 = vmatpush1.xpose.msra.mxu0 0.0
    %1494 = vmatprep.subr.mxu0 0.0
    %1495 = vmatpush1.xpose.msra.mxu0 0.0
    %1496 = vmatprep.subr.mxu0 0.0
    %1497 = vmatpush1.xpose.msra.mxu0 0.0
    %1498 = vmatprep.subr.mxu0 0.0
    %1499 = vmatpush1.xpose.msra.mxu0 0.0
    %1500 = vmatprep.subr.mxu0 0.0
    %1501 = vmatpush1.xpose.msra.mxu0 0.0
    %1502 = vmatprep.subr.mxu0 0.0
    %1503 = vmatpush1.xpose.msra.mxu0 0.0
    %1504 = vmatprep.subr.mxu0 0.0
    %1505 = vmatpush1.xpose.msra.mxu0 0.0
    %1506 = vmatprep.subr.mxu0 0.0
    %1507 = vmatpush1.xpose.msra.mxu0 0.0
    %1508 = vmatprep.subr.mxu0 0.0
    %1509 = vmatpush1.xpose.msra.mxu0 0.0
    %1510 = vmatprep.subr.mxu0 0.0
    %1511 = vmatpush1.xpose.msra.mxu0 0.0
    %1512 = vmatprep.mubr.f32.mxu0 0.0
    %1513 = vmatmul.mubr.f32.gmra.mrb[0].mxu0 %v1444
    %v1514 = vpop.f32.mrb[0].mxu0
    %v1515 = vadd.f32 0.0, %v1514
    %v1516 = vpop.f32.mrb[0].mxu0
    %1517 = vdwg.mxu0
    %1518 = vrot.lane.b32.xlu0 %v771, 112
    %v1519 = vpop.permute.xlu0 %1518
    %1520 = vrot.lane.b32.xlu0 %v771, 80
    %v1521 = vpop.permute.xlu0 %1520
    %v1522 = vsel %vm777, %v1519, 0
    %v1524 = vsel %vm777, %v1521, 0
    %1526 = vmatprep.subr.mxu0 0.0
    %1527 = vmatpush1.xpose.msra.mxu0 %v1524
    %1528 = vmatprep.subr.mxu0 0.0
    %1529 = vmatpush1.xpose.msra.mxu0 0.0
    %1530 = vmatprep.subr.mxu0 0.0
    %1531 = vmatpush1.xpose.msra.mxu0 0.0
    %1532 = vmatprep.subr.mxu0 0.0
    %1533 = vmatpush1.xpose.msra.mxu0 0.0
    %1534 = vmatprep.subr.mxu0 0.0
    %1535 = vmatpush1.xpose.msra.mxu0 0.0
    %1536 = vmatprep.subr.mxu0 0.0
    %1537 = vmatpush1.xpose.msra.mxu0 0.0
    %1538 = vmatprep.subr.mxu0 0.0
    %1539 = vmatpush1.xpose.msra.mxu0 0.0
    %1540 = vmatprep.subr.mxu0 0.0
    %1541 = vmatpush1.xpose.msra.mxu0 0.0
    %1542 = vmatprep.subr.mxu0 0.0
    %1543 = vmatpush1.xpose.msra.mxu0 0.0
    %1544 = vmatprep.subr.mxu0 0.0
    %1545 = vmatpush1.xpose.msra.mxu0 0.0
    %1546 = vmatprep.subr.mxu0 0.0
    %1547 = vmatpush1.xpose.msra.mxu0 0.0
    %1548 = vmatprep.subr.mxu0 0.0
    %1549 = vmatpush1.xpose.msra.mxu0 0.0
    %1550 = vmatprep.subr.mxu0 0.0
    %1551 = vmatpush1.xpose.msra.mxu0 0.0
    %1552 = vmatprep.subr.mxu0 0.0
    %1553 = vmatpush1.xpose.msra.mxu0 0.0
    %1554 = vmatprep.subr.mxu0 0.0
    %1555 = vmatpush1.xpose.msra.mxu0 0.0
    %1556 = vmatprep.subr.mxu0 0.0
    %1557 = vmatpush1.xpose.msra.mxu0 0.0
    %1558 = vmatprep.subr.mxu0 0.0
    %1559 = vmatpush1.xpose.msra.mxu0 0.0
    %1560 = vmatprep.subr.mxu0 0.0
    %1561 = vmatpush1.xpose.msra.mxu0 0.0
    %1562 = vmatprep.subr.mxu0 0.0
    %1563 = vmatpush1.xpose.msra.mxu0 0.0
    %1564 = vmatprep.subr.mxu0 0.0
    %1565 = vmatpush1.xpose.msra.mxu0 0.0
    %1566 = vmatprep.subr.mxu0 0.0
    %1567 = vmatpush1.xpose.msra.mxu0 0.0
    %1568 = vmatprep.subr.mxu0 0.0
    %1569 = vmatpush1.xpose.msra.mxu0 0.0
    %1570 = vmatprep.subr.mxu0 0.0
    %1571 = vmatpush1.xpose.msra.mxu0 0.0
    %1572 = vmatprep.subr.mxu0 0.0
    %1573 = vmatpush1.xpose.msra.mxu0 0.0
    %1574 = vmatprep.subr.mxu0 0.0
    %1575 = vmatpush1.xpose.msra.mxu0 0.0
    %1576 = vmatprep.subr.mxu0 0.0
    %1577 = vmatpush1.xpose.msra.mxu0 0.0
    %1578 = vmatprep.subr.mxu0 0.0
    %1579 = vmatpush1.xpose.msra.mxu0 0.0
    %1580 = vmatprep.subr.mxu0 0.0
    %1581 = vmatpush1.xpose.msra.mxu0 0.0
    %1582 = vmatprep.subr.mxu0 0.0
    %1583 = vmatpush1.xpose.msra.mxu0 0.0
    %1584 = vmatprep.subr.mxu0 0.0
    %1585 = vmatpush1.xpose.msra.mxu0 0.0
    %1586 = vmatprep.subr.mxu0 0.0
    %1587 = vmatpush1.xpose.msra.mxu0 0.0
    %1588 = vmatprep.subr.mxu0 0.0
    %1589 = vmatpush1.xpose.msra.mxu0 0.0
    %1590 = vmatprep.mubr.f32.mxu0 0.0
    %1591 = vmatmul.mubr.f32.gmra.mrb[0].mxu0 %v1522
    %v1592 = vpop.f32.mrb[0].mxu0
    %v1593 = vadd.f32 0.0, %v1592
    %v1594 = vpop.f32.mrb[0].mxu0
    %1595 = vdwg.mxu0
    %v1596 = vsel %vm929, %v1515, -inf
    %1597 = vmax.xlane.f32.xlu0 %v1596
    %v1598 = vpop.xlane.xlu0 %1597
    %v1599 = vsel %vm929, %v1593, -inf
    %1600 = vmax.xlane.f32.xlu0 %v1599
    %v1601 = vpop.xlane.xlu0 %1600
    %v1602 = vsub.f32 %v1515, %v1598
    %v1603 = vsub.f32 %v1593, %v1601
    %v1604 = vmul.f32 %v1602, 1.442695
    %v1605 = vpow.pop %v1604
    %v1606 = vmul.f32 %v1603, 1.442695
    %v1607 = vpow.pop %v1606
    %v1608 = vsel %vm929, %v1605, 0.0
    %1609 = vadd.xlane.f32.xlu0 %v1608
    %v1610 = vpop.xlane.xlu0 %1609
    %v1611 = vsel %vm929, %v1607, 0.0
    %1612 = vadd.xlane.f32.xlu0 %v1611
    %v1613 = vpop.xlane.xlu0 %1612
    %v1614 = vrcp.pop %v1610
    %v1615 = vrcp.pop %v1613
    %v1616 = vmul.f32 %v1605, %v1614
    %v1617 = vmul.f32 %v1607, %v1615
    %1618 = vrot.lane.b32.xlu0 %v698, 48
    %v1619 = vpop.permute.xlu0 %1618
    %v1621 = vsel %vm954, %v1616, 0
    %v1623 = vsel %vm958, %v1619, 0
    %1625 = vmatprep.subr.mxu0 0.0
    %1626 = vmatpush1.msra.mxu0 %v1623
    %1627 = vmatprep.subr.mxu0 0.0
    %1628 = vmatpush1.msra.mxu0 0.0
    %1629 = vmatprep.subr.mxu0 0.0
    %1630 = vmatpush1.msra.mxu0 0.0
    %1631 = vmatprep.subr.mxu0 0.0
    %1632 = vmatpush1.msra.mxu0 0.0
    %1633 = vmatprep.subr.mxu0 0.0
    %1634 = vmatpush1.msra.mxu0 0.0
    %1635 = vmatprep.subr.mxu0 0.0
    %1636 = vmatpush1.msra.mxu0 0.0
    %1637 = vmatprep.subr.mxu0 0.0
    %1638 = vmatpush1.msra.mxu0 0.0
    %1639 = vmatprep.subr.mxu0 0.0
    %1640 = vmatpush1.msra.mxu0 0.0
    %1641 = vmatprep.subr.mxu0 0.0
    %1642 = vmatpush1.msra.mxu0 0.0
    %1643 = vmatprep.subr.mxu0 0.0
    %1644 = vmatpush1.msra.mxu0 0.0
    %1645 = vmatprep.subr.mxu0 0.0
    %1646 = vmatpush1.msra.mxu0 0.0
    %1647 = vmatprep.subr.mxu0 0.0
    %1648 = vmatpush1.msra.mxu0 0.0
    %1649 = vmatprep.subr.mxu0 0.0
    %1650 = vmatpush1.msra.mxu0 0.0
    %1651 = vmatprep.subr.mxu0 0.0
    %1652 = vmatpush1.msra.mxu0 0.0
    %1653 = vmatprep.subr.mxu0 0.0
    %1654 = vmatpush1.msra.mxu0 0.0
    %1655 = vmatprep.subr.mxu0 0.0
    %1656 = vmatpush1.msra.mxu0 0.0
    %1657 = vmatprep.subr.mxu0 0.0
    %1658 = vmatpush1.msra.mxu0 0.0
    %1659 = vmatprep.subr.mxu0 0.0
    %1660 = vmatpush1.msra.mxu0 0.0
    %1661 = vmatprep.subr.mxu0 0.0
    %1662 = vmatpush1.msra.mxu0 0.0
    %1663 = vmatprep.subr.mxu0 0.0
    %1664 = vmatpush1.msra.mxu0 0.0
    %1665 = vmatprep.subr.mxu0 0.0
    %1666 = vmatpush1.msra.mxu0 0.0
    %1667 = vmatprep.subr.mxu0 0.0
    %1668 = vmatpush1.msra.mxu0 0.0
    %1669 = vmatprep.subr.mxu0 0.0
    %1670 = vmatpush1.msra.mxu0 0.0
    %1671 = vmatprep.subr.mxu0 0.0
    %1672 = vmatpush1.msra.mxu0 0.0
    %1673 = vmatprep.subr.mxu0 0.0
    %1674 = vmatpush1.msra.mxu0 0.0
    %1675 = vmatprep.subr.mxu0 0.0
    %1676 = vmatpush1.msra.mxu0 0.0
    %1677 = vmatprep.subr.mxu0 0.0
    %1678 = vmatpush1.msra.mxu0 0.0
    %1679 = vmatprep.subr.mxu0 0.0
    %1680 = vmatpush1.msra.mxu0 0.0
    %1681 = vmatprep.subr.mxu0 0.0
    %1682 = vmatpush1.msra.mxu0 0.0
    %1683 = vmatprep.subr.mxu0 0.0
    %1684 = vmatpush1.msra.mxu0 0.0
    %1685 = vmatprep.subr.mxu0 0.0
    %1686 = vmatpush1.msra.mxu0 0.0
    %1687 = vmatprep.subr.mxu0 0.0
    %1688 = vmatpush1.msra.mxu0 0.0
    %1689 = vmatprep.mubr.f32.mxu0 0.0
    %1690 = vmatmul.mubr.f32.gmra.mrb[0].mxu0 %v1621
    %v1691 = vpop.f32.mrb[0].mxu0
    %v1692 = vadd.f32 0.0, %v1691
    %v1693 = vpop.f32.mrb[0].mxu0
    %1694 = vdwg.mxu0
    %1695 = vrot.lane.b32.xlu0 %v771, 48
    %v1696 = vpop.permute.xlu0 %1695
    %v1698 = vsel %vm954, %v1617, 0
    %v1700 = vsel %vm958, %v1696, 0
    %1702 = vmatprep.subr.mxu0 0.0
    %1703 = vmatpush1.msra.mxu0 %v1700
    %1704 = vmatprep.subr.mxu0 0.0
    %1705 = vmatpush1.msra.mxu0 0.0
    %1706 = vmatprep.subr.mxu0 0.0
    %1707 = vmatpush1.msra.mxu0 0.0
    %1708 = vmatprep.subr.mxu0 0.0
    %1709 = vmatpush1.msra.mxu0 0.0
    %1710 = vmatprep.subr.mxu0 0.0
    %1711 = vmatpush1.msra.mxu0 0.0
    %1712 = vmatprep.subr.mxu0 0.0
    %1713 = vmatpush1.msra.mxu0 0.0
    %1714 = vmatprep.subr.mxu0 0.0
    %1715 = vmatpush1.msra.mxu0 0.0
    %1716 = vmatprep.subr.mxu0 0.0
    %1717 = vmatpush1.msra.mxu0 0.0
    %1718 = vmatprep.subr.mxu0 0.0
    %1719 = vmatpush1.msra.mxu0 0.0
    %1720 = vmatprep.subr.mxu0 0.0
    %1721 = vmatpush1.msra.mxu0 0.0
    %1722 = vmatprep.subr.mxu0 0.0
    %1723 = vmatpush1.msra.mxu0 0.0
    %1724 = vmatprep.subr.mxu0 0.0
    %1725 = vmatpush1.msra.mxu0 0.0
    %1726 = vmatprep.subr.mxu0 0.0
    %1727 = vmatpush1.msra.mxu0 0.0
    %1728 = vmatprep.subr.mxu0 0.0
    %1729 = vmatpush1.msra.mxu0 0.0
    %1730 = vmatprep.subr.mxu0 0.0
    %1731 = vmatpush1.msra.mxu0 0.0
    %1732 = vmatprep.subr.mxu0 0.0
    %1733 = vmatpush1.msra.mxu0 0.0
    %1734 = vmatprep.subr.mxu0 0.0
    %1735 = vmatpush1.msra.mxu0 0.0
    %1736 = vmatprep.subr.mxu0 0.0
    %1737 = vmatpush1.msra.mxu0 0.0
    %1738 = vmatprep.subr.mxu0 0.0
    %1739 = vmatpush1.msra.mxu0 0.0
    %1740 = vmatprep.subr.mxu0 0.0
    %1741 = vmatpush1.msra.mxu0 0.0
    %1742 = vmatprep.subr.mxu0 0.0
    %1743 = vmatpush1.msra.mxu0 0.0
    %1744 = vmatprep.subr.mxu0 0.0
    %1745 = vmatpush1.msra.mxu0 0.0
    %1746 = vmatprep.subr.mxu0 0.0
    %1747 = vmatpush1.msra.mxu0 0.0
    %1748 = vmatprep.subr.mxu0 0.0
    %1749 = vmatpush1.msra.mxu0 0.0
    %1750 = vmatprep.subr.mxu0 0.0
    %1751 = vmatpush1.msra.mxu0 0.0
    %1752 = vmatprep.subr.mxu0 0.0
    %1753 = vmatpush1.msra.mxu0 0.0
    %1754 = vmatprep.subr.mxu0 0.0
    %1755 = vmatpush1.msra.mxu0 0.0
    %1756 = vmatprep.subr.mxu0 0.0
    %1757 = vmatpush1.msra.mxu0 0.0
    %1758 = vmatprep.subr.mxu0 0.0
    %1759 = vmatpush1.msra.mxu0 0.0
    %1760 = vmatprep.subr.mxu0 0.0
    %1761 = vmatpush1.msra.mxu0 0.0
    %1762 = vmatprep.subr.mxu0 0.0
    %1763 = vmatpush1.msra.mxu0 0.0
    %1764 = vmatprep.subr.mxu0 0.0
    %1765 = vmatpush1.msra.mxu0 0.0
    %1766 = vmatprep.mubr.f32.mxu0 0.0
    %1767 = vmatmul.mubr.f32.gmra.mrb[0].mxu0 %v1698
    %v1768 = vpop.f32.mrb[0].mxu0
    %v1769 = vadd.f32 0.0, %v1768
    %v1770 = vpop.f32.mrb[0].mxu0
    %1771 = vdwg.mxu0
    %1772 = vrot.lane.b32.xlu0 %v698, 104
    %v1773 = vpop.permute.xlu0 %1772
    %1774 = vrot.lane.b32.xlu0 %v698, 72
    %v1775 = vpop.permute.xlu0 %1774
    %v1776 = vsel %vm777, %v1773, 0
    %v1778 = vsel %vm777, %v1775, 0
    %1780 = vmatprep.subr.mxu0 0.0
    %1781 = vmatpush1.xpose.msra.mxu0 %v1778
    %1782 = vmatprep.subr.mxu0 0.0
    %1783 = vmatpush1.xpose.msra.mxu0 0.0
    %1784 = vmatprep.subr.mxu0 0.0
    %1785 = vmatpush1.xpose.msra.mxu0 0.0
    %1786 = vmatprep.subr.mxu0 0.0
    %1787 = vmatpush1.xpose.msra.mxu0 0.0
    %1788 = vmatprep.subr.mxu0 0.0
    %1789 = vmatpush1.xpose.msra.mxu0 0.0
    %1790 = vmatprep.subr.mxu0 0.0
    %1791 = vmatpush1.xpose.msra.mxu0 0.0
    %1792 = vmatprep.subr.mxu0 0.0
    %1793 = vmatpush1.xpose.msra.mxu0 0.0
    %1794 = vmatprep.subr.mxu0 0.0
    %1795 = vmatpush1.xpose.msra.mxu0 0.0
    %1796 = vmatprep.subr.mxu0 0.0
    %1797 = vmatpush1.xpose.msra.mxu0 0.0
    %1798 = vmatprep.subr.mxu0 0.0
    %1799 = vmatpush1.xpose.msra.mxu0 0.0
    %1800 = vmatprep.subr.mxu0 0.0
    %1801 = vmatpush1.xpose.msra.mxu0 0.0
    %1802 = vmatprep.subr.mxu0 0.0
    %1803 = vmatpush1.xpose.msra.mxu0 0.0
    %1804 = vmatprep.subr.mxu0 0.0
    %1805 = vmatpush1.xpose.msra.mxu0 0.0
    %1806 = vmatprep.subr.mxu0 0.0
    %1807 = vmatpush1.xpose.msra.mxu0 0.0
    %1808 = vmatprep.subr.mxu0 0.0
    %1809 = vmatpush1.xpose.msra.mxu0 0.0
    %1810 = vmatprep.subr.mxu0 0.0
    %1811 = vmatpush1.xpose.msra.mxu0 0.0
    %1812 = vmatprep.subr.mxu0 0.0
    %1813 = vmatpush1.xpose.msra.mxu0 0.0
    %1814 = vmatprep.subr.mxu0 0.0
    %1815 = vmatpush1.xpose.msra.mxu0 0.0
    %1816 = vmatprep.subr.mxu0 0.0
    %1817 = vmatpush1.xpose.msra.mxu0 0.0
    %1818 = vmatprep.subr.mxu0 0.0
    %1819 = vmatpush1.xpose.msra.mxu0 0.0
    %1820 = vmatprep.subr.mxu0 0.0
    %1821 = vmatpush1.xpose.msra.mxu0 0.0
    %1822 = vmatprep.subr.mxu0 0.0
    %1823 = vmatpush1.xpose.msra.mxu0 0.0
    %1824 = vmatprep.subr.mxu0 0.0
    %1825 = vmatpush1.xpose.msra.mxu0 0.0
    %1826 = vmatprep.subr.mxu0 0.0
    %1827 = vmatpush1.xpose.msra.mxu0 0.0
    %1828 = vmatprep.subr.mxu0 0.0
    %1829 = vmatpush1.xpose.msra.mxu0 0.0
    %1830 = vmatprep.subr.mxu0 0.0
    %1831 = vmatpush1.xpose.msra.mxu0 0.0
    %1832 = vmatprep.subr.mxu0 0.0
    %1833 = vmatpush1.xpose.msra.mxu0 0.0
    %1834 = vmatprep.subr.mxu0 0.0
    %1835 = vmatpush1.xpose.msra.mxu0 0.0
    %1836 = vmatprep.subr.mxu0 0.0
    %1837 = vmatpush1.xpose.msra.mxu0 0.0
    %1838 = vmatprep.subr.mxu0 0.0
    %1839 = vmatpush1.xpose.msra.mxu0 0.0
    %1840 = vmatprep.subr.mxu0 0.0
    %1841 = vmatpush1.xpose.msra.mxu0 0.0
    %1842 = vmatprep.subr.mxu0 0.0
    %1843 = vmatpush1.xpose.msra.mxu0 0.0
    %1844 = vmatprep.mubr.f32.mxu0 0.0
    %1845 = vmatmul.mubr.f32.gmra.mrb[0].mxu0 %v1776
    %v1846 = vpop.f32.mrb[0].mxu0
    %v1847 = vadd.f32 0.0, %v1846
    %v1848 = vpop.f32.mrb[0].mxu0
    %1849 = vdwg.mxu0
    %1850 = vrot.lane.b32.xlu0 %v771, 104
    %v1851 = vpop.permute.xlu0 %1850
    %1852 = vrot.lane.b32.xlu0 %v771, 72
    %v1853 = vpop.permute.xlu0 %1852
    %v1854 = vsel %vm777, %v1851, 0
    %v1856 = vsel %vm777, %v1853, 0
    %1858 = vmatprep.subr.mxu0 0.0
    %1859 = vmatpush1.xpose.msra.mxu0 %v1856
    %1860 = vmatprep.subr.mxu0 0.0
    %1861 = vmatpush1.xpose.msra.mxu0 0.0
    %1862 = vmatprep.subr.mxu0 0.0
    %1863 = vmatpush1.xpose.msra.mxu0 0.0
    %1864 = vmatprep.subr.mxu0 0.0
    %1865 = vmatpush1.xpose.msra.mxu0 0.0
    %1866 = vmatprep.subr.mxu0 0.0
    %1867 = vmatpush1.xpose.msra.mxu0 0.0
    %1868 = vmatprep.subr.mxu0 0.0
    %1869 = vmatpush1.xpose.msra.mxu0 0.0
    %1870 = vmatprep.subr.mxu0 0.0
    %1871 = vmatpush1.xpose.msra.mxu0 0.0
    %1872 = vmatprep.subr.mxu0 0.0
    %1873 = vmatpush1.xpose.msra.mxu0 0.0
    %1874 = vmatprep.subr.mxu0 0.0
    %1875 = vmatpush1.xpose.msra.mxu0 0.0
    %1876 = vmatprep.subr.mxu0 0.0
    %1877 = vmatpush1.xpose.msra.mxu0 0.0
    %1878 = vmatprep.subr.mxu0 0.0
    %1879 = vmatpush1.xpose.msra.mxu0 0.0
    %1880 = vmatprep.subr.mxu0 0.0
    %1881 = vmatpush1.xpose.msra.mxu0 0.0
    %1882 = vmatprep.subr.mxu0 0.0
    %1883 = vmatpush1.xpose.msra.mxu0 0.0
    %1884 = vmatprep.subr.mxu0 0.0
    %1885 = vmatpush1.xpose.msra.mxu0 0.0
    %1886 = vmatprep.subr.mxu0 0.0
    %1887 = vmatpush1.xpose.msra.mxu0 0.0
    %1888 = vmatprep.subr.mxu0 0.0
    %1889 = vmatpush1.xpose.msra.mxu0 0.0
    %1890 = vmatprep.subr.mxu0 0.0
    %1891 = vmatpush1.xpose.msra.mxu0 0.0
    %1892 = vmatprep.subr.mxu0 0.0
    %1893 = vmatpush1.xpose.msra.mxu0 0.0
    %1894 = vmatprep.subr.mxu0 0.0
    %1895 = vmatpush1.xpose.msra.mxu0 0.0
    %1896 = vmatprep.subr.mxu0 0.0
    %1897 = vmatpush1.xpose.msra.mxu0 0.0
    %1898 = vmatprep.subr.mxu0 0.0
    %1899 = vmatpush1.xpose.msra.mxu0 0.0
    %1900 = vmatprep.subr.mxu0 0.0
    %1901 = vmatpush1.xpose.msra.mxu0 0.0
    %1902 = vmatprep.subr.mxu0 0.0
    %1903 = vmatpush1.xpose.msra.mxu0 0.0
    %1904 = vmatprep.subr.mxu0 0.0
    %1905 = vmatpush1.xpose.msra.mxu0 0.0
    %1906 = vmatprep.subr.mxu0 0.0
    %1907 = vmatpush1.xpose.msra.mxu0 0.0
    %1908 = vmatprep.subr.mxu0 0.0
    %1909 = vmatpush1.xpose.msra.mxu0 0.0
    %1910 = vmatprep.subr.mxu0 0.0
    %1911 = vmatpush1.xpose.msra.mxu0 0.0
    %1912 = vmatprep.subr.mxu0 0.0
    %1913 = vmatpush1.xpose.msra.mxu0 0.0
    %1914 = vmatprep.subr.mxu0 0.0
    %1915 = vmatpush1.xpose.msra.mxu0 0.0
    %1916 = vmatprep.subr.mxu0 0.0
    %1917 = vmatpush1.xpose.msra.mxu0 0.0
    %1918 = vmatprep.subr.mxu0 0.0
    %1919 = vmatpush1.xpose.msra.mxu0 0.0
    %1920 = vmatprep.subr.mxu0 0.0
    %1921 = vmatpush1.xpose.msra.mxu0 0.0
    %1922 = vmatprep.mubr.f32.mxu0 0.0
    %1923 = vmatmul.mubr.f32.gmra.mrb[0].mxu0 %v1854
    %v1924 = vpop.f32.mrb[0].mxu0
    %v1925 = vadd.f32 0.0, %v1924
    %v1926 = vpop.f32.mrb[0].mxu0
    %1927 = vdwg.mxu0
    %v1928 = vsel %vm929, %v1847, -inf
    %1929 = vmax.xlane.f32.xlu0 %v1928
    %v1930 = vpop.xlane.xlu0 %1929
    %v1931 = vsel %vm929, %v1925, -inf
    %1932 = vmax.xlane.f32.xlu0 %v1931
    %v1933 = vpop.xlane.xlu0 %1932
    %v1934 = vsub.f32 %v1847, %v1930
    %v1935 = vsub.f32 %v1925, %v1933
    %v1936 = vmul.f32 %v1934, 1.442695
    %v1937 = vpow.pop %v1936
    %v1938 = vmul.f32 %v1935, 1.442695
    %v1939 = vpow.pop %v1938
    %v1940 = vsel %vm929, %v1937, 0.0
    %1941 = vadd.xlane.f32.xlu0 %v1940
    %v1942 = vpop.xlane.xlu0 %1941
    %v1943 = vsel %vm929, %v1939, 0.0
    %1944 = vadd.xlane.f32.xlu0 %v1943
    %v1945 = vpop.xlane.xlu0 %1944
    %v1946 = vrcp.pop %v1942
    %v1947 = vrcp.pop %v1945
    %v1948 = vmul.f32 %v1937, %v1946
    %v1949 = vmul.f32 %v1939, %v1947
    %1950 = vrot.lane.b32.xlu0 %v698, 40
    %v1951 = vpop.permute.xlu0 %1950
    %v1953 = vsel %vm954, %v1948, 0
    %v1955 = vsel %vm958, %v1951, 0
    %1957 = vmatprep.subr.mxu0 0.0
    %1958 = vmatpush1.msra.mxu0 %v1955
    %1959 = vmatprep.subr.mxu0 0.0
    %1960 = vmatpush1.msra.mxu0 0.0
    %1961 = vmatprep.subr.mxu0 0.0
    %1962 = vmatpush1.msra.mxu0 0.0
    %1963 = vmatprep.subr.mxu0 0.0
    %1964 = vmatpush1.msra.mxu0 0.0
    %1965 = vmatprep.subr.mxu0 0.0
    %1966 = vmatpush1.msra.mxu0 0.0
    %1967 = vmatprep.subr.mxu0 0.0
    %1968 = vmatpush1.msra.mxu0 0.0
    %1969 = vmatprep.subr.mxu0 0.0
    %1970 = vmatpush1.msra.mxu0 0.0
    %1971 = vmatprep.subr.mxu0 0.0
    %1972 = vmatpush1.msra.mxu0 0.0
    %1973 = vmatprep.subr.mxu0 0.0
    %1974 = vmatpush1.msra.mxu0 0.0
    %1975 = vmatprep.subr.mxu0 0.0
    %1976 = vmatpush1.msra.mxu0 0.0
    %1977 = vmatprep.subr.mxu0 0.0
    %1978 = vmatpush1.msra.mxu0 0.0
    %1979 = vmatprep.subr.mxu0 0.0
    %1980 = vmatpush1.msra.mxu0 0.0
    %1981 = vmatprep.subr.mxu0 0.0
    %1982 = vmatpush1.msra.mxu0 0.0
    %1983 = vmatprep.subr.mxu0 0.0
    %1984 = vmatpush1.msra.mxu0 0.0
    %1985 = vmatprep.subr.mxu0 0.0
    %1986 = vmatpush1.msra.mxu0 0.0
    %1987 = vmatprep.subr.mxu0 0.0
    %1988 = vmatpush1.msra.mxu0 0.0
    %1989 = vmatprep.subr.mxu0 0.0
    %1990 = vmatpush1.msra.mxu0 0.0
    %1991 = vmatprep.subr.mxu0 0.0
    %1992 = vmatpush1.msra.mxu0 0.0
    %1993 = vmatprep.subr.mxu0 0.0
    %1994 = vmatpush1.msra.mxu0 0.0
    %1995 = vmatprep.subr.mxu0 0.0
    %1996 = vmatpush1.msra.mxu0 0.0
    %1997 = vmatprep.subr.mxu0 0.0
    %1998 = vmatpush1.msra.mxu0 0.0
    %1999 = vmatprep.subr.mxu0 0.0
    %2000 = vmatpush1.msra.mxu0 0.0
    %2001 = vmatprep.subr.mxu0 0.0
    %2002 = vmatpush1.msra.mxu0 0.0
    %2003 = vmatprep.subr.mxu0 0.0
    %2004 = vmatpush1.msra.mxu0 0.0
    %2005 = vmatprep.subr.mxu0 0.0
    %2006 = vmatpush1.msra.mxu0 0.0
    %2007 = vmatprep.subr.mxu0 0.0
    %2008 = vmatpush1.msra.mxu0 0.0
    %2009 = vmatprep.subr.mxu0 0.0
    %2010 = vmatpush1.msra.mxu0 0.0
    %2011 = vmatprep.subr.mxu0 0.0
    %2012 = vmatpush1.msra.mxu0 0.0
    %2013 = vmatprep.subr.mxu0 0.0
    %2014 = vmatpush1.msra.mxu0 0.0
    %2015 = vmatprep.subr.mxu0 0.0
    %2016 = vmatpush1.msra.mxu0 0.0
    %2017 = vmatprep.subr.mxu0 0.0
    %2018 = vmatpush1.msra.mxu0 0.0
    %2019 = vmatprep.subr.mxu0 0.0
    %2020 = vmatpush1.msra.mxu0 0.0
    %2021 = vmatprep.mubr.f32.mxu0 0.0
    %2022 = vmatmul.mubr.f32.gmra.mrb[0].mxu0 %v1953
    %v2023 = vpop.f32.mrb[0].mxu0
    %v2024 = vadd.f32 0.0, %v2023
    %v2025 = vpop.f32.mrb[0].mxu0
    %2026 = vdwg.mxu0
    %2027 = vrot.lane.b32.xlu0 %v771, 40
    %v2028 = vpop.permute.xlu0 %2027
    %v2030 = vsel %vm954, %v1949, 0
    %v2032 = vsel %vm958, %v2028, 0
    %2034 = vmatprep.subr.mxu0 0.0
    %2035 = vmatpush1.msra.mxu0 %v2032
    %2036 = vmatprep.subr.mxu0 0.0
    %2037 = vmatpush1.msra.mxu0 0.0
    %2038 = vmatprep.subr.mxu0 0.0
    %2039 = vmatpush1.msra.mxu0 0.0
    %2040 = vmatprep.subr.mxu0 0.0
    %2041 = vmatpush1.msra.mxu0 0.0
    %2042 = vmatprep.subr.mxu0 0.0
    %2043 = vmatpush1.msra.mxu0 0.0
    %2044 = vmatprep.subr.mxu0 0.0
    %2045 = vmatpush1.msra.mxu0 0.0
    %2046 = vmatprep.subr.mxu0 0.0
    %2047 = vmatpush1.msra.mxu0 0.0
    %2048 = vmatprep.subr.mxu0 0.0
    %2049 = vmatpush1.msra.mxu0 0.0
    %2050 = vmatprep.subr.mxu0 0.0
    %2051 = vmatpush1.msra.mxu0 0.0
    %2052 = vmatprep.subr.mxu0 0.0
    %2053 = vmatpush1.msra.mxu0 0.0
    %2054 = vmatprep.subr.mxu0 0.0
    %2055 = vmatpush1.msra.mxu0 0.0
    %2056 = vmatprep.subr.mxu0 0.0
    %2057 = vmatpush1.msra.mxu0 0.0
    %2058 = vmatprep.subr.mxu0 0.0
    %2059 = vmatpush1.msra.mxu0 0.0
    %2060 = vmatprep.subr.mxu0 0.0
    %2061 = vmatpush1.msra.mxu0 0.0
    %2062 = vmatprep.subr.mxu0 0.0
    %2063 = vmatpush1.msra.mxu0 0.0
    %2064 = vmatprep.subr.mxu0 0.0
    %2065 = vmatpush1.msra.mxu0 0.0
    %2066 = vmatprep.subr.mxu0 0.0
    %2067 = vmatpush1.msra.mxu0 0.0
    %2068 = vmatprep.subr.mxu0 0.0
    %2069 = vmatpush1.msra.mxu0 0.0
    %2070 = vmatprep.subr.mxu0 0.0
    %2071 = vmatpush1.msra.mxu0 0.0
    %2072 = vmatprep.subr.mxu0 0.0
    %2073 = vmatpush1.msra.mxu0 0.0
    %2074 = vmatprep.subr.mxu0 0.0
    %2075 = vmatpush1.msra.mxu0 0.0
    %2076 = vmatprep.subr.mxu0 0.0
    %2077 = vmatpush1.msra.mxu0 0.0
    %2078 = vmatprep.subr.mxu0 0.0
    %2079 = vmatpush1.msra.mxu0 0.0
    %2080 = vmatprep.subr.mxu0 0.0
    %2081 = vmatpush1.msra.mxu0 0.0
    %2082 = vmatprep.subr.mxu0 0.0
    %2083 = vmatpush1.msra.mxu0 0.0
    %2084 = vmatprep.subr.mxu0 0.0
    %2085 = vmatpush1.msra.mxu0 0.0
    %2086 = vmatprep.subr.mxu0 0.0
    %2087 = vmatpush1.msra.mxu0 0.0
    %2088 = vmatprep.subr.mxu0 0.0
    %2089 = vmatpush1.msra.mxu0 0.0
    %2090 = vmatprep.subr.mxu0 0.0
    %2091 = vmatpush1.msra.mxu0 0.0
    %2092 = vmatprep.subr.mxu0 0.0
    %2093 = vmatpush1.msra.mxu0 0.0
    %2094 = vmatprep.subr.mxu0 0.0
    %2095 = vmatpush1.msra.mxu0 0.0
    %2096 = vmatprep.subr.mxu0 0.0
    %2097 = vmatpush1.msra.mxu0 0.0
    %2098 = vmatprep.mubr.f32.mxu0 0.0
    %2099 = vmatmul.mubr.f32.gmra.mrb[0].mxu0 %v2030
    %v2100 = vpop.f32.mrb[0].mxu0
    %v2101 = vadd.f32 0.0, %v2100
    %v2102 = vpop.f32.mrb[0].mxu0
    %2103 = vdwg.mxu0
    %2106 = vrot.lane.b32.xlu0 %v1360, 8
    %v2107 = vpop.permute.xlu0 %2106
    %2108 = vrot.lane.b32.xlu0 %v1437, 8
    %v2109 = vpop.permute.xlu0 %2108
    %2114 = vrot.lane.b32.xlu0 %v1692, 16
    %v2115 = vpop.permute.xlu0 %2114
    %2116 = vrot.lane.b32.xlu0 %v1769, 16
    %v2117 = vpop.permute.xlu0 %2116
    %2122 = vrot.lane.b32.xlu0 %v2024, 24
    %v2123 = vpop.permute.xlu0 %2122
    %2124 = vrot.lane.b32.xlu0 %v2101, 24
    %v2125 = vpop.permute.xlu0 %2124
    %v2128 = vsel %vm777, %v1028, %v2107
    %v2129 = vsel %vm777, %v1105, %v2109
    %vm2130 = vcmask 130048
    %v2131 = vsel %vm2130, %v2128, %v2115
    %v2132 = vsel %vm2130, %v2129, %v2117
    %vm2133 = vcmask 195584
    %v2134 = vsel %vm2133, %v2131, %v2123
    %v2135 = vsel %vm2133, %v2132, %v2125
    %v2136 = vld [vmem:[%s5] sm:$0xff]
    %v2137 = vld [vmem:[%s5 + $0x8] sm:$0xff]
    %v2138 = vld [vmem:[%s5 + $0x10] sm:$0xff]
    %v2139 = vld [vmem:[%s5 + $0x18] sm:$0xff]
    %v2141 = vsel %vm627, %v2134, 0
    %2143 = vmatprep.subr.mxu0 0.0
    %2144 = vmatpush1.msra.mxu0 %v2136
    %2145 = vmatprep.subr.mxu0 0.0
    %2146 = vmatpush1.msra.mxu0 %v2137
    %2147 = vmatprep.subr.mxu0 0.0
    %2148 = vmatpush1.msra.mxu0 %v2138
    %2149 = vmatprep.subr.mxu0 0.0
    %2150 = vmatpush1.msra.mxu0 %v2139
    %2151 = vmatprep.subr.mxu0 0.0
    %2152 = vmatpush1.msra.mxu0 0.0
    %2153 = vmatprep.subr.mxu0 0.0
    %2154 = vmatpush1.msra.mxu0 0.0
    %2155 = vmatprep.subr.mxu0 0.0
    %2156 = vmatpush1.msra.mxu0 0.0
    %2157 = vmatprep.subr.mxu0 0.0
    %2158 = vmatpush1.msra.mxu0 0.0
    %2159 = vmatprep.subr.mxu0 0.0
    %2160 = vmatpush1.msra.mxu0 0.0
    %2161 = vmatprep.subr.mxu0 0.0
    %2162 = vmatpush1.msra.mxu0 0.0
    %2163 = vmatprep.subr.mxu0 0.0
    %2164 = vmatpush1.msra.mxu0 0.0
    %2165 = vmatprep.subr.mxu0 0.0
    %2166 = vmatpush1.msra.mxu0 0.0
    %2167 = vmatprep.subr.mxu0 0.0
    %2168 = vmatpush1.msra.mxu0 0.0
    %2169 = vmatprep.subr.mxu0 0.0
    %2170 = vmatpush1.msra.mxu0 0.0
    %2171 = vmatprep.subr.mxu0 0.0
    %2172 = vmatpush1.msra.mxu0 0.0
    %2173 = vmatprep.subr.mxu0 0.0
    %2174 = vmatpush1.msra.mxu0 0.0
    %2175 = vmatprep.subr.mxu0 0.0
    %2176 = vmatpush1.msra.mxu0 0.0
    %2177 = vmatprep.subr.mxu0 0.0
    %2178 = vmatpush1.msra.mxu0 0.0
    %2179 = vmatprep.subr.mxu0 0.0
    %2180 = vmatpush1.msra.mxu0 0.0
    %2181 = vmatprep.subr.mxu0 0.0
    %2182 = vmatpush1.msra.mxu0 0.0
    %2183 = vmatprep.subr.mxu0 0.0
    %2184 = vmatpush1.msra.mxu0 0.0
    %2185 = vmatprep.subr.mxu0 0.0
    %2186 = vmatpush1.msra.mxu0 0.0
    %2187 = vmatprep.subr.mxu0 0.0
    %2188 = vmatpush1.msra.mxu0 0.0
    %2189 = vmatprep.subr.mxu0 0.0
    %2190 = vmatpush1.msra.mxu0 0.0
    %2191 = vmatprep.subr.mxu0 0.0
    %2192 = vmatpush1.msra.mxu0 0.0
    %2193 = vmatprep.subr.mxu0 0.0
    %2194 = vmatpush1.msra.mxu0 0.0
    %2195 = vmatprep.subr.mxu0 0.0
    %2196 = vmatpush1.msra.mxu0 0.0
    %2197 = vmatprep.subr.mxu0 0.0
    %2198 = vmatpush1.msra.mxu0 0.0
    %2199 = vmatprep.subr.mxu0 0.0
    %2200 = vmatpush1.msra.mxu0 0.0
    %2201 = vmatprep.subr.mxu0 0.0
    %2202 = vmatpush1.msra.mxu0 0.0
    %2203 = vmatprep.subr.mxu0 0.0
    %2204 = vmatpush1.msra.mxu0 0.0
    %2205 = vmatprep.subr.mxu0 0.0
    %2206 = vmatpush1.msra.mxu0 0.0
    %2207 = vmatprep.mubr.f32.mxu0 0.0
    %2208 = vmatmul.mubr.f32.gmra.mrb[0].mxu0 %v2141
    %v2209 = vpop.f32.mrb[0].mxu0
    %v2210 = vadd.f32 0.0, %v2209
    %v2211 = vpop.f32.mrb[0].mxu0
    %2212 = vdwg.mxu0
    %v2214 = vsel %vm627, %v2135, 0
    %2216 = vmatprep.subr.mxu0 0.0
    %2217 = vmatpush1.msra.mxu0 %v2136
    %2218 = vmatprep.subr.mxu0 0.0
    %2219 = vmatpush1.msra.mxu0 %v2137
    %2220 = vmatprep.subr.mxu0 0.0
    %2221 = vmatpush1.msra.mxu0 %v2138
    %2222 = vmatprep.subr.mxu0 0.0
    %2223 = vmatpush1.msra.mxu0 %v2139
    %2224 = vmatprep.subr.mxu0 0.0
    %2225 = vmatpush1.msra.mxu0 0.0
    %2226 = vmatprep.subr.mxu0 0.0
    %2227 = vmatpush1.msra.mxu0 0.0
    %2228 = vmatprep.subr.mxu0 0.0
    %2229 = vmatpush1.msra.mxu0 0.0
    %2230 = vmatprep.subr.mxu0 0.0
    %2231 = vmatpush1.msra.mxu0 0.0
    %2232 = vmatprep.subr.mxu0 0.0
    %2233 = vmatpush1.msra.mxu0 0.0
    %2234 = vmatprep.subr.mxu0 0.0
    %2235 = vmatpush1.msra.mxu0 0.0
    %2236 = vmatprep.subr.mxu0 0.0
    %2237 = vmatpush1.msra.mxu0 0.0
    %2238 = vmatprep.subr.mxu0 0.0
    %2239 = vmatpush1.msra.mxu0 0.0
    %2240 = vmatprep.subr.mxu0 0.0
    %2241 = vmatpush1.msra.mxu0 0.0
    %2242 = vmatprep.subr.mxu0 0.0
    %2243 = vmatpush1.msra.mxu0 0.0
    %2244 = vmatprep.subr.mxu0 0.0
    %2245 = vmatpush1.msra.mxu0 0.0
    %2246 = vmatprep.subr.mxu0 0.0
    %2247 = vmatpush1.msra.mxu0 0.0
    %2248 = vmatprep.subr.mxu0 0.0
    %2249 = vmatpush1.msra.mxu0 0.0
    %2250 = vmatprep.subr.mxu0 0.0
    %2251 = vmatpush1.msra.mxu0 0.0
    %2252 = vmatprep.subr.mxu0 0.0
    %2253 = vmatpush1.msra.mxu0 0.0
    %2254 = vmatprep.subr.mxu0 0.0
    %2255 = vmatpush1.msra.mxu0 0.0
    %2256 = vmatprep.subr.mxu0 0.0
    %2257 = vmatpush1.msra.mxu0 0.0
    %2258 = vmatprep.subr.mxu0 0.0
    %2259 = vmatpush1.msra.mxu0 0.0
    %2260 = vmatprep.subr.mxu0 0.0
    %2261 = vmatpush1.msra.mxu0 0.0
    %2262 = vmatprep.subr.mxu0 0.0
    %2263 = vmatpush1.msra.mxu0 0.0
    %2264 = vmatprep.subr.mxu0 0.0
    %2265 = vmatpush1.msra.mxu0 0.0
    %2266 = vmatprep.subr.mxu0 0.0
    %2267 = vmatpush1.msra.mxu0 0.0
    %2268 = vmatprep.subr.mxu0 0.0
    %2269 = vmatpush1.msra.mxu0 0.0
    %2270 = vmatprep.subr.mxu0 0.0
    %2271 = vmatpush1.msra.mxu0 0.0
    %2272 = vmatprep.subr.mxu0 0.0
    %2273 = vmatpush1.msra.mxu0 0.0
    %2274 = vmatprep.subr.mxu0 0.0
    %2275 = vmatpush1.msra.mxu0 0.0
    %2276 = vmatprep.subr.mxu0 0.0
    %2277 = vmatpush1.msra.mxu0 0.0
    %2278 = vmatprep.subr.mxu0 0.0
    %2279 = vmatpush1.msra.mxu0 0.0
    %2280 = vmatprep.mubr.f32.mxu0 0.0
    %2281 = vmatmul.mubr.f32.gmra.mrb[0].mxu0 %v2214
    %v2282 = vpop.f32.mrb[0].mxu0
    %v2283 = vadd.f32 0.0, %v2282
    %v2284 = vpop.f32.mrb[0].mxu0
    %2285 = vdwg.mxu0
    %v2286 = vadd.f32 %v586, %v2210
    %v2287 = vadd.f32 %v587, %v2283
    %v2288 = vld [vmem:[%s6] sm:$0x1]
    %v2290 = vlaneseq
    %v2291 = vshrl.u32 %v2290, 7
    %v2292 = vsub.s32 0, %v2291
    %v2293 = vrot.slane %v2288, %v2292
    %v2295 = vadd.f32 %v2286, %v2293
    %v2296 = vadd.f32 %v2287, %v2293
    %v2297 = vsel %vm588, %v2295, 0.0
    %2298 = vadd.xlane.f32.xlu0 %v2297
    %v2299 = vpop.xlane.xlu0 %2298
    %v2300 = vsel %vm588, %v2296, 0.0
    %2301 = vadd.xlane.f32.xlu0 %v2300
    %v2302 = vpop.xlane.xlu0 %2301
    %v2303 = vmul.f32 %v2299, %v595
    %v2304 = vmul.f32 %v2302, %v595
    %v2305 = vsub.f32 %v2295, %v2303
    %v2306 = vsub.f32 %v2296, %v2304
    %v2307 = vmul.f32 %v2305, %v2305
    %v2308 = vmul.f32 %v2306, %v2306
    %v2309 = vsel %vm588, %v2307, 0.0
    %2310 = vadd.xlane.f32.xlu0 %v2309
    %v2311 = vpop.xlane.xlu0 %2310
    %v2312 = vsel %vm588, %v2308, 0.0
    %2313 = vadd.xlane.f32.xlu0 %v2312
    %v2314 = vpop.xlane.xlu0 %2313
    %v2315 = vmul.f32 %v2311, %v595
    %v2316 = vmul.f32 %v2314, %v595
    %v2317 = vadd.f32 %v2315, 1e-06
    %v2318 = vadd.f32 %v2316, 1e-06
    %v2319 = vrsqrt.pop %v2317
    %v2320 = vrsqrt.pop %v2318
    %v2321 = vmul.f32 %v2305, %v2319
    %v2322 = vmul.f32 %v2306, %v2320
    %v2323 = vld [vmem:[%s7] sm:$0xff]
    %v2324 = vld [vmem:[%s7 + $0x8] sm:$0xff]
    %v2325 = vld [vmem:[%s7 + $0x10] sm:$0xff]
    %v2326 = vld [vmem:[%s7 + $0x18] sm:$0xff]
    %v2327 = vld [vmem:[%s8] sm:$0x1]
    %v2329 = vlaneseq
    %v2330 = vshrl.u32 %v2329, 7
    %v2331 = vsub.s32 0, %v2330
    %v2332 = vrot.slane %v2327, %v2331
    %v2335 = vsel %vm627, %v2321, 0
    %2337 = vmatprep.subr.mxu0 0.0
    %2338 = vmatpush1.msra.mxu0 %v2323
    %2339 = vmatprep.subr.mxu0 0.0
    %2340 = vmatpush1.msra.mxu0 %v2324
    %2341 = vmatprep.subr.mxu0 0.0
    %2342 = vmatpush1.msra.mxu0 %v2325
    %2343 = vmatprep.subr.mxu0 0.0
    %2344 = vmatpush1.msra.mxu0 %v2326
    %2345 = vmatprep.subr.mxu0 0.0
    %2346 = vmatpush1.msra.mxu0 0.0
    %2347 = vmatprep.subr.mxu0 0.0
    %2348 = vmatpush1.msra.mxu0 0.0
    %2349 = vmatprep.subr.mxu0 0.0
    %2350 = vmatpush1.msra.mxu0 0.0
    %2351 = vmatprep.subr.mxu0 0.0
    %2352 = vmatpush1.msra.mxu0 0.0
    %2353 = vmatprep.subr.mxu0 0.0
    %2354 = vmatpush1.msra.mxu0 0.0
    %2355 = vmatprep.subr.mxu0 0.0
    %2356 = vmatpush1.msra.mxu0 0.0
    %2357 = vmatprep.subr.mxu0 0.0
    %2358 = vmatpush1.msra.mxu0 0.0
    %2359 = vmatprep.subr.mxu0 0.0
    %2360 = vmatpush1.msra.mxu0 0.0
    %2361 = vmatprep.subr.mxu0 0.0
    %2362 = vmatpush1.msra.mxu0 0.0
    %2363 = vmatprep.subr.mxu0 0.0
    %2364 = vmatpush1.msra.mxu0 0.0
    %2365 = vmatprep.subr.mxu0 0.0
    %2366 = vmatpush1.msra.mxu0 0.0
    %2367 = vmatprep.subr.mxu0 0.0
    %2368 = vmatpush1.msra.mxu0 0.0
    %2369 = vmatprep.subr.mxu0 0.0
    %2370 = vmatpush1.msra.mxu0 0.0
    %2371 = vmatprep.subr.mxu0 0.0
    %2372 = vmatpush1.msra.mxu0 0.0
    %2373 = vmatprep.subr.mxu0 0.0
    %2374 = vmatpush1.msra.mxu0 0.0
    %2375 = vmatprep.subr.mxu0 0.0
    %2376 = vmatpush1.msra.mxu0 0.0
    %2377 = vmatprep.subr.mxu0 0.0
    %2378 = vmatpush1.msra.mxu0 0.0
    %2379 = vmatprep.subr.mxu0 0.0
    %2380 = vmatpush1.msra.mxu0 0.0
    %2381 = vmatprep.subr.mxu0 0.0
    %2382 = vmatpush1.msra.mxu0 0.0
    %2383 = vmatprep.subr.mxu0 0.0
    %2384 = vmatpush1.msra.mxu0 0.0
    %2385 = vmatprep.subr.mxu0 0.0
    %2386 = vmatpush1.msra.mxu0 0.0
    %2387 = vmatprep.subr.mxu0 0.0
    %2388 = vmatpush1.msra.mxu0 0.0
    %2389 = vmatprep.subr.mxu0 0.0
    %2390 = vmatpush1.msra.mxu0 0.0
    %2391 = vmatprep.subr.mxu0 0.0
    %2392 = vmatpush1.msra.mxu0 0.0
    %2393 = vmatprep.subr.mxu0 0.0
    %2394 = vmatpush1.msra.mxu0 0.0
    %2395 = vmatprep.subr.mxu0 0.0
    %2396 = vmatpush1.msra.mxu0 0.0
    %2397 = vmatprep.subr.mxu0 0.0
    %2398 = vmatpush1.msra.mxu0 0.0
    %2399 = vmatprep.subr.mxu0 0.0
    %2400 = vmatpush1.msra.mxu0 0.0
    %2401 = vmatprep.mubr.f32.mxu0 0.0
    %2402 = vmatmul.mubr.f32.gmra.mrb[0].mxu0 %v2335
    %v2403 = vpop.f32.mrb[0].mxu0
    %v2404 = vadd.f32 %v2332, %v2403
    %v2405 = vpop.f32.mrb[0].mxu0
    %2406 = vdwg.mxu0
    %v2408 = vsel %vm627, %v2322, 0
    %2410 = vmatprep.subr.mxu0 0.0
    %2411 = vmatpush1.msra.mxu0 %v2323
    %2412 = vmatprep.subr.mxu0 0.0
    %2413 = vmatpush1.msra.mxu0 %v2324
    %2414 = vmatprep.subr.mxu0 0.0
    %2415 = vmatpush1.msra.mxu0 %v2325
    %2416 = vmatprep.subr.mxu0 0.0
    %2417 = vmatpush1.msra.mxu0 %v2326
    %2418 = vmatprep.subr.mxu0 0.0
    %2419 = vmatpush1.msra.mxu0 0.0
    %2420 = vmatprep.subr.mxu0 0.0
    %2421 = vmatpush1.msra.mxu0 0.0
    %2422 = vmatprep.subr.mxu0 0.0
    %2423 = vmatpush1.msra.mxu0 0.0
    %2424 = vmatprep.subr.mxu0 0.0
    %2425 = vmatpush1.msra.mxu0 0.0
    %2426 = vmatprep.subr.mxu0 0.0
    %2427 = vmatpush1.msra.mxu0 0.0
    %2428 = vmatprep.subr.mxu0 0.0
    %2429 = vmatpush1.msra.mxu0 0.0
    %2430 = vmatprep.subr.mxu0 0.0
    %2431 = vmatpush1.msra.mxu0 0.0
    %2432 = vmatprep.subr.mxu0 0.0
    %2433 = vmatpush1.msra.mxu0 0.0
    %2434 = vmatprep.subr.mxu0 0.0
    %2435 = vmatpush1.msra.mxu0 0.0
    %2436 = vmatprep.subr.mxu0 0.0
    %2437 = vmatpush1.msra.mxu0 0.0
    %2438 = vmatprep.subr.mxu0 0.0
    %2439 = vmatpush1.msra.mxu0 0.0
    %2440 = vmatprep.subr.mxu0 0.0
    %2441 = vmatpush1.msra.mxu0 0.0
    %2442 = vmatprep.subr.mxu0 0.0
    %2443 = vmatpush1.msra.mxu0 0.0
    %2444 = vmatprep.subr.mxu0 0.0
    %2445 = vmatpush1.msra.mxu0 0.0
    %2446 = vmatprep.subr.mxu0 0.0
    %2447 = vmatpush1.msra.mxu0 0.0
    %2448 = vmatprep.subr.mxu0 0.0
    %2449 = vmatpush1.msra.mxu0 0.0
    %2450 = vmatprep.subr.mxu0 0.0
    %2451 = vmatpush1.msra.mxu0 0.0
    %2452 = vmatprep.subr.mxu0 0.0
    %2453 = vmatpush1.msra.mxu0 0.0
    %2454 = vmatprep.subr.mxu0 0.0
    %2455 = vmatpush1.msra.mxu0 0.0
    %2456 = vmatprep.subr.mxu0 0.0
    %2457 = vmatpush1.msra.mxu0 0.0
    %2458 = vmatprep.subr.mxu0 0.0
    %2459 = vmatpush1.msra.mxu0 0.0
    %2460 = vmatprep.subr.mxu0 0.0
    %2461 = vmatpush1.msra.mxu0 0.0
    %2462 = vmatprep.subr.mxu0 0.0
    %2463 = vmatpush1.msra.mxu0 0.0
    %2464 = vmatprep.subr.mxu0 0.0
    %2465 = vmatpush1.msra.mxu0 0.0
    %2466 = vmatprep.subr.mxu0 0.0
    %2467 = vmatpush1.msra.mxu0 0.0
    %2468 = vmatprep.subr.mxu0 0.0
    %2469 = vmatpush1.msra.mxu0 0.0
    %2470 = vmatprep.subr.mxu0 0.0
    %2471 = vmatpush1.msra.mxu0 0.0
    %2472 = vmatprep.subr.mxu0 0.0
    %2473 = vmatpush1.msra.mxu0 0.0
    %2474 = vmatprep.mubr.f32.mxu0 0.0
    %2475 = vmatmul.mubr.f32.gmra.mrb[0].mxu0 %v2408
    %v2476 = vpop.f32.mrb[0].mxu0
    %v2477 = vadd.f32 %v2332, %v2476
    %v2478 = vpop.f32.mrb[0].mxu0
    %2479 = vdwg.mxu0
    %v2480 = vmul.f32 %v2404, 0.5
    %v2481 = vmul.f32 %v2477, 0.5
    %v2482 = vmul.f32 %v2404, 0.044715
    %v2483 = vmul.f32 %v2477, 0.044715
    %v2484 = vmul.f32 %v2482, %v2404
    %v2485 = vmul.f32 %v2483, %v2477
    %v2486 = vmul.f32 %v2484, %v2404
    %v2487 = vmul.f32 %v2485, %v2477
    %v2488 = vadd.f32 %v2404, %v2486
    %v2489 = vadd.f32 %v2477, %v2487
    %v2490 = vmul.f32 %v2488, 0.7978846
    %v2491 = vmul.f32 %v2489, 0.7978846
    %v2492 = vtanh.pop %v2490
    %v2493 = vtanh.pop %v2491
    %v2494 = vadd.f32 %v2492, 1.0
    %v2495 = vadd.f32 %v2493, 1.0
    %v2496 = vmul.f32 %v2480, %v2494
    %v2497 = vmul.f32 %v2481, %v2495
    %v2498 = vld [vmem:[%s9] sm:$0xff]
    %v2499 = vld [vmem:[%s9 + $0x8] sm:$0xff]
    %v2500 = vld [vmem:[%s9 + $0x10] sm:$0xff]
    %v2501 = vld [vmem:[%s9 + $0x18] sm:$0xff]
    %v2502 = vld [vmem:[%s9 + $0x20] sm:$0xff]
    %v2503 = vld [vmem:[%s9 + $0x28] sm:$0xff]
    %v2504 = vld [vmem:[%s9 + $0x30] sm:$0xff]
    %v2505 = vld [vmem:[%s9 + $0x38] sm:$0xff]
    %v2506 = vld [vmem:[%s9 + $0x40] sm:$0xff]
    %v2507 = vld [vmem:[%s9 + $0x48] sm:$0xff]
    %v2508 = vld [vmem:[%s9 + $0x50] sm:$0xff]
    %v2509 = vld [vmem:[%s9 + $0x58] sm:$0xff]
    %v2510 = vld [vmem:[%s9 + $0x60] sm:$0xff]
    %v2511 = vld [vmem:[%s9 + $0x68] sm:$0xff]
    %v2512 = vld [vmem:[%s9 + $0x70] sm:$0xff]
    %v2513 = vld [vmem:[%s9 + $0x78] sm:$0xff]
    %2514 = vmatprep.subr.mxu0 0.0
    %2515 = vmatpush1.msra.mxu0 %v2498
    %2516 = vmatprep.subr.mxu0 0.0
    %2517 = vmatpush1.msra.mxu0 %v2499
    %2518 = vmatprep.subr.mxu0 0.0
    %2519 = vmatpush1.msra.mxu0 %v2500
    %2520 = vmatprep.subr.mxu0 0.0
    %2521 = vmatpush1.msra.mxu0 %v2501
    %2522 = vmatprep.subr.mxu0 0.0
    %2523 = vmatpush1.msra.mxu0 %v2502
    %2524 = vmatprep.subr.mxu0 0.0
    %2525 = vmatpush1.msra.mxu0 %v2503
    %2526 = vmatprep.subr.mxu0 0.0
    %2527 = vmatpush1.msra.mxu0 %v2504
    %2528 = vmatprep.subr.mxu0 0.0
    %2529 = vmatpush1.msra.mxu0 %v2505
    %2530 = vmatprep.subr.mxu0 0.0
    %2531 = vmatpush1.msra.mxu0 %v2506
    %2532 = vmatprep.subr.mxu0 0.0
    %2533 = vmatpush1.msra.mxu0 %v2507
    %2534 = vmatprep.subr.mxu0 0.0
    %2535 = vmatpush1.msra.mxu0 %v2508
    %2536 = vmatprep.subr.mxu0 0.0
    %2537 = vmatpush1.msra.mxu0 %v2509
    %2538 = vmatprep.subr.mxu0 0.0
    %2539 = vmatpush1.msra.mxu0 %v2510
    %2540 = vmatprep.subr.mxu0 0.0
    %2541 = vmatpush1.msra.mxu0 %v2511
    %2542 = vmatprep.subr.mxu0 0.0
    %2543 = vmatpush1.msra.mxu0 %v2512
    %2544 = vmatprep.subr.mxu0 0.0
    %2545 = vmatpush1.msra.mxu0 %v2513
    %2546 = vmatprep.subr.mxu0 0.0
    %2547 = vmatpush1.msra.mxu0 0.0
    %2548 = vmatprep.subr.mxu0 0.0
    %2549 = vmatpush1.msra.mxu0 0.0
    %2550 = vmatprep.subr.mxu0 0.0
    %2551 = vmatpush1.msra.mxu0 0.0
    %2552 = vmatprep.subr.mxu0 0.0
    %2553 = vmatpush1.msra.mxu0 0.0
    %2554 = vmatprep.subr.mxu0 0.0
    %2555 = vmatpush1.msra.mxu0 0.0
    %2556 = vmatprep.subr.mxu0 0.0
    %2557 = vmatpush1.msra.mxu0 0.0
    %2558 = vmatprep.subr.mxu0 0.0
    %2559 = vmatpush1.msra.mxu0 0.0
    %2560 = vmatprep.subr.mxu0 0.0
    %2561 = vmatpush1.msra.mxu0 0.0
    %2562 = vmatprep.subr.mxu0 0.0
    %2563 = vmatpush1.msra.mxu0 0.0
    %2564 = vmatprep.subr.mxu0 0.0
    %2565 = vmatpush1.msra.mxu0 0.0
    %2566 = vmatprep.subr.mxu0 0.0
    %2567 = vmatpush1.msra.mxu0 0.0
    %2568 = vmatprep.subr.mxu0 0.0
    %2569 = vmatpush1.msra.mxu0 0.0
    %2570 = vmatprep.subr.mxu0 0.0
    %2571 = vmatpush1.msra.mxu0 0.0
    %2572 = vmatprep.subr.mxu0 0.0
    %2573 = vmatpush1.msra.mxu0 0.0
    %2574 = vmatprep.subr.mxu0 0.0
    %2575 = vmatpush1.msra.mxu0 0.0
    %2576 = vmatprep.subr.mxu0 0.0
    %2577 = vmatpush1.msra.mxu0 0.0
    %2578 = vmatprep.mubr.f32.mxu0 0.0
    %2579 = vmatmul.mubr.f32.gmra.mrb[0].mxu0 %v2496
    %v2580 = vpop.f32.mrb[0].mxu0
    %v2581 = vadd.f32 0.0, %v2580
    %v2582 = vpop.f32.mrb[0].mxu0
    %2583 = vdwg.mxu0
    %2584 = vmatprep.subr.mxu0 0.0
    %2585 = vmatpush1.msra.mxu0 %v2498
    %2586 = vmatprep.subr.mxu0 0.0
    %2587 = vmatpush1.msra.mxu0 %v2499
    %2588 = vmatprep.subr.mxu0 0.0
    %2589 = vmatpush1.msra.mxu0 %v2500
    %2590 = vmatprep.subr.mxu0 0.0
    %2591 = vmatpush1.msra.mxu0 %v2501
    %2592 = vmatprep.subr.mxu0 0.0
    %2593 = vmatpush1.msra.mxu0 %v2502
    %2594 = vmatprep.subr.mxu0 0.0
    %2595 = vmatpush1.msra.mxu0 %v2503
    %2596 = vmatprep.subr.mxu0 0.0
    %2597 = vmatpush1.msra.mxu0 %v2504
    %2598 = vmatprep.subr.mxu0 0.0
    %2599 = vmatpush1.msra.mxu0 %v2505
    %2600 = vmatprep.subr.mxu0 0.0
    %2601 = vmatpush1.msra.mxu0 %v2506
    %2602 = vmatprep.subr.mxu0 0.0
    %2603 = vmatpush1.msra.mxu0 %v2507
    %2604 = vmatprep.subr.mxu0 0.0
    %2605 = vmatpush1.msra.mxu0 %v2508
    %2606 = vmatprep.subr.mxu0 0.0
    %2607 = vmatpush1.msra.mxu0 %v2509
    %2608 = vmatprep.subr.mxu0 0.0
    %2609 = vmatpush1.msra.mxu0 %v2510
    %2610 = vmatprep.subr.mxu0 0.0
    %2611 = vmatpush1.msra.mxu0 %v2511
    %2612 = vmatprep.subr.mxu0 0.0
    %2613 = vmatpush1.msra.mxu0 %v2512
    %2614 = vmatprep.subr.mxu0 0.0
    %2615 = vmatpush1.msra.mxu0 %v2513
    %2616 = vmatprep.subr.mxu0 0.0
    %2617 = vmatpush1.msra.mxu0 0.0
    %2618 = vmatprep.subr.mxu0 0.0
    %2619 = vmatpush1.msra.mxu0 0.0
    %2620 = vmatprep.subr.mxu0 0.0
    %2621 = vmatpush1.msra.mxu0 0.0
    %2622 = vmatprep.subr.mxu0 0.0
    %2623 = vmatpush1.msra.mxu0 0.0
    %2624 = vmatprep.subr.mxu0 0.0
    %2625 = vmatpush1.msra.mxu0 0.0
    %2626 = vmatprep.subr.mxu0 0.0
    %2627 = vmatpush1.msra.mxu0 0.0
    %2628 = vmatprep.subr.mxu0 0.0
    %2629 = vmatpush1.msra.mxu0 0.0
    %2630 = vmatprep.subr.mxu0 0.0
    %2631 = vmatpush1.msra.mxu0 0.0
    %2632 = vmatprep.subr.mxu0 0.0
    %2633 = vmatpush1.msra.mxu0 0.0
    %2634 = vmatprep.subr.mxu0 0.0
    %2635 = vmatpush1.msra.mxu0 0.0
    %2636 = vmatprep.subr.mxu0 0.0
    %2637 = vmatpush1.msra.mxu0 0.0
    %2638 = vmatprep.subr.mxu0 0.0
    %2639 = vmatpush1.msra.mxu0 0.0
    %2640 = vmatprep.subr.mxu0 0.0
    %2641 = vmatpush1.msra.mxu0 0.0
    %2642 = vmatprep.subr.mxu0 0.0
    %2643 = vmatpush1.msra.mxu0 0.0
    %2644 = vmatprep.subr.mxu0 0.0
    %2645 = vmatpush1.msra.mxu0 0.0
    %2646 = vmatprep.subr.mxu0 0.0
    %2647 = vmatpush1.msra.mxu0 0.0
    %2648 = vmatprep.mubr.f32.mxu0 0.0
    %2649 = vmatmul.mubr.f32.gmra.mrb[0].mxu0 %v2497
    %v2650 = vpop.f32.mrb[0].mxu0
    %v2651 = vadd.f32 0.0, %v2650
    %v2652 = vpop.f32.mrb[0].mxu0
    %2653 = vdwg.mxu0
    %v2654 = vadd.f32 %v2295, %v2581
    %v2655 = vadd.f32 %v2296, %v2651
    %v2656 = vld [vmem:[%s10] sm:$0x1]
    %v2658 = vlaneseq
    %v2659 = vshrl.u32 %v2658, 7
    %v2660 = vsub.s32 0, %v2659
    %v2661 = vrot.slane %v2656, %v2660
    %v2663 = vadd.f32 %v2654, %v2661
    %v2664 = vadd.f32 %v2655, %v2661
    %v2665 = vsel %vm588, %v2663, 0.0
    %2666 = vadd.xlane.f32.xlu0 %v2665
    %v2667 = vpop.xlane.xlu0 %2666
    %v2668 = vsel %vm588, %v2664, 0.0
    %2669 = vadd.xlane.f32.xlu0 %v2668
    %v2670 = vpop.xlane.xlu0 %2669
    %v2671 = vmul.f32 %v2667, %v595
    %v2672 = vmul.f32 %v2670, %v595
    %v2673 = vsub.f32 %v2663, %v2671
    %v2674 = vsub.f32 %v2664, %v2672
    %v2675 = vmul.f32 %v2673, %v2673
    %v2676 = vmul.f32 %v2674, %v2674
    %v2677 = vsel %vm588, %v2675, 0.0
    %2678 = vadd.xlane.f32.xlu0 %v2677
    %v2679 = vpop.xlane.xlu0 %2678
    %v2680 = vsel %vm588, %v2676, 0.0
    %2681 = vadd.xlane.f32.xlu0 %v2680
    %v2682 = vpop.xlane.xlu0 %2681
    %v2683 = vmul.f32 %v2679, %v595
    %v2684 = vmul.f32 %v2682, %v595
    %v2685 = vadd.f32 %v2683, 1e-06
    %v2686 = vadd.f32 %v2684, 1e-06
    %v2687 = vrsqrt.pop %v2685
    %v2688 = vrsqrt.pop %v2686
    %v2689 = vmul.f32 %v2673, %v2687
    %v2690 = vmul.f32 %v2674, %v2688
    %s2691 = scalar_lea.vmem %s3, 32
    %v2692 = vld [vmem:[%s2691] sm:$0xff]
    %v2693 = vld [vmem:[%s2691 + $0x8] sm:$0xff]
    %v2694 = vld [vmem:[%s2691 + $0x10] sm:$0xff]
    %v2695 = vld [vmem:[%s2691 + $0x18] sm:$0xff]
    %s2696 = scalar_lea.vmem %s4, 1
    %v2697 = vld [vmem:[%s2696] sm:$0x1]
    %v2699 = vlaneseq
    %v2700 = vshrl.u32 %v2699, 7
    %v2701 = vsub.s32 0, %v2700
    %v2702 = vrot.slane %v2697, %v2701
    %v2705 = vsel %vm627, %v2689, 0
    %2707 = vmatprep.subr.mxu0 0.0
    %2708 = vmatpush1.msra.mxu0 %v2692
    %2709 = vmatprep.subr.mxu0 0.0
    %2710 = vmatpush1.msra.mxu0 %v2693
    %2711 = vmatprep.subr.mxu0 0.0
    %2712 = vmatpush1.msra.mxu0 %v2694
    %2713 = vmatprep.subr.mxu0 0.0
    %2714 = vmatpush1.msra.mxu0 %v2695
    %2715 = vmatprep.subr.mxu0 0.0
    %2716 = vmatpush1.msra.mxu0 0.0
    %2717 = vmatprep.subr.mxu0 0.0
    %2718 = vmatpush1.msra.mxu0 0.0
    %2719 = vmatprep.subr.mxu0 0.0
    %2720 = vmatpush1.msra.mxu0 0.0
    %2721 = vmatprep.subr.mxu0 0.0
    %2722 = vmatpush1.msra.mxu0 0.0
    %2723 = vmatprep.subr.mxu0 0.0
    %2724 = vmatpush1.msra.mxu0 0.0
    %2725 = vmatprep.subr.mxu0 0.0
    %2726 = vmatpush1.msra.mxu0 0.0
    %2727 = vmatprep.subr.mxu0 0.0
    %2728 = vmatpush1.msra.mxu0 0.0
    %2729 = vmatprep.subr.mxu0 0.0
    %2730 = vmatpush1.msra.mxu0 0.0
    %2731 = vmatprep.subr.mxu0 0.0
    %2732 = vmatpush1.msra.mxu0 0.0
    %2733 = vmatprep.subr.mxu0 0.0
    %2734 = vmatpush1.msra.mxu0 0.0
    %2735 = vmatprep.subr.mxu0 0.0
    %2736 = vmatpush1.msra.mxu0 0.0
    %2737 = vmatprep.subr.mxu0 0.0
    %2738 = vmatpush1.msra.mxu0 0.0
    %2739 = vmatprep.subr.mxu0 0.0
    %2740 = vmatpush1.msra.mxu0 0.0
    %2741 = vmatprep.subr.mxu0 0.0
    %2742 = vmatpush1.msra.mxu0 0.0
    %2743 = vmatprep.subr.mxu0 0.0
    %2744 = vmatpush1.msra.mxu0 0.0
    %2745 = vmatprep.subr.mxu0 0.0
    %2746 = vmatpush1.msra.mxu0 0.0
    %2747 = vmatprep.subr.mxu0 0.0
    %2748 = vmatpush1.msra.mxu0 0.0
    %2749 = vmatprep.subr.mxu0 0.0
    %2750 = vmatpush1.msra.mxu0 0.0
    %2751 = vmatprep.subr.mxu0 0.0
    %2752 = vmatpush1.msra.mxu0 0.0
    %2753 = vmatprep.subr.mxu0 0.0
    %2754 = vmatpush1.msra.mxu0 0.0
    %2755 = vmatprep.subr.mxu0 0.0
    %2756 = vmatpush1.msra.mxu0 0.0
    %2757 = vmatprep.subr.mxu0 0.0
    %2758 = vmatpush1.msra.mxu0 0.0
    %2759 = vmatprep.subr.mxu0 0.0
    %2760 = vmatpush1.msra.mxu0 0.0
    %2761 = vmatprep.subr.mxu0 0.0
    %2762 = vmatpush1.msra.mxu0 0.0
    %2763 = vmatprep.subr.mxu0 0.0
    %2764 = vmatpush1.msra.mxu0 0.0
    %2765 = vmatprep.subr.mxu0 0.0
    %2766 = vmatpush1.msra.mxu0 0.0
    %2767 = vmatprep.subr.mxu0 0.0
    %2768 = vmatpush1.msra.mxu0 0.0
    %2769 = vmatprep.subr.mxu0 0.0
    %2770 = vmatpush1.msra.mxu0 0.0
    %2771 = vmatprep.mubr.f32.mxu0 0.0
    %2772 = vmatmul.mubr.f32.gmra.mrb[0].mxu0 %v2705
    %v2773 = vpop.f32.mrb[0].mxu0
    %v2774 = vadd.f32 %v2702, %v2773
    %v2775 = vpop.f32.mrb[0].mxu0
    %2776 = vdwg.mxu0
    %v2778 = vsel %vm627, %v2690, 0
    %2780 = vmatprep.subr.mxu0 0.0
    %2781 = vmatpush1.msra.mxu0 %v2692
    %2782 = vmatprep.subr.mxu0 0.0
    %2783 = vmatpush1.msra.mxu0 %v2693
    %2784 = vmatprep.subr.mxu0 0.0
    %2785 = vmatpush1.msra.mxu0 %v2694
    %2786 = vmatprep.subr.mxu0 0.0
    %2787 = vmatpush1.msra.mxu0 %v2695
    %2788 = vmatprep.subr.mxu0 0.0
    %2789 = vmatpush1.msra.mxu0 0.0
    %2790 = vmatprep.subr.mxu0 0.0
    %2791 = vmatpush1.msra.mxu0 0.0
    %2792 = vmatprep.subr.mxu0 0.0
    %2793 = vmatpush1.msra.mxu0 0.0
    %2794 = vmatprep.subr.mxu0 0.0
    %2795 = vmatpush1.msra.mxu0 0.0
    %2796 = vmatprep.subr.mxu0 0.0
    %2797 = vmatpush1.msra.mxu0 0.0
    %2798 = vmatprep.subr.mxu0 0.0
    %2799 = vmatpush1.msra.mxu0 0.0
    %2800 = vmatprep.subr.mxu0 0.0
    %2801 = vmatpush1.msra.mxu0 0.0
    %2802 = vmatprep.subr.mxu0 0.0
    %2803 = vmatpush1.msra.mxu0 0.0
    %2804 = vmatprep.subr.mxu0 0.0
    %2805 = vmatpush1.msra.mxu0 0.0
    %2806 = vmatprep.subr.mxu0 0.0
    %2807 = vmatpush1.msra.mxu0 0.0
    %2808 = vmatprep.subr.mxu0 0.0
    %2809 = vmatpush1.msra.mxu0 0.0
    %2810 = vmatprep.subr.mxu0 0.0
    %2811 = vmatpush1.msra.mxu0 0.0
    %2812 = vmatprep.subr.mxu0 0.0
    %2813 = vmatpush1.msra.mxu0 0.0
    %2814 = vmatprep.subr.mxu0 0.0
    %2815 = vmatpush1.msra.mxu0 0.0
    %2816 = vmatprep.subr.mxu0 0.0
    %2817 = vmatpush1.msra.mxu0 0.0
    %2818 = vmatprep.subr.mxu0 0.0
    %2819 = vmatpush1.msra.mxu0 0.0
    %2820 = vmatprep.subr.mxu0 0.0
    %2821 = vmatpush1.msra.mxu0 0.0
    %2822 = vmatprep.subr.mxu0 0.0
    %2823 = vmatpush1.msra.mxu0 0.0
    %2824 = vmatprep.subr.mxu0 0.0
    %2825 = vmatpush1.msra.mxu0 0.0
    %2826 = vmatprep.subr.mxu0 0.0
    %2827 = vmatpush1.msra.mxu0 0.0
    %2828 = vmatprep.subr.mxu0 0.0
    %2829 = vmatpush1.msra.mxu0 0.0
    %2830 = vmatprep.subr.mxu0 0.0
    %2831 = vmatpush1.msra.mxu0 0.0
    %2832 = vmatprep.subr.mxu0 0.0
    %2833 = vmatpush1.msra.mxu0 0.0
    %2834 = vmatprep.subr.mxu0 0.0
    %2835 = vmatpush1.msra.mxu0 0.0
    %2836 = vmatprep.subr.mxu0 0.0
    %2837 = vmatpush1.msra.mxu0 0.0
    %2838 = vmatprep.subr.mxu0 0.0
    %2839 = vmatpush1.msra.mxu0 0.0
    %2840 = vmatprep.subr.mxu0 0.0
    %2841 = vmatpush1.msra.mxu0 0.0
    %2842 = vmatprep.subr.mxu0 0.0
    %2843 = vmatpush1.msra.mxu0 0.0
    %2844 = vmatprep.mubr.f32.mxu0 0.0
    %2845 = vmatmul.mubr.f32.gmra.mrb[0].mxu0 %v2778
    %v2846 = vpop.f32.mrb[0].mxu0
    %v2847 = vadd.f32 %v2702, %v2846
    %v2848 = vpop.f32.mrb[0].mxu0
    %2849 = vdwg.mxu0
    %2851 = vrot.lane.b32.xlu0 %v2774, 96
    %v2852 = vpop.permute.xlu0 %2851
    %v2853 = vsel %vm777, %v2774, 0
    %v2855 = vsel %vm777, %v2852, 0
    %2857 = vmatprep.subr.mxu0 0.0
    %2858 = vmatpush1.xpose.msra.mxu0 %v2855
    %2859 = vmatprep.subr.mxu0 0.0
    %2860 = vmatpush1.xpose.msra.mxu0 0.0
    %2861 = vmatprep.subr.mxu0 0.0
    %2862 = vmatpush1.xpose.msra.mxu0 0.0
    %2863 = vmatprep.subr.mxu0 0.0
    %2864 = vmatpush1.xpose.msra.mxu0 0.0
    %2865 = vmatprep.subr.mxu0 0.0
    %2866 = vmatpush1.xpose.msra.mxu0 0.0
    %2867 = vmatprep.subr.mxu0 0.0
    %2868 = vmatpush1.xpose.msra.mxu0 0.0
    %2869 = vmatprep.subr.mxu0 0.0
    %2870 = vmatpush1.xpose.msra.mxu0 0.0
    %2871 = vmatprep.subr.mxu0 0.0
    %2872 = vmatpush1.xpose.msra.mxu0 0.0
    %2873 = vmatprep.subr.mxu0 0.0
    %2874 = vmatpush1.xpose.msra.mxu0 0.0
    %2875 = vmatprep.subr.mxu0 0.0
    %2876 = vmatpush1.xpose.msra.mxu0 0.0
    %2877 = vmatprep.subr.mxu0 0.0
    %2878 = vmatpush1.xpose.msra.mxu0 0.0
    %2879 = vmatprep.subr.mxu0 0.0
    %2880 = vmatpush1.xpose.msra.mxu0 0.0
    %2881 = vmatprep.subr.mxu0 0.0
    %2882 = vmatpush1.xpose.msra.mxu0 0.0
    %2883 = vmatprep.subr.mxu0 0.0
    %2884 = vmatpush1.xpose.msra.mxu0 0.0
    %2885 = vmatprep.subr.mxu0 0.0
    %2886 = vmatpush1.xpose.msra.mxu0 0.0
    %2887 = vmatprep.subr.mxu0 0.0
    %2888 = vmatpush1.xpose.msra.mxu0 0.0
    %2889 = vmatprep.subr.mxu0 0.0
    %2890 = vmatpush1.xpose.msra.mxu0 0.0
    %2891 = vmatprep.subr.mxu0 0.0
    %2892 = vmatpush1.xpose.msra.mxu0 0.0
    %2893 = vmatprep.subr.mxu0 0.0
    %2894 = vmatpush1.xpose.msra.mxu0 0.0
    %2895 = vmatprep.subr.mxu0 0.0
    %2896 = vmatpush1.xpose.msra.mxu0 0.0
    %2897 = vmatprep.subr.mxu0 0.0
    %2898 = vmatpush1.xpose.msra.mxu0 0.0
    %2899 = vmatprep.subr.mxu0 0.0
    %2900 = vmatpush1.xpose.msra.mxu0 0.0
    %2901 = vmatprep.subr.mxu0 0.0
    %2902 = vmatpush1.xpose.msra.mxu0 0.0
    %2903 = vmatprep.subr.mxu0 0.0
    %2904 = vmatpush1.xpose.msra.mxu0 0.0
    %2905 = vmatprep.subr.mxu0 0.0
    %2906 = vmatpush1.xpose.msra.mxu0 0.0
    %2907 = vmatprep.subr.mxu0 0.0
    %2908 = vmatpush1.xpose.msra.mxu0 0.0
    %2909 = vmatprep.subr.mxu0 0.0
    %2910 = vmatpush1.xpose.msra.mxu0 0.0
    %2911 = vmatprep.subr.mxu0 0.0
    %2912 = vmatpush1.xpose.msra.mxu0 0.0
    %2913 = vmatprep.subr.mxu0 0.0
    %2914 = vmatpush1.xpose.msra.mxu0 0.0
    %2915 = vmatprep.subr.mxu0 0.0
    %2916 = vmatpush1.xpose.msra.mxu0 0.0
    %2917 = vmatprep.subr.mxu0 0.0
    %2918 = vmatpush1.xpose.msra.mxu0 0.0
    %2919 = vmatprep.subr.mxu0 0.0
    %2920 = vmatpush1.xpose.msra.mxu0 0.0
    %2921 = vmatprep.mubr.f32.mxu0 0.0
    %2922 = vmatmul.mubr.f32.gmra.mrb[0].mxu0 %v2853
    %v2923 = vpop.f32.mrb[0].mxu0
    %v2924 = vadd.f32 0.0, %v2923
    %v2925 = vpop.f32.mrb[0].mxu0
    %2926 = vdwg.mxu0
    %2928 = vrot.lane.b32.xlu0 %v2847, 96
    %v2929 = vpop.permute.xlu0 %2928
    %v2930 = vsel %vm777, %v2847, 0
    %v2932 = vsel %vm777, %v2929, 0
    %2934 = vmatprep.subr.mxu0 0.0
    %2935 = vmatpush1.xpose.msra.mxu0 %v2932
    %2936 = vmatprep.subr.mxu0 0.0
    %2937 = vmatpush1.xpose.msra.mxu0 0.0
    %2938 = vmatprep.subr.mxu0 0.0
    %2939 = vmatpush1.xpose.msra.mxu0 0.0
    %2940 = vmatprep.subr.mxu0 0.0
    %2941 = vmatpush1.xpose.msra.mxu0 0.0
    %2942 = vmatprep.subr.mxu0 0.0
    %2943 = vmatpush1.xpose.msra.mxu0 0.0
    %2944 = vmatprep.subr.mxu0 0.0
    %2945 = vmatpush1.xpose.msra.mxu0 0.0
    %2946 = vmatprep.subr.mxu0 0.0
    %2947 = vmatpush1.xpose.msra.mxu0 0.0
    %2948 = vmatprep.subr.mxu0 0.0
    %2949 = vmatpush1.xpose.msra.mxu0 0.0
    %2950 = vmatprep.subr.mxu0 0.0
    %2951 = vmatpush1.xpose.msra.mxu0 0.0
    %2952 = vmatprep.subr.mxu0 0.0
    %2953 = vmatpush1.xpose.msra.mxu0 0.0
    %2954 = vmatprep.subr.mxu0 0.0
    %2955 = vmatpush1.xpose.msra.mxu0 0.0
    %2956 = vmatprep.subr.mxu0 0.0
    %2957 = vmatpush1.xpose.msra.mxu0 0.0
    %2958 = vmatprep.subr.mxu0 0.0
    %2959 = vmatpush1.xpose.msra.mxu0 0.0
    %2960 = vmatprep.subr.mxu0 0.0
    %2961 = vmatpush1.xpose.msra.mxu0 0.0
    %2962 = vmatprep.subr.mxu0 0.0
    %2963 = vmatpush1.xpose.msra.mxu0 0.0
    %2964 = vmatprep.subr.mxu0 0.0
    %2965 = vmatpush1.xpose.msra.mxu0 0.0
    %2966 = vmatprep.subr.mxu0 0.0
    %2967 = vmatpush1.xpose.msra.mxu0 0.0
    %2968 = vmatprep.subr.mxu0 0.0
    %2969 = vmatpush1.xpose.msra.mxu0 0.0
    %2970 = vmatprep.subr.mxu0 0.0
    %2971 = vmatpush1.xpose.msra.mxu0 0.0
    %2972 = vmatprep.subr.mxu0 0.0
    %2973 = vmatpush1.xpose.msra.mxu0 0.0
    %2974 = vmatprep.subr.mxu0 0.0
    %2975 = vmatpush1.xpose.msra.mxu0 0.0
    %2976 = vmatprep.subr.mxu0 0.0
    %2977 = vmatpush1.xpose.msra.mxu0 0.0
    %2978 = vmatprep.subr.mxu0 0.0
    %2979 = vmatpush1.xpose.msra.mxu0 0.0
    %2980 = vmatprep.subr.mxu0 0.0
    %2981 = vmatpush1.xpose.msra.mxu0 0.0
    %2982 = vmatprep.subr.mxu0 0.0
    %2983 = vmatpush1.xpose.msra.mxu0 0.0
    %2984 = vmatprep.subr.mxu0 0.0
    %2985 = vmatpush1.xpose.msra.mxu0 0.0
    %2986 = vmatprep.subr.mxu0 0.0
    %2987 = vmatpush1.xpose.msra.mxu0 0.0
    %2988 = vmatprep.subr.mxu0 0.0
    %2989 = vmatpush1.xpose.msra.mxu0 0.0
    %2990 = vmatprep.subr.mxu0 0.0
    %2991 = vmatpush1.xpose.msra.mxu0 0.0
    %2992 = vmatprep.subr.mxu0 0.0
    %2993 = vmatpush1.xpose.msra.mxu0 0.0
    %2994 = vmatprep.subr.mxu0 0.0
    %2995 = vmatpush1.xpose.msra.mxu0 0.0
    %2996 = vmatprep.subr.mxu0 0.0
    %2997 = vmatpush1.xpose.msra.mxu0 0.0
    %2998 = vmatprep.mubr.f32.mxu0 0.0
    %2999 = vmatmul.mubr.f32.gmra.mrb[0].mxu0 %v2930
    %v3000 = vpop.f32.mrb[0].mxu0
    %v3001 = vadd.f32 0.0, %v3000
    %v3002 = vpop.f32.mrb[0].mxu0
    %3003 = vdwg.mxu0
    %v3004 = vsel %vm929, %v2924, -inf
    %3005 = vmax.xlane.f32.xlu0 %v3004
    %v3006 = vpop.xlane.xlu0 %3005
    %v3007 = vsel %vm929, %v3001, -inf
    %3008 = vmax.xlane.f32.xlu0 %v3007
    %v3009 = vpop.xlane.xlu0 %3008
    %v3010 = vsub.f32 %v2924, %v3006
    %v3011 = vsub.f32 %v3001, %v3009
    %v3012 = vmul.f32 %v3010, 1.442695
    %v3013 = vpow.pop %v3012
    %v3014 = vmul.f32 %v3011, 1.442695
    %v3015 = vpow.pop %v3014
    %v3016 = vsel %vm929, %v3013, 0.0
    %3017 = vadd.xlane.f32.xlu0 %v3016
    %v3018 = vpop.xlane.xlu0 %3017
    %v3019 = vsel %vm929, %v3015, 0.0
    %3020 = vadd.xlane.f32.xlu0 %v3019
    %v3021 = vpop.xlane.xlu0 %3020
    %v3022 = vrcp.pop %v3018
    %v3023 = vrcp.pop %v3021
    %v3024 = vmul.f32 %v3013, %v3022
    %v3025 = vmul.f32 %v3015, %v3023
    %v3026 = vadd.f32 %v3024, 0.0
    %v3027 = vadd.f32 %v3025, 0.0
    %3028 = vrot.lane.b32.xlu0 %v2774, 64
    %v3029 = vpop.permute.xlu0 %3028
    %v3031 = vsel %vm954, %v3024, 0
    %v3033 = vsel %vm958, %v3029, 0
    %3035 = vmatprep.subr.mxu0 0.0
    %3036 = vmatpush1.msra.mxu0 %v3033
    %3037 = vmatprep.subr.mxu0 0.0
    %3038 = vmatpush1.msra.mxu0 0.0
    %3039 = vmatprep.subr.mxu0 0.0
    %3040 = vmatpush1.msra.mxu0 0.0
    %3041 = vmatprep.subr.mxu0 0.0
    %3042 = vmatpush1.msra.mxu0 0.0
    %3043 = vmatprep.subr.mxu0 0.0
    %3044 = vmatpush1.msra.mxu0 0.0
    %3045 = vmatprep.subr.mxu0 0.0
    %3046 = vmatpush1.msra.mxu0 0.0
    %3047 = vmatprep.subr.mxu0 0.0
    %3048 = vmatpush1.msra.mxu0 0.0
    %3049 = vmatprep.subr.mxu0 0.0
    %3050 = vmatpush1.msra.mxu0 0.0
    %3051 = vmatprep.subr.mxu0 0.0
    %3052 = vmatpush1.msra.mxu0 0.0
    %3053 = vmatprep.subr.mxu0 0.0
    %3054 = vmatpush1.msra.mxu0 0.0
    %3055 = vmatprep.subr.mxu0 0.0
    %3056 = vmatpush1.msra.mxu0 0.0
    %3057 = vmatprep.subr.mxu0 0.0
    %3058 = vmatpush1.msra.mxu0 0.0
    %3059 = vmatprep.subr.mxu0 0.0
    %3060 = vmatpush1.msra.mxu0 0.0
    %3061 = vmatprep.subr.mxu0 0.0
    %3062 = vmatpush1.msra.mxu0 0.0
    %3063 = vmatprep.subr.mxu0 0.0
    %3064 = vmatpush1.msra.mxu0 0.0
    %3065 = vmatprep.subr.mxu0 0.0
    %3066 = vmatpush1.msra.mxu0 0.0
    %3067 = vmatprep.subr.mxu0 0.0
    %3068 = vmatpush1.msra.mxu0 0.0
    %3069 = vmatprep.subr.mxu0 0.0
    %3070 = vmatpush1.msra.mxu0 0.0
    %3071 = vmatprep.subr.mxu0 0.0
    %3072 = vmatpush1.msra.mxu0 0.0
    %3073 = vmatprep.subr.mxu0 0.0
    %3074 = vmatpush1.msra.mxu0 0.0
    %3075 = vmatprep.subr.mxu0 0.0
    %3076 = vmatpush1.msra.mxu0 0.0
    %3077 = vmatprep.subr.mxu0 0.0
    %3078 = vmatpush1.msra.mxu0 0.0
    %3079 = vmatprep.subr.mxu0 0.0
    %3080 = vmatpush1.msra.mxu0 0.0
    %3081 = vmatprep.subr.mxu0 0.0
    %3082 = vmatpush1.msra.mxu0 0.0
    %3083 = vmatprep.subr.mxu0 0.0
    %3084 = vmatpush1.msra.mxu0 0.0
    %3085 = vmatprep.subr.mxu0 0.0
    %3086 = vmatpush1.msra.mxu0 0.0
    %3087 = vmatprep.subr.mxu0 0.0
    %3088 = vmatpush1.msra.mxu0 0.0
    %3089 = vmatprep.subr.mxu0 0.0
    %3090 = vmatpush1.msra.mxu0 0.0
    %3091 = vmatprep.subr.mxu0 0.0
    %3092 = vmatpush1.msra.mxu0 0.0
    %3093 = vmatprep.subr.mxu0 0.0
    %3094 = vmatpush1.msra.mxu0 0.0
    %3095 = vmatprep.subr.mxu0 0.0
    %3096 = vmatpush1.msra.mxu0 0.0
    %3097 = vmatprep.subr.mxu0 0.0
    %3098 = vmatpush1.msra.mxu0 0.0
    %3099 = vmatprep.mubr.f32.mxu0 0.0
    %3100 = vmatmul.mubr.f32.gmra.mrb[0].mxu0 %v3031
    %v3101 = vpop.f32.mrb[0].mxu0
    %v3102 = vadd.f32 0.0, %v3101
    %v3103 = vpop.f32.mrb[0].mxu0
    %3104 = vdwg.mxu0
    %3105 = vrot.lane.b32.xlu0 %v2847, 64
    %v3106 = vpop.permute.xlu0 %3105
    %v3108 = vsel %vm954, %v3025, 0
    %v3110 = vsel %vm958, %v3106, 0
    %3112 = vmatprep.subr.mxu0 0.0
    %3113 = vmatpush1.msra.mxu0 %v3110
    %3114 = vmatprep.subr.mxu0 0.0
    %3115 = vmatpush1.msra.mxu0 0.0
    %3116 = vmatprep.subr.mxu0 0.0
    %3117 = vmatpush1.msra.mxu0 0.0
    %3118 = vmatprep.subr.mxu0 0.0
    %3119 = vmatpush1.msra.mxu0 0.0
    %3120 = vmatprep.subr.mxu0 0.0
    %3121 = vmatpush1.msra.mxu0 0.0
    %3122 = vmatprep.subr.mxu0 0.0
    %3123 = vmatpush1.msra.mxu0 0.0
    %3124 = vmatprep.subr.mxu0 0.0
    %3125 = vmatpush1.msra.mxu0 0.0
    %3126 = vmatprep.subr.mxu0 0.0
    %3127 = vmatpush1.msra.mxu0 0.0
    %3128 = vmatprep.subr.mxu0 0.0
    %3129 = vmatpush1.msra.mxu0 0.0
    %3130 = vmatprep.subr.mxu0 0.0
    %3131 = vmatpush1.msra.mxu0 0.0
    %3132 = vmatprep.subr.mxu0 0.0
    %3133 = vmatpush1.msra.mxu0 0.0
    %3134 = vmatprep.subr.mxu0 0.0
    %3135 = vmatpush1.msra.mxu0 0.0
    %3136 = vmatprep.subr.mxu0 0.0
    %3137 = vmatpush1.msra.mxu0 0.0
    %3138 = vmatprep.subr.mxu0 0.0
    %3139 = vmatpush1.msra.mxu0 0.0
    %3140 = vmatprep.subr.mxu0 0.0
    %3141 = vmatpush1.msra.mxu0 0.0
    %3142 = vmatprep.subr.mxu0 0.0
    %3143 = vmatpush1.msra.mxu0 0.0
    %3144 = vmatprep.subr.mxu0 0.0
    %3145 = vmatpush1.msra.mxu0 0.0
    %3146 = vmatprep.subr.mxu0 0.0
    %3147 = vmatpush1.msra.mxu0 0.0
    %3148 = vmatprep.subr.mxu0 0.0
    %3149 = vmatpush1.msra.mxu0 0.0
    %3150 = vmatprep.subr.mxu0 0.0
    %3151 = vmatpush1.msra.mxu0 0.0
    %3152 = vmatprep.subr.mxu0 0.0
    %3153 = vmatpush1.msra.mxu0 0.0
    %3154 = vmatprep.subr.mxu0 0.0
    %3155 = vmatpush1.msra.mxu0 0.0
    %3156 = vmatprep.subr.mxu0 0.0
    %3157 = vmatpush1.msra.mxu0 0.0
    %3158 = vmatprep.subr.mxu0 0.0
    %3159 = vmatpush1.msra.mxu0 0.0
    %3160 = vmatprep.subr.mxu0 0.0
    %3161 = vmatpush1.msra.mxu0 0.0
    %3162 = vmatprep.subr.mxu0 0.0
    %3163 = vmatpush1.msra.mxu0 0.0
    %3164 = vmatprep.subr.mxu0 0.0
    %3165 = vmatpush1.msra.mxu0 0.0
    %3166 = vmatprep.subr.mxu0 0.0
    %3167 = vmatpush1.msra.mxu0 0.0
    %3168 = vmatprep.subr.mxu0 0.0
    %3169 = vmatpush1.msra.mxu0 0.0
    %3170 = vmatprep.subr.mxu0 0.0
    %3171 = vmatpush1.msra.mxu0 0.0
    %3172 = vmatprep.subr.mxu0 0.0
    %3173 = vmatpush1.msra.mxu0 0.0
    %3174 = vmatprep.subr.mxu0 0.0
    %3175 = vmatpush1.msra.mxu0 0.0
    %3176 = vmatprep.mubr.f32.mxu0 0.0
    %3177 = vmatmul.mubr.f32.gmra.mrb[0].mxu0 %v3108
    %v3178 = vpop.f32.mrb[0].mxu0
    %v3179 = vadd.f32 0.0, %v3178
    %v3180 = vpop.f32.mrb[0].mxu0
    %3181 = vdwg.mxu0
    %3182 = vrot.lane.b32.xlu0 %v2774, 120
    %v3183 = vpop.permute.xlu0 %3182
    %3184 = vrot.lane.b32.xlu0 %v2774, 88
    %v3185 = vpop.permute.xlu0 %3184
    %v3186 = vsel %vm777, %v3183, 0
    %v3188 = vsel %vm777, %v3185, 0
    %3190 = vmatprep.subr.mxu0 0.0
    %3191 = vmatpush1.xpose.msra.mxu0 %v3188
    %3192 = vmatprep.subr.mxu0 0.0
    %3193 = vmatpush1.xpose.msra.mxu0 0.0
    %3194 = vmatprep.subr.mxu0 0.0
    %3195 = vmatpush1.xpose.msra.mxu0 0.0
    %3196 = vmatprep.subr.mxu0 0.0
    %3197 = vmatpush1.xpose.msra.mxu0 0.0
    %3198 = vmatprep.subr.mxu0 0.0
    %3199 = vmatpush1.xpose.msra.mxu0 0.0
    %3200 = vmatprep.subr.mxu0 0.0
    %3201 = vmatpush1.xpose.msra.mxu0 0.0
    %3202 = vmatprep.subr.mxu0 0.0
    %3203 = vmatpush1.xpose.msra.mxu0 0.0
    %3204 = vmatprep.subr.mxu0 0.0
    %3205 = vmatpush1.xpose.msra.mxu0 0.0
    %3206 = vmatprep.subr.mxu0 0.0
    %3207 = vmatpush1.xpose.msra.mxu0 0.0
    %3208 = vmatprep.subr.mxu0 0.0
    %3209 = vmatpush1.xpose.msra.mxu0 0.0
    %3210 = vmatprep.subr.mxu0 0.0
    %3211 = vmatpush1.xpose.msra.mxu0 0.0
    %3212 = vmatprep.subr.mxu0 0.0
    %3213 = vmatpush1.xpose.msra.mxu0 0.0
    %3214 = vmatprep.subr.mxu0 0.0
    %3215 = vmatpush1.xpose.msra.mxu0 0.0
    %3216 = vmatprep.subr.mxu0 0.0
    %3217 = vmatpush1.xpose.msra.mxu0 0.0
    %3218 = vmatprep.subr.mxu0 0.0
    %3219 = vmatpush1.xpose.msra.mxu0 0.0
    %3220 = vmatprep.subr.mxu0 0.0
    %3221 = vmatpush1.xpose.msra.mxu0 0.0
    %3222 = vmatprep.subr.mxu0 0.0
    %3223 = vmatpush1.xpose.msra.mxu0 0.0
    %3224 = vmatprep.subr.mxu0 0.0
    %3225 = vmatpush1.xpose.msra.mxu0 0.0
    %3226 = vmatprep.subr.mxu0 0.0
    %3227 = vmatpush1.xpose.msra.mxu0 0.0
    %3228 = vmatprep.subr.mxu0 0.0
    %3229 = vmatpush1.xpose.msra.mxu0 0.0
    %3230 = vmatprep.subr.mxu0 0.0
    %3231 = vmatpush1.xpose.msra.mxu0 0.0
    %3232 = vmatprep.subr.mxu0 0.0
    %3233 = vmatpush1.xpose.msra.mxu0 0.0
    %3234 = vmatprep.subr.mxu0 0.0
    %3235 = vmatpush1.xpose.msra.mxu0 0.0
    %3236 = vmatprep.subr.mxu0 0.0
    %3237 = vmatpush1.xpose.msra.mxu0 0.0
    %3238 = vmatprep.subr.mxu0 0.0
    %3239 = vmatpush1.xpose.msra.mxu0 0.0
    %3240 = vmatprep.subr.mxu0 0.0
    %3241 = vmatpush1.xpose.msra.mxu0 0.0
    %3242 = vmatprep.subr.mxu0 0.0
    %3243 = vmatpush1.xpose.msra.mxu0 0.0
    %3244 = vmatprep.subr.mxu0 0.0
    %3245 = vmatpush1.xpose.msra.mxu0 0.0
    %3246 = vmatprep.subr.mxu0 0.0
    %3247 = vmatpush1.xpose.msra.mxu0 0.0
    %3248 = vmatprep.subr.mxu0 0.0
    %3249 = vmatpush1.xpose.msra.mxu0 0.0
    %3250 = vmatprep.subr.mxu0 0.0
    %3251 = vmatpush1.xpose.msra.mxu0 0.0
    %3252 = vmatprep.subr.mxu0 0.0
    %3253 = vmatpush1.xpose.msra.mxu0 0.0
    %3254 = vmatprep.mubr.f32.mxu0 0.0
    %3255 = vmatmul.mubr.f32.gmra.mrb[0].mxu0 %v3186
    %v3256 = vpop.f32.mrb[0].mxu0
    %v3257 = vadd.f32 0.0, %v3256
    %v3258 = vpop.f32.mrb[0].mxu0
    %3259 = vdwg.mxu0
    %3260 = vrot.lane.b32.xlu0 %v2847, 120
    %v3261 = vpop.permute.xlu0 %3260
    %3262 = vrot.lane.b32.xlu0 %v2847, 88
    %v3263 = vpop.permute.xlu0 %3262
    %v3264 = vsel %vm777, %v3261, 0
    %v3266 = vsel %vm777, %v3263, 0
    %3268 = vmatprep.subr.mxu0 0.0
    %3269 = vmatpush1.xpose.msra.mxu0 %v3266
    %3270 = vmatprep.subr.mxu0 0.0
    %3271 = vmatpush1.xpose.msra.mxu0 0.0
    %3272 = vmatprep.subr.mxu0 0.0
    %3273 = vmatpush1.xpose.msra.mxu0 0.0
    %3274 = vmatprep.subr.mxu0 0.0
    %3275 = vmatpush1.xpose.msra.mxu0 0.0
    %3276 = vmatprep.subr.mxu0 0.0
    %3277 = vmatpush1.xpose.msra.mxu0 0.0
    %3278 = vmatprep.subr.mxu0 0.0
    %3279 = vmatpush1.xpose.msra.mxu0 0.0
    %3280 = vmatprep.subr.mxu0 0.0
    %3281 = vmatpush1.xpose.msra.mxu0 0.0
    %3282 = vmatprep.subr.mxu0 0.0
    %3283 = vmatpush1.xpose.msra.mxu0 0.0
    %3284 = vmatprep.subr.mxu0 0.0
    %3285 = vmatpush1.xpose.msra.mxu0 0.0
    %3286 = vmatprep.subr.mxu0 0.0
    %3287 = vmatpush1.xpose.msra.mxu0 0.0
    %3288 = vmatprep.subr.mxu0 0.0
    %3289 = vmatpush1.xpose.msra.mxu0 0.0
    %3290 = vmatprep.subr.mxu0 0.0
    %3291 = vmatpush1.xpose.msra.mxu0 0.0
    %3292 = vmatprep.subr.mxu0 0.0
    %3293 = vmatpush1.xpose.msra.mxu0 0.0
    %3294 = vmatprep.subr.mxu0 0.0
    %3295 = vmatpush1.xpose.msra.mxu0 0.0
    %3296 = vmatprep.subr.mxu0 0.0
    %3297 = vmatpush1.xpose.msra.mxu0 0.0
    %3298 = vmatprep.subr.mxu0 0.0
    %3299 = vmatpush1.xpose.msra.mxu0 0.0
    %3300 = vmatprep.subr.mxu0 0.0
    %3301 = vmatpush1.xpose.msra.mxu0 0.0
    %3302 = vmatprep.subr.mxu0 0.0
    %3303 = vmatpush1.xpose.msra.mxu0 0.0
    %3304 = vmatprep.subr.mxu0 0.0
    %3305 = vmatpush1.xpose.msra.mxu0 0.0
    %3306 = vmatprep.subr.mxu0 0.0
    %3307 = vmatpush1.xpose.msra.mxu0 0.0
    %3308 = vmatprep.subr.mxu0 0.0
    %3309 = vmatpush1.xpose.msra.mxu0 0.0
    %3310 = vmatprep.subr.mxu0 0.0
    %3311 = vmatpush1.xpose.msra.mxu0 0.0
    %3312 = vmatprep.subr.mxu0 0.0
    %3313 = vmatpush1.xpose.msra.mxu0 0.0
    %3314 = vmatprep.subr.mxu0 0.0
    %3315 = vmatpush1.xpose.msra.mxu0 0.0
    %3316 = vmatprep.subr.mxu0 0.0
    %3317 = vmatpush1.xpose.msra.mxu0 0.0
    %3318 = vmatprep.subr.mxu0 0.0
    %3319 = vmatpush1.xpose.msra.mxu0 0.0
    %3320 = vmatprep.subr.mxu0 0.0
    %3321 = vmatpush1.xpose.msra.mxu0 0.0
    %3322 = vmatprep.subr.mxu0 0.0
    %3323 = vmatpush1.xpose.msra.mxu0 0.0
    %3324 = vmatprep.subr.mxu0 0.0
    %3325 = vmatpush1.xpose.msra.mxu0 0.0
    %3326 = vmatprep.subr.mxu0 0.0
    %3327 = vmatpush1.xpose.msra.mxu0 0.0
    %3328 = vmatprep.subr.mxu0 0.0
    %3329 = vmatpush1.xpose.msra.mxu0 0.0
    %3330 = vmatprep.subr.mxu0 0.0
    %3331 = vmatpush1.xpose.msra.mxu0 0.0
    %3332 = vmatprep.mubr.f32.mxu0 0.0
    %3333 = vmatmul.mubr.f32.gmra.mrb[0].mxu0 %v3264
    %v3334 = vpop.f32.mrb[0].mxu0
    %v3335 = vadd.f32 0.0, %v3334
    %v3336 = vpop.f32.mrb[0].mxu0
    %3337 = vdwg.mxu0
    %v3338 = vsel %vm929, %v3257, -inf
    %3339 = vmax.xlane.f32.xlu0 %v3338
    %v3340 = vpop.xlane.xlu0 %3339
    %v3341 = vsel %vm929, %v3335, -inf
    %3342 = vmax.xlane.f32.xlu0 %v3341
    %v3343 = vpop.xlane.xlu0 %3342
    %v3344 = vsub.f32 %v3257, %v3340
    %v3345 = vsub.f32 %v3335, %v3343
    %v3346 = vmul.f32 %v3344, 1.442695
    %v3347 = vpow.pop %v3346
    %v3348 = vmul.f32 %v3345, 1.442695
    %v3349 = vpow.pop %v3348
    %v3350 = vsel %vm929, %v3347, 0.0
    %3351 = vadd.xlane.f32.xlu0 %v3350
    %v3352 = vpop.xlane.xlu0 %3351
    %v3353 = vsel %vm929, %v3349, 0.0
    %3354 = vadd.xlane.f32.xlu0 %v3353
    %v3355 = vpop.xlane.xlu0 %3354
    %v3356 = vrcp.pop %v3352
    %v3357 = vrcp.pop %v3355
    %v3358 = vmul.f32 %v3347, %v3356
    %v3359 = vmul.f32 %v3349, %v3357
    %v3360 = vadd.f32 %v3026, %v3358
    %v3361 = vadd.f32 %v3027, %v3359
    %3362 = vrot.lane.b32.xlu0 %v2774, 56
    %v3363 = vpop.permute.xlu0 %3362
    %v3365 = vsel %vm954, %v3358, 0
    %v3367 = vsel %vm958, %v3363, 0
    %3369 = vmatprep.subr.mxu0 0.0
    %3370 = vmatpush1.msra.mxu0 %v3367
    %3371 = vmatprep.subr.mxu0 0.0
    %3372 = vmatpush1.msra.mxu0 0.0
    %3373 = vmatprep.subr.mxu0 0.0
    %3374 = vmatpush1.msra.mxu0 0.0
    %3375 = vmatprep.subr.mxu0 0.0
    %3376 = vmatpush1.msra.mxu0 0.0
    %3377 = vmatprep.subr.mxu0 0.0
    %3378 = vmatpush1.msra.mxu0 0.0
    %3379 = vmatprep.subr.mxu0 0.0
    %3380 = vmatpush1.msra.mxu0 0.0
    %3381 = vmatprep.subr.mxu0 0.0
    %3382 = vmatpush1.msra.mxu0 0.0
    %3383 = vmatprep.subr.mxu0 0.0
    %3384 = vmatpush1.msra.mxu0 0.0
    %3385 = vmatprep.subr.mxu0 0.0
    %3386 = vmatpush1.msra.mxu0 0.0
    %3387 = vmatprep.subr.mxu0 0.0
    %3388 = vmatpush1.msra.mxu0 0.0
    %3389 = vmatprep.subr.mxu0 0.0
    %3390 = vmatpush1.msra.mxu0 0.0
    %3391 = vmatprep.subr.mxu0 0.0
    %3392 = vmatpush1.msra.mxu0 0.0
    %3393 = vmatprep.subr.mxu0 0.0
    %3394 = vmatpush1.msra.mxu0 0.0
    %3395 = vmatprep.subr.mxu0 0.0
    %3396 = vmatpush1.msra.mxu0 0.0
    %3397 = vmatprep.subr.mxu0 0.0
    %3398 = vmatpush1.msra.mxu0 0.0
    %3399 = vmatprep.subr.mxu0 0.0
    %3400 = vmatpush1.msra.mxu0 0.0
    %3401 = vmatprep.subr.mxu0 0.0
    %3402 = vmatpush1.msra.mxu0 0.0
    %3403 = vmatprep.subr.mxu0 0.0
    %3404 = vmatpush1.msra.mxu0 0.0
    %3405 = vmatprep.subr.mxu0 0.0
    %3406 = vmatpush1.msra.mxu0 0.0
    %3407 = vmatprep.subr.mxu0 0.0
    %3408 = vmatpush1.msra.mxu0 0.0
    %3409 = vmatprep.subr.mxu0 0.0
    %3410 = vmatpush1.msra.mxu0 0.0
    %3411 = vmatprep.subr.mxu0 0.0
    %3412 = vmatpush1.msra.mxu0 0.0
    %3413 = vmatprep.subr.mxu0 0.0
    %3414 = vmatpush1.msra.mxu0 0.0
    %3415 = vmatprep.subr.mxu0 0.0
    %3416 = vmatpush1.msra.mxu0 0.0
    %3417 = vmatprep.subr.mxu0 0.0
    %3418 = vmatpush1.msra.mxu0 0.0
    %3419 = vmatprep.subr.mxu0 0.0
    %3420 = vmatpush1.msra.mxu0 0.0
    %3421 = vmatprep.subr.mxu0 0.0
    %3422 = vmatpush1.msra.mxu0 0.0
    %3423 = vmatprep.subr.mxu0 0.0
    %3424 = vmatpush1.msra.mxu0 0.0
    %3425 = vmatprep.subr.mxu0 0.0
    %3426 = vmatpush1.msra.mxu0 0.0
    %3427 = vmatprep.subr.mxu0 0.0
    %3428 = vmatpush1.msra.mxu0 0.0
    %3429 = vmatprep.subr.mxu0 0.0
    %3430 = vmatpush1.msra.mxu0 0.0
    %3431 = vmatprep.subr.mxu0 0.0
    %3432 = vmatpush1.msra.mxu0 0.0
    %3433 = vmatprep.mubr.f32.mxu0 0.0
    %3434 = vmatmul.mubr.f32.gmra.mrb[0].mxu0 %v3365
    %v3435 = vpop.f32.mrb[0].mxu0
    %v3436 = vadd.f32 0.0, %v3435
    %v3437 = vpop.f32.mrb[0].mxu0
    %3438 = vdwg.mxu0
    %3439 = vrot.lane.b32.xlu0 %v2847, 56
    %v3440 = vpop.permute.xlu0 %3439
    %v3442 = vsel %vm954, %v3359, 0
    %v3444 = vsel %vm958, %v3440, 0
    %3446 = vmatprep.subr.mxu0 0.0
    %3447 = vmatpush1.msra.mxu0 %v3444
    %3448 = vmatprep.subr.mxu0 0.0
    %3449 = vmatpush1.msra.mxu0 0.0
    %3450 = vmatprep.subr.mxu0 0.0
    %3451 = vmatpush1.msra.mxu0 0.0
    %3452 = vmatprep.subr.mxu0 0.0
    %3453 = vmatpush1.msra.mxu0 0.0
    %3454 = vmatprep.subr.mxu0 0.0
    %3455 = vmatpush1.msra.mxu0 0.0
    %3456 = vmatprep.subr.mxu0 0.0
    %3457 = vmatpush1.msra.mxu0 0.0
    %3458 = vmatprep.subr.mxu0 0.0
    %3459 = vmatpush1.msra.mxu0 0.0
    %3460 = vmatprep.subr.mxu0 0.0
    %3461 = vmatpush1.msra.mxu0 0.0
    %3462 = vmatprep.subr.mxu0 0.0
    %3463 = vmatpush1.msra.mxu0 0.0
    %3464 = vmatprep.subr.mxu0 0.0
    %3465 = vmatpush1.msra.mxu0 0.0
    %3466 = vmatprep.subr.mxu0 0.0
    %3467 = vmatpush1.msra.mxu0 0.0
    %3468 = vmatprep.subr.mxu0 0.0
    %3469 = vmatpush1.msra.mxu0 0.0
    %3470 = vmatprep.subr.mxu0 0.0
    %3471 = vmatpush1.msra.mxu0 0.0
    %3472 = vmatprep.subr.mxu0 0.0
    %3473 = vmatpush1.msra.mxu0 0.0
    %3474 = vmatprep.subr.mxu0 0.0
    %3475 = vmatpush1.msra.mxu0 0.0
    %3476 = vmatprep.subr.mxu0 0.0
    %3477 = vmatpush1.msra.mxu0 0.0
    %3478 = vmatprep.subr.mxu0 0.0
    %3479 = vmatpush1.msra.mxu0 0.0
    %3480 = vmatprep.subr.mxu0 0.0
    %3481 = vmatpush1.msra.mxu0 0.0
    %3482 = vmatprep.subr.mxu0 0.0
    %3483 = vmatpush1.msra.mxu0 0.0
    %3484 = vmatprep.subr.mxu0 0.0
    %3485 = vmatpush1.msra.mxu0 0.0
    %3486 = vmatprep.subr.mxu0 0.0
    %3487 = vmatpush1.msra.mxu0 0.0
    %3488 = vmatprep.subr.mxu0 0.0
    %3489 = vmatpush1.msra.mxu0 0.0
    %3490 = vmatprep.subr.mxu0 0.0
    %3491 = vmatpush1.msra.mxu0 0.0
    %3492 = vmatprep.subr.mxu0 0.0
    %3493 = vmatpush1.msra.mxu0 0.0
    %3494 = vmatprep.subr.mxu0 0.0
    %3495 = vmatpush1.msra.mxu0 0.0
    %3496 = vmatprep.subr.mxu0 0.0
    %3497 = vmatpush1.msra.mxu0 0.0
    %3498 = vmatprep.subr.mxu0 0.0
    %3499 = vmatpush1.msra.mxu0 0.0
    %3500 = vmatprep.subr.mxu0 0.0
    %3501 = vmatpush1.msra.mxu0 0.0
    %3502 = vmatprep.subr.mxu0 0.0
    %3503 = vmatpush1.msra.mxu0 0.0
    %3504 = vmatprep.subr.mxu0 0.0
    %3505 = vmatpush1.msra.mxu0 0.0
    %3506 = vmatprep.subr.mxu0 0.0
    %3507 = vmatpush1.msra.mxu0 0.0
    %3508 = vmatprep.subr.mxu0 0.0
    %3509 = vmatpush1.msra.mxu0 0.0
    %3510 = vmatprep.mubr.f32.mxu0 0.0
    %3511 = vmatmul.mubr.f32.gmra.mrb[0].mxu0 %v3442
    %v3512 = vpop.f32.mrb[0].mxu0
    %v3513 = vadd.f32 0.0, %v3512
    %v3514 = vpop.f32.mrb[0].mxu0
    %3515 = vdwg.mxu0
    %3516 = vrot.lane.b32.xlu0 %v2774, 112
    %v3517 = vpop.permute.xlu0 %3516
    %3518 = vrot.lane.b32.xlu0 %v2774, 80
    %v3519 = vpop.permute.xlu0 %3518
    %v3520 = vsel %vm777, %v3517, 0
    %v3522 = vsel %vm777, %v3519, 0
    %3524 = vmatprep.subr.mxu0 0.0
    %3525 = vmatpush1.xpose.msra.mxu0 %v3522
    %3526 = vmatprep.subr.mxu0 0.0
    %3527 = vmatpush1.xpose.msra.mxu0 0.0
    %3528 = vmatprep.subr.mxu0 0.0
    %3529 = vmatpush1.xpose.msra.mxu0 0.0
    %3530 = vmatprep.subr.mxu0 0.0
    %3531 = vmatpush1.xpose.msra.mxu0 0.0
    %3532 = vmatprep.subr.mxu0 0.0
    %3533 = vmatpush1.xpose.msra.mxu0 0.0
    %3534 = vmatprep.subr.mxu0 0.0
    %3535 = vmatpush1.xpose.msra.mxu0 0.0
    %3536 = vmatprep.subr.mxu0 0.0
    %3537 = vmatpush1.xpose.msra.mxu0 0.0
    %3538 = vmatprep.subr.mxu0 0.0
    %3539 = vmatpush1.xpose.msra.mxu0 0.0
    %3540 = vmatprep.subr.mxu0 0.0
    %3541 = vmatpush1.xpose.msra.mxu0 0.0
    %3542 = vmatprep.subr.mxu0 0.0
    %3543 = vmatpush1.xpose.msra.mxu0 0.0
    %3544 = vmatprep.subr.mxu0 0.0
    %3545 = vmatpush1.xpose.msra.mxu0 0.0
    %3546 = vmatprep.subr.mxu0 0.0
    %3547 = vmatpush1.xpose.msra.mxu0 0.0
    %3548 = vmatprep.subr.mxu0 0.0
    %3549 = vmatpush1.xpose.msra.mxu0 0.0
    %3550 = vmatprep.subr.mxu0 0.0
    %3551 = vmatpush1.xpose.msra.mxu0 0.0
    %3552 = vmatprep.subr.mxu0 0.0
    %3553 = vmatpush1.xpose.msra.mxu0 0.0
    %3554 = vmatprep.subr.mxu0 0.0
    %3555 = vmatpush1.xpose.msra.mxu0 0.0
    %3556 = vmatprep.subr.mxu0 0.0
    %3557 = vmatpush1.xpose.msra.mxu0 0.0
    %3558 = vmatprep.subr.mxu0 0.0
    %3559 = vmatpush1.xpose.msra.mxu0 0.0
    %3560 = vmatprep.subr.mxu0 0.0
    %3561 = vmatpush1.xpose.msra.mxu0 0.0
    %3562 = vmatprep.subr.mxu0 0.0
    %3563 = vmatpush1.xpose.msra.mxu0 0.0
    %3564 = vmatprep.subr.mxu0 0.0
    %3565 = vmatpush1.xpose.msra.mxu0 0.0
    %3566 = vmatprep.subr.mxu0 0.0
    %3567 = vmatpush1.xpose.msra.mxu0 0.0
    %3568 = vmatprep.subr.mxu0 0.0
    %3569 = vmatpush1.xpose.msra.mxu0 0.0
    %3570 = vmatprep.subr.mxu0 0.0
    %3571 = vmatpush1.xpose.msra.mxu0 0.0
    %3572 = vmatprep.subr.mxu0 0.0
    %3573 = vmatpush1.xpose.msra.mxu0 0.0
    %3574 = vmatprep.subr.mxu0 0.0
    %3575 = vmatpush1.xpose.msra.mxu0 0.0
    %3576 = vmatprep.subr.mxu0 0.0
    %3577 = vmatpush1.xpose.msra.mxu0 0.0
    %3578 = vmatprep.subr.mxu0 0.0
    %3579 = vmatpush1.xpose.msra.mxu0 0.0
    %3580 = vmatprep.subr.mxu0 0.0
    %3581 = vmatpush1.xpose.msra.mxu0 0.0
    %3582 = vmatprep.subr.mxu0 0.0
    %3583 = vmatpush1.xpose.msra.mxu0 0.0
    %3584 = vmatprep.subr.mxu0 0.0
    %3585 = vmatpush1.xpose.msra.mxu0 0.0
    %3586 = vmatprep.subr.mxu0 0.0
    %3587 = vmatpush1.xpose.msra.mxu0 0.0
    %3588 = vmatprep.mubr.f32.mxu0 0.0
    %3589 = vmatmul.mubr.f32.gmra.mrb[0].mxu0 %v3520
    %v3590 = vpop.f32.mrb[0].mxu0
    %v3591 = vadd.f32 0.0, %v3590
    %v3592 = vpop.f32.mrb[0].mxu0
    %3593 = vdwg.mxu0
    %3594 = vrot.lane.b32.xlu0 %v2847, 112
    %v3595 = vpop.permute.xlu0 %3594
    %3596 = vrot.lane.b32.xlu0 %v2847, 80
    %v3597 = vpop.permute.xlu0 %3596
    %v3598 = vsel %vm777, %v3595, 0
    %v3600 = vsel %vm777, %v3597, 0
    %3602 = vmatprep.subr.mxu0 0.0
    %3603 = vmatpush1.xpose.msra.mxu0 %v3600
    %3604 = vmatprep.subr.mxu0 0.0
    %3605 = vmatpush1.xpose.msra.mxu0 0.0
    %3606 = vmatprep.subr.mxu0 0.0
    %3607 = vmatpush1.xpose.msra.mxu0 0.0
    %3608 = vmatprep.subr.mxu0 0.0
    %3609 = vmatpush1.xpose.msra.mxu0 0.0
    %3610 = vmatprep.subr.mxu0 0.0
    %3611 = vmatpush1.xpose.msra.mxu0 0.0
    %3612 = vmatprep.subr.mxu0 0.0
    %3613 = vmatpush1.xpose.msra.mxu0 0.0
    %3614 = vmatprep.subr.mxu0 0.0
    %3615 = vmatpush1.xpose.msra.mxu0 0.0
    %3616 = vmatprep.subr.mxu0 0.0
    %3617 = vmatpush1.xpose.msra.mxu0 0.0
    %3618 = vmatprep.subr.mxu0 0.0
    %3619 = vmatpush1.xpose.msra.mxu0 0.0
    %3620 = vmatprep.subr.mxu0 0.0
    %3621 = vmatpush1.xpose.msra.mxu0 0.0
    %3622 = vmatprep.subr.mxu0 0.0
    %3623 = vmatpush1.xpose.msra.mxu0 0.0
    %3624 = vmatprep.subr.mxu0 0.0
    %3625 = vmatpush1.xpose.msra.mxu0 0.0
    %3626 = vmatprep.subr.mxu0 0.0
    %3627 = vmatpush1.xpose.msra.mxu0 0.0
    %3628 = vmatprep.subr.mxu0 0.0
    %3629 = vmatpush1.xpose.msra.mxu0 0.0
    %3630 = vmatprep.subr.mxu0 0.0
    %3631 = vmatpush1.xpose.msra.mxu0 0.0
    %3632 = vmatprep.subr.mxu0 0.0
    %3633 = vmatpush1.xpose.msra.mxu0 0.0
    %3634 = vmatprep.subr.mxu0 0.0
    %3635 = vmatpush1.xpose.msra.mxu0 0.0
    %3636 = vmatprep.subr.mxu0 0.0
    %3637 = vmatpush1.xpose.msra.mxu0 0.0
    %3638 = vmatprep.subr.mxu0 0.0
    %3639 = vmatpush1.xpose.msra.mxu0 0.0
    %3640 = vmatprep.subr.mxu0 0.0
    %3641 = vmatpush1.xpose.msra.mxu0 0.0
    %3642 = vmatprep.subr.mxu0 0.0
    %3643 = vmatpush1.xpose.msra.mxu0 0.0
    %3644 = vmatprep.subr.mxu0 0.0
    %3645 = vmatpush1.xpose.msra.mxu0 0.0
    %3646 = vmatprep.subr.mxu0 0.0
    %3647 = vmatpush1.xpose.msra.mxu0 0.0
    %3648 = vmatprep.subr.mxu0 0.0
    %3649 = vmatpush1.xpose.msra.mxu0 0.0
    %3650 = vmatprep.subr.mxu0 0.0
    %3651 = vmatpush1.xpose.msra.mxu0 0.0
    %3652 = vmatprep.subr.mxu0 0.0
    %3653 = vmatpush1.xpose.msra.mxu0 0.0
    %3654 = vmatprep.subr.mxu0 0.0
    %3655 = vmatpush1.xpose.msra.mxu0 0.0
    %3656 = vmatprep.subr.mxu0 0.0
    %3657 = vmatpush1.xpose.msra.mxu0 0.0
    %3658 = vmatprep.subr.mxu0 0.0
    %3659 = vmatpush1.xpose.msra.mxu0 0.0
    %3660 = vmatprep.subr.mxu0 0.0
    %3661 = vmatpush1.xpose.msra.mxu0 0.0
    %3662 = vmatprep.subr.mxu0 0.0
    %3663 = vmatpush1.xpose.msra.mxu0 0.0
    %3664 = vmatprep.subr.mxu0 0.0
    %3665 = vmatpush1.xpose.msra.mxu0 0.0
    %3666 = vmatprep.mubr.f32.mxu0 0.0
    %3667 = vmatmul.mubr.f32.gmra.mrb[0].mxu0 %v3598
    %v3668 = vpop.f32.mrb[0].mxu0
    %v3669 = vadd.f32 0.0, %v3668
    %v3670 = vpop.f32.mrb[0].mxu0
    %3671 = vdwg.mxu0
    %v3672 = vsel %vm929, %v3591, -inf
    %3673 = vmax.xlane.f32.xlu0 %v3672
    %v3674 = vpop.xlane.xlu0 %3673
    %v3675 = vsel %vm929, %v3669, -inf
    %3676 = vmax.xlane.f32.xlu0 %v3675
    %v3677 = vpop.xlane.xlu0 %3676
    %v3678 = vsub.f32 %v3591, %v3674
    %v3679 = vsub.f32 %v3669, %v3677
    %v3680 = vmul.f32 %v3678, 1.442695
    %v3681 = vpow.pop %v3680
    %v3682 = vmul.f32 %v3679, 1.442695
    %v3683 = vpow.pop %v3682
    %v3684 = vsel %vm929, %v3681, 0.0
    %3685 = vadd.xlane.f32.xlu0 %v3684
    %v3686 = vpop.xlane.xlu0 %3685
    %v3687 = vsel %vm929, %v3683, 0.0
    %3688 = vadd.xlane.f32.xlu0 %v3687
    %v3689 = vpop.xlane.xlu0 %3688
    %v3690 = vrcp.pop %v3686
    %v3691 = vrcp.pop %v3689
    %v3692 = vmul.f32 %v3681, %v3690
    %v3693 = vmul.f32 %v3683, %v3691
    %v3694 = vadd.f32 %v3360, %v3692
    %v3695 = vadd.f32 %v3361, %v3693
    %3696 = vrot.lane.b32.xlu0 %v2774, 48
    %v3697 = vpop.permute.xlu0 %3696
    %v3699 = vsel %vm954, %v3692, 0
    %v3701 = vsel %vm958, %v3697, 0
    %3703 = vmatprep.subr.mxu0 0.0
    %3704 = vmatpush1.msra.mxu0 %v3701
    %3705 = vmatprep.subr.mxu0 0.0
    %3706 = vmatpush1.msra.mxu0 0.0
    %3707 = vmatprep.subr.mxu0 0.0
    %3708 = vmatpush1.msra.mxu0 0.0
    %3709 = vmatprep.subr.mxu0 0.0
    %3710 = vmatpush1.msra.mxu0 0.0
    %3711 = vmatprep.subr.mxu0 0.0
    %3712 = vmatpush1.msra.mxu0 0.0
    %3713 = vmatprep.subr.mxu0 0.0
    %3714 = vmatpush1.msra.mxu0 0.0
    %3715 = vmatprep.subr.mxu0 0.0
    %3716 = vmatpush1.msra.mxu0 0.0
    %3717 = vmatprep.subr.mxu0 0.0
    %3718 = vmatpush1.msra.mxu0 0.0
    %3719 = vmatprep.subr.mxu0 0.0
    %3720 = vmatpush1.msra.mxu0 0.0
    %3721 = vmatprep.subr.mxu0 0.0
    %3722 = vmatpush1.msra.mxu0 0.0
    %3723 = vmatprep.subr.mxu0 0.0
    %3724 = vmatpush1.msra.mxu0 0.0
    %3725 = vmatprep.subr.mxu0 0.0
    %3726 = vmatpush1.msra.mxu0 0.0
    %3727 = vmatprep.subr.mxu0 0.0
    %3728 = vmatpush1.msra.mxu0 0.0
    %3729 = vmatprep.subr.mxu0 0.0
    %3730 = vmatpush1.msra.mxu0 0.0
    %3731 = vmatprep.subr.mxu0 0.0
    %3732 = vmatpush1.msra.mxu0 0.0
    %3733 = vmatprep.subr.mxu0 0.0
    %3734 = vmatpush1.msra.mxu0 0.0
    %3735 = vmatprep.subr.mxu0 0.0
    %3736 = vmatpush1.msra.mxu0 0.0
    %3737 = vmatprep.subr.mxu0 0.0
    %3738 = vmatpush1.msra.mxu0 0.0
    %3739 = vmatprep.subr.mxu0 0.0
    %3740 = vmatpush1.msra.mxu0 0.0
    %3741 = vmatprep.subr.mxu0 0.0
    %3742 = vmatpush1.msra.mxu0 0.0
    %3743 = vmatprep.subr.mxu0 0.0
    %3744 = vmatpush1.msra.mxu0 0.0
    %3745 = vmatprep.subr.mxu0 0.0
    %3746 = vmatpush1.msra.mxu0 0.0
    %3747 = vmatprep.subr.mxu0 0.0
    %3748 = vmatpush1.msra.mxu0 0.0
    %3749 = vmatprep.subr.mxu0 0.0
    %3750 = vmatpush1.msra.mxu0 0.0
    %3751 = vmatprep.subr.mxu0 0.0
    %3752 = vmatpush1.msra.mxu0 0.0
    %3753 = vmatprep.subr.mxu0 0.0
    %3754 = vmatpush1.msra.mxu0 0.0
    %3755 = vmatprep.subr.mxu0 0.0
    %3756 = vmatpush1.msra.mxu0 0.0
    %3757 = vmatprep.subr.mxu0 0.0
    %3758 = vmatpush1.msra.mxu0 0.0
    %3759 = vmatprep.subr.mxu0 0.0
    %3760 = vmatpush1.msra.mxu0 0.0
    %3761 = vmatprep.subr.mxu0 0.0
    %3762 = vmatpush1.msra.mxu0 0.0
    %3763 = vmatprep.subr.mxu0 0.0
    %3764 = vmatpush1.msra.mxu0 0.0
    %3765 = vmatprep.subr.mxu0 0.0
    %3766 = vmatpush1.msra.mxu0 0.0
    %3767 = vmatprep.mubr.f32.mxu0 0.0
    %3768 = vmatmul.mubr.f32.gmra.mrb[0].mxu0 %v3699
    %v3769 = vpop.f32.mrb[0].mxu0
    %v3770 = vadd.f32 0.0, %v3769
    %v3771 = vpop.f32.mrb[0].mxu0
    %3772 = vdwg.mxu0
    %3773 = vrot.lane.b32.xlu0 %v2847, 48
    %v3774 = vpop.permute.xlu0 %3773
    %v3776 = vsel %vm954, %v3693, 0
    %v3778 = vsel %vm958, %v3774, 0
    %3780 = vmatprep.subr.mxu0 0.0
    %3781 = vmatpush1.msra.mxu0 %v3778
    %3782 = vmatprep.subr.mxu0 0.0
    %3783 = vmatpush1.msra.mxu0 0.0
    %3784 = vmatprep.subr.mxu0 0.0
    %3785 = vmatpush1.msra.mxu0 0.0
    %3786 = vmatprep.subr.mxu0 0.0
    %3787 = vmatpush1.msra.mxu0 0.0
    %3788 = vmatprep.subr.mxu0 0.0
    %3789 = vmatpush1.msra.mxu0 0.0
    %3790 = vmatprep.subr.mxu0 0.0
    %3791 = vmatpush1.msra.mxu0 0.0
    %3792 = vmatprep.subr.mxu0 0.0
    %3793 = vmatpush1.msra.mxu0 0.0
    %3794 = vmatprep.subr.mxu0 0.0
    %3795 = vmatpush1.msra.mxu0 0.0
    %3796 = vmatprep.subr.mxu0 0.0
    %3797 = vmatpush1.msra.mxu0 0.0
    %3798 = vmatprep.subr.mxu0 0.0
    %3799 = vmatpush1.msra.mxu0 0.0
    %3800 = vmatprep.subr.mxu0 0.0
    %3801 = vmatpush1.msra.mxu0 0.0
    %3802 = vmatprep.subr.mxu0 0.0
    %3803 = vmatpush1.msra.mxu0 0.0
    %3804 = vmatprep.subr.mxu0 0.0
    %3805 = vmatpush1.msra.mxu0 0.0
    %3806 = vmatprep.subr.mxu0 0.0
    %3807 = vmatpush1.msra.mxu0 0.0
    %3808 = vmatprep.subr.mxu0 0.0
    %3809 = vmatpush1.msra.mxu0 0.0
    %3810 = vmatprep.subr.mxu0 0.0
    %3811 = vmatpush1.msra.mxu0 0.0
    %3812 = vmatprep.subr.mxu0 0.0
    %3813 = vmatpush1.msra.mxu0 0.0
    %3814 = vmatprep.subr.mxu0 0.0
    %3815 = vmatpush1.msra.mxu0 0.0
    %3816 = vmatprep.subr.mxu0 0.0
    %3817 = vmatpush1.msra.mxu0 0.0
    %3818 = vmatprep.subr.mxu0 0.0
    %3819 = vmatpush1.msra.mxu0 0.0
    %3820 = vmatprep.subr.mxu0 0.0
    %3821 = vmatpush1.msra.mxu0 0.0
    %3822 = vmatprep.subr.mxu0 0.0
    %3823 = vmatpush1.msra.mxu0 0.0
    %3824 = vmatprep.subr.mxu0 0.0
    %3825 = vmatpush1.msra.mxu0 0.0
    %3826 = vmatprep.subr.mxu0 0.0
    %3827 = vmatpush1.msra.mxu0 0.0
    %3828 = vmatprep.subr.mxu0 0.0
    %3829 = vmatpush1.msra.mxu0 0.0
    %3830 = vmatprep.subr.mxu0 0.0
    %3831 = vmatpush1.msra.mxu0 0.0
    %3832 = vmatprep.subr.mxu0 0.0
    %3833 = vmatpush1.msra.mxu0 0.0
    %3834 = vmatprep.subr.mxu0 0.0
    %3835 = vmatpush1.msra.mxu0 0.0
    %3836 = vmatprep.subr.mxu0 0.0
    %3837 = vmatpush1.msra.mxu0 0.0
    %3838 = vmatprep.subr.mxu0 0.0
    %3839 = vmatpush1.msra.mxu0 0.0
    %3840 = vmatprep.subr.mxu0 0.0
    %3841 = vmatpush1.msra.mxu0 0.0
    %3842 = vmatprep.subr.mxu0 0.0
    %3843 = vmatpush1.msra.mxu0 0.0
    %3844 = vmatprep.mubr.f32.mxu0 0.0
    %3845 = vmatmul.mubr.f32.gmra.mrb[0].mxu0 %v3776
    %v3846 = vpop.f32.mrb[0].mxu0
    %v3847 = vadd.f32 0.0, %v3846
    %v3848 = vpop.f32.mrb[0].mxu0
    %3849 = vdwg.mxu0
    %3850 = vrot.lane.b32.xlu0 %v2774, 104
    %v3851 = vpop.permute.xlu0 %3850
    %3852 = vrot.lane.b32.xlu0 %v2774, 72
    %v3853 = vpop.permute.xlu0 %3852
    %v3854 = vsel %vm777, %v3851, 0
    %v3856 = vsel %vm777, %v3853, 0
    %3858 = vmatprep.subr.mxu0 0.0
    %3859 = vmatpush1.xpose.msra.mxu0 %v3856
    %3860 = vmatprep.subr.mxu0 0.0
    %3861 = vmatpush1.xpose.msra.mxu0 0.0
    %3862 = vmatprep.subr.mxu0 0.0
    %3863 = vmatpush1.xpose.msra.mxu0 0.0
    %3864 = vmatprep.subr.mxu0 0.0
    %3865 = vmatpush1.xpose.msra.mxu0 0.0
    %3866 = vmatprep.subr.mxu0 0.0
    %3867 = vmatpush1.xpose.msra.mxu0 0.0
    %3868 = vmatprep.subr.mxu0 0.0
    %3869 = vmatpush1.xpose.msra.mxu0 0.0
    %3870 = vmatprep.subr.mxu0 0.0
    %3871 = vmatpush1.xpose.msra.mxu0 0.0
    %3872 = vmatprep.subr.mxu0 0.0
    %3873 = vmatpush1.xpose.msra.mxu0 0.0
    %3874 = vmatprep.subr.mxu0 0.0
    %3875 = vmatpush1.xpose.msra.mxu0 0.0
    %3876 = vmatprep.subr.mxu0 0.0
    %3877 = vmatpush1.xpose.msra.mxu0 0.0
    %3878 = vmatprep.subr.mxu0 0.0
    %3879 = vmatpush1.xpose.msra.mxu0 0.0
    %3880 = vmatprep.subr.mxu0 0.0
    %3881 = vmatpush1.xpose.msra.mxu0 0.0
    %3882 = vmatprep.subr.mxu0 0.0
    %3883 = vmatpush1.xpose.msra.mxu0 0.0
    %3884 = vmatprep.subr.mxu0 0.0
    %3885 = vmatpush1.xpose.msra.mxu0 0.0
    %3886 = vmatprep.subr.mxu0 0.0
    %3887 = vmatpush1.xpose.msra.mxu0 0.0
    %3888 = vmatprep.subr.mxu0 0.0
    %3889 = vmatpush1.xpose.msra.mxu0 0.0
    %3890 = vmatprep.subr.mxu0 0.0
    %3891 = vmatpush1.xpose.msra.mxu0 0.0
    %3892 = vmatprep.subr.mxu0 0.0
    %3893 = vmatpush1.xpose.msra.mxu0 0.0
    %3894 = vmatprep.subr.mxu0 0.0
    %3895 = vmatpush1.xpose.msra.mxu0 0.0
    %3896 = vmatprep.subr.mxu0 0.0
    %3897 = vmatpush1.xpose.msra.mxu0 0.0
    %3898 = vmatprep.subr.mxu0 0.0
    %3899 = vmatpush1.xpose.msra.mxu0 0.0
    %3900 = vmatprep.subr.mxu0 0.0
    %3901 = vmatpush1.xpose.msra.mxu0 0.0
    %3902 = vmatprep.subr.mxu0 0.0
    %3903 = vmatpush1.xpose.msra.mxu0 0.0
    %3904 = vmatprep.subr.mxu0 0.0
    %3905 = vmatpush1.xpose.msra.mxu0 0.0
    %3906 = vmatprep.subr.mxu0 0.0
    %3907 = vmatpush1.xpose.msra.mxu0 0.0
    %3908 = vmatprep.subr.mxu0 0.0
    %3909 = vmatpush1.xpose.msra.mxu0 0.0
    %3910 = vmatprep.subr.mxu0 0.0
    %3911 = vmatpush1.xpose.msra.mxu0 0.0
    %3912 = vmatprep.subr.mxu0 0.0
    %3913 = vmatpush1.xpose.msra.mxu0 0.0
    %3914 = vmatprep.subr.mxu0 0.0
    %3915 = vmatpush1.xpose.msra.mxu0 0.0
    %3916 = vmatprep.subr.mxu0 0.0
    %3917 = vmatpush1.xpose.msra.mxu0 0.0
    %3918 = vmatprep.subr.mxu0 0.0
    %3919 = vmatpush1.xpose.msra.mxu0 0.0
    %3920 = vmatprep.subr.mxu0 0.0
    %3921 = vmatpush1.xpose.msra.mxu0 0.0
    %3922 = vmatprep.mubr.f32.mxu0 0.0
    %3923 = vmatmul.mubr.f32.gmra.mrb[0].mxu0 %v3854
    %v3924 = vpop.f32.mrb[0].mxu0
    %v3925 = vadd.f32 0.0, %v3924
    %v3926 = vpop.f32.mrb[0].mxu0
    %3927 = vdwg.mxu0
    %3928 = vrot.lane.b32.xlu0 %v2847, 104
    %v3929 = vpop.permute.xlu0 %3928
    %3930 = vrot.lane.b32.xlu0 %v2847, 72
    %v3931 = vpop.permute.xlu0 %3930
    %v3932 = vsel %vm777, %v3929, 0
    %v3934 = vsel %vm777, %v3931, 0
    %3936 = vmatprep.subr.mxu0 0.0
    %3937 = vmatpush1.xpose.msra.mxu0 %v3934
    %3938 = vmatprep.subr.mxu0 0.0
    %3939 = vmatpush1.xpose.msra.mxu0 0.0
    %3940 = vmatprep.subr.mxu0 0.0
    %3941 = vmatpush1.xpose.msra.mxu0 0.0
    %3942 = vmatprep.subr.mxu0 0.0
    %3943 = vmatpush1.xpose.msra.mxu0 0.0
    %3944 = vmatprep.subr.mxu0 0.0
    %3945 = vmatpush1.xpose.msra.mxu0 0.0
    %3946 = vmatprep.subr.mxu0 0.0
    %3947 = vmatpush1.xpose.msra.mxu0 0.0
    %3948 = vmatprep.subr.mxu0 0.0
    %3949 = vmatpush1.xpose.msra.mxu0 0.0
    %3950 = vmatprep.subr.mxu0 0.0
    %3951 = vmatpush1.xpose.msra.mxu0 0.0
    %3952 = vmatprep.subr.mxu0 0.0
    %3953 = vmatpush1.xpose.msra.mxu0 0.0
    %3954 = vmatprep.subr.mxu0 0.0
    %3955 = vmatpush1.xpose.msra.mxu0 0.0
    %3956 = vmatprep.subr.mxu0 0.0
    %3957 = vmatpush1.xpose.msra.mxu0 0.0
    %3958 = vmatprep.subr.mxu0 0.0
    %3959 = vmatpush1.xpose.msra.mxu0 0.0
    %3960 = vmatprep.subr.mxu0 0.0
    %3961 = vmatpush1.xpose.msra.mxu0 0.0
    %3962 = vmatprep.subr.mxu0 0.0
    %3963 = vmatpush1.xpose.msra.mxu0 0.0
    %3964 = vmatprep.subr.mxu0 0.0
    %3965 = vmatpush1.xpose.msra.mxu0 0.0
    %3966 = vmatprep.subr.mxu0 0.0
    %3967 = vmatpush1.xpose.msra.mxu0 0.0
    %3968 = vmatprep.subr.mxu0 0.0
    %3969 = vmatpush1.xpose.msra.mxu0 0.0
    %3970 = vmatprep.subr.mxu0 0.0
    %3971 = vmatpush1.xpose.msra.mxu0 0.0
    %3972 = vmatprep.subr.mxu0 0.0
    %3973 = vmatpush1.xpose.msra.mxu0 0.0
    %3974 = vmatprep.subr.mxu0 0.0
    %3975 = vmatpush1.xpose.msra.mxu0 0.0
    %3976 = vmatprep.subr.mxu0 0.0
    %3977 = vmatpush1.xpose.msra.mxu0 0.0
    %3978 = vmatprep.subr.mxu0 0.0
    %3979 = vmatpush1.xpose.msra.mxu0 0.0
    %3980 = vmatprep.subr.mxu0 0.0
    %3981 = vmatpush1.xpose.msra.mxu0 0.0
    %3982 = vmatprep.subr.mxu0 0.0
    %3983 = vmatpush1.xpose.msra.mxu0 0.0
    %3984 = vmatprep.subr.mxu0 0.0
    %3985 = vmatpush1.xpose.msra.mxu0 0.0
    %3986 = vmatprep.subr.mxu0 0.0
    %3987 = vmatpush1.xpose.msra.mxu0 0.0
    %3988 = vmatprep.subr.mxu0 0.0
    %3989 = vmatpush1.xpose.msra.mxu0 0.0
    %3990 = vmatprep.subr.mxu0 0.0
    %3991 = vmatpush1.xpose.msra.mxu0 0.0
    %3992 = vmatprep.subr.mxu0 0.0
    %3993 = vmatpush1.xpose.msra.mxu0 0.0
    %3994 = vmatprep.subr.mxu0 0.0
    %3995 = vmatpush1.xpose.msra.mxu0 0.0
    %3996 = vmatprep.subr.mxu0 0.0
    %3997 = vmatpush1.xpose.msra.mxu0 0.0
    %3998 = vmatprep.subr.mxu0 0.0
    %3999 = vmatpush1.xpose.msra.mxu0 0.0
    %4000 = vmatprep.mubr.f32.mxu0 0.0
    %4001 = vmatmul.mubr.f32.gmra.mrb[0].mxu0 %v3932
    %v4002 = vpop.f32.mrb[0].mxu0
    %v4003 = vadd.f32 0.0, %v4002
    %v4004 = vpop.f32.mrb[0].mxu0
    %4005 = vdwg.mxu0
    %v4006 = vsel %vm929, %v3925, -inf
    %4007 = vmax.xlane.f32.xlu0 %v4006
    %v4008 = vpop.xlane.xlu0 %4007
    %v4009 = vsel %vm929, %v4003, -inf
    %4010 = vmax.xlane.f32.xlu0 %v4009
    %v4011 = vpop.xlane.xlu0 %4010
    %v4012 = vsub.f32 %v3925, %v4008
    %v4013 = vsub.f32 %v4003, %v4011
    %v4014 = vmul.f32 %v4012, 1.442695
    %v4015 = vpow.pop %v4014
    %v4016 = vmul.f32 %v4013, 1.442695
    %v4017 = vpow.pop %v4016
    %v4018 = vsel %vm929, %v4015, 0.0
    %4019 = vadd.xlane.f32.xlu0 %v4018
    %v4020 = vpop.xlane.xlu0 %4019
    %v4021 = vsel %vm929, %v4017, 0.0
    %4022 = vadd.xlane.f32.xlu0 %v4021
    %v4023 = vpop.xlane.xlu0 %4022
    %v4024 = vrcp.pop %v4020
    %v4025 = vrcp.pop %v4023
    %v4026 = vmul.f32 %v4015, %v4024
    %v4027 = vmul.f32 %v4017, %v4025
    %v4028 = vadd.f32 %v3694, %v4026
    %v4029 = vadd.f32 %v3695, %v4027
    %4030 = vrot.lane.b32.xlu0 %v2774, 40
    %v4031 = vpop.permute.xlu0 %4030
    %v4033 = vsel %vm954, %v4026, 0
    %v4035 = vsel %vm958, %v4031, 0
    %4037 = vmatprep.subr.mxu0 0.0
    %4038 = vmatpush1.msra.mxu0 %v4035
    %4039 = vmatprep.subr.mxu0 0.0
    %4040 = vmatpush1.msra.mxu0 0.0
    %4041 = vmatprep.subr.mxu0 0.0
    %4042 = vmatpush1.msra.mxu0 0.0
    %4043 = vmatprep.subr.mxu0 0.0
    %4044 = vmatpush1.msra.mxu0 0.0
    %4045 = vmatprep.subr.mxu0 0.0
    %4046 = vmatpush1.msra.mxu0 0.0
    %4047 = vmatprep.subr.mxu0 0.0
    %4048 = vmatpush1.msra.mxu0 0.0
    %4049 = vmatprep.subr.mxu0 0.0
    %4050 = vmatpush1.msra.mxu0 0.0
    %4051 = vmatprep.subr.mxu0 0.0
    %4052 = vmatpush1.msra.mxu0 0.0
    %4053 = vmatprep.subr.mxu0 0.0
    %4054 = vmatpush1.msra.mxu0 0.0
    %4055 = vmatprep.subr.mxu0 0.0
    %4056 = vmatpush1.msra.mxu0 0.0
    %4057 = vmatprep.subr.mxu0 0.0
    %4058 = vmatpush1.msra.mxu0 0.0
    %4059 = vmatprep.subr.mxu0 0.0
    %4060 = vmatpush1.msra.mxu0 0.0
    %4061 = vmatprep.subr.mxu0 0.0
    %4062 = vmatpush1.msra.mxu0 0.0
    %4063 = vmatprep.subr.mxu0 0.0
    %4064 = vmatpush1.msra.mxu0 0.0
    %4065 = vmatprep.subr.mxu0 0.0
    %4066 = vmatpush1.msra.mxu0 0.0
    %4067 = vmatprep.subr.mxu0 0.0
    %4068 = vmatpush1.msra.mxu0 0.0
    %4069 = vmatprep.subr.mxu0 0.0
    %4070 = vmatpush1.msra.mxu0 0.0
    %4071 = vmatprep.subr.mxu0 0.0
    %4072 = vmatpush1.msra.mxu0 0.0
    %4073 = vmatprep.subr.mxu0 0.0
    %4074 = vmatpush1.msra.mxu0 0.0
    %4075 = vmatprep.subr.mxu0 0.0
    %4076 = vmatpush1.msra.mxu0 0.0
    %4077 = vmatprep.subr.mxu0 0.0
    %4078 = vmatpush1.msra.mxu0 0.0
    %4079 = vmatprep.subr.mxu0 0.0
    %4080 = vmatpush1.msra.mxu0 0.0
    %4081 = vmatprep.subr.mxu0 0.0
    %4082 = vmatpush1.msra.mxu0 0.0
    %4083 = vmatprep.subr.mxu0 0.0
    %4084 = vmatpush1.msra.mxu0 0.0
    %4085 = vmatprep.subr.mxu0 0.0
    %4086 = vmatpush1.msra.mxu0 0.0
    %4087 = vmatprep.subr.mxu0 0.0
    %4088 = vmatpush1.msra.mxu0 0.0
    %4089 = vmatprep.subr.mxu0 0.0
    %4090 = vmatpush1.msra.mxu0 0.0
    %4091 = vmatprep.subr.mxu0 0.0
    %4092 = vmatpush1.msra.mxu0 0.0
    %4093 = vmatprep.subr.mxu0 0.0
    %4094 = vmatpush1.msra.mxu0 0.0
    %4095 = vmatprep.subr.mxu0 0.0
    %4096 = vmatpush1.msra.mxu0 0.0
    %4097 = vmatprep.subr.mxu0 0.0
    %4098 = vmatpush1.msra.mxu0 0.0
    %4099 = vmatprep.subr.mxu0 0.0
    %4100 = vmatpush1.msra.mxu0 0.0
    %4101 = vmatprep.mubr.f32.mxu0 0.0
    %4102 = vmatmul.mubr.f32.gmra.mrb[0].mxu0 %v4033
    %v4103 = vpop.f32.mrb[0].mxu0
    %v4104 = vadd.f32 0.0, %v4103
    %v4105 = vpop.f32.mrb[0].mxu0
    %4106 = vdwg.mxu0
    %4107 = vrot.lane.b32.xlu0 %v2847, 40
    %v4108 = vpop.permute.xlu0 %4107
    %v4110 = vsel %vm954, %v4027, 0
    %v4112 = vsel %vm958, %v4108, 0
    %4114 = vmatprep.subr.mxu0 0.0
    %4115 = vmatpush1.msra.mxu0 %v4112
    %4116 = vmatprep.subr.mxu0 0.0
    %4117 = vmatpush1.msra.mxu0 0.0
    %4118 = vmatprep.subr.mxu0 0.0
    %4119 = vmatpush1.msra.mxu0 0.0
    %4120 = vmatprep.subr.mxu0 0.0
    %4121 = vmatpush1.msra.mxu0 0.0
    %4122 = vmatprep.subr.mxu0 0.0
    %4123 = vmatpush1.msra.mxu0 0.0
    %4124 = vmatprep.subr.mxu0 0.0
    %4125 = vmatpush1.msra.mxu0 0.0
    %4126 = vmatprep.subr.mxu0 0.0
    %4127 = vmatpush1.msra.mxu0 0.0
    %4128 = vmatprep.subr.mxu0 0.0
    %4129 = vmatpush1.msra.mxu0 0.0
    %4130 = vmatprep.subr.mxu0 0.0
    %4131 = vmatpush1.msra.mxu0 0.0
    %4132 = vmatprep.subr.mxu0 0.0
    %4133 = vmatpush1.msra.mxu0 0.0
    %4134 = vmatprep.subr.mxu0 0.0
    %4135 = vmatpush1.msra.mxu0 0.0
    %4136 = vmatprep.subr.mxu0 0.0
    %4137 = vmatpush1.msra.mxu0 0.0
    %4138 = vmatprep.subr.mxu0 0.0
    %4139 = vmatpush1.msra.mxu0 0.0
    %4140 = vmatprep.subr.mxu0 0.0
    %4141 = vmatpush1.msra.mxu0 0.0
    %4142 = vmatprep.subr.mxu0 0.0
    %4143 = vmatpush1.msra.mxu0 0.0
    %4144 = vmatprep.subr.mxu0 0.0
    %4145 = vmatpush1.msra.mxu0 0.0
    %4146 = vmatprep.subr.mxu0 0.0
    %4147 = vmatpush1.msra.mxu0 0.0
    %4148 = vmatprep.subr.mxu0 0.0
    %4149 = vmatpush1.msra.mxu0 0.0
    %4150 = vmatprep.subr.mxu0 0.0
    %4151 = vmatpush1.msra.mxu0 0.0
    %4152 = vmatprep.subr.mxu0 0.0
    %4153 = vmatpush1.msra.mxu0 0.0
    %4154 = vmatprep.subr.mxu0 0.0
    %4155 = vmatpush1.msra.mxu0 0.0
    %4156 = vmatprep.subr.mxu0 0.0
    %4157 = vmatpush1.msra.mxu0 0.0
    %4158 = vmatprep.subr.mxu0 0.0
    %4159 = vmatpush1.msra.mxu0 0.0
    %4160 = vmatprep.subr.mxu0 0.0
    %4161 = vmatpush1.msra.mxu0 0.0
    %4162 = vmatprep.subr.mxu0 0.0
    %4163 = vmatpush1.msra.mxu0 0.0
    %4164 = vmatprep.subr.mxu0 0.0
    %4165 = vmatpush1.msra.mxu0 0.0
    %4166 = vmatprep.subr.mxu0 0.0
    %4167 = vmatpush1.msra.mxu0 0.0
    %4168 = vmatprep.subr.mxu0 0.0
    %4169 = vmatpush1.msra.mxu0 0.0
    %4170 = vmatprep.subr.mxu0 0.0
    %4171 = vmatpush1.msra.mxu0 0.0
    %4172 = vmatprep.subr.mxu0 0.0
    %4173 = vmatpush1.msra.mxu0 0.0
    %4174 = vmatprep.subr.mxu0 0.0
    %4175 = vmatpush1.msra.mxu0 0.0
    %4176 = vmatprep.subr.mxu0 0.0
    %4177 = vmatpush1.msra.mxu0 0.0
    %4178 = vmatprep.mubr.f32.mxu0 0.0
    %4179 = vmatmul.mubr.f32.gmra.mrb[0].mxu0 %v4110
    %v4180 = vpop.f32.mrb[0].mxu0
    %v4181 = vadd.f32 0.0, %v4180
    %v4182 = vpop.f32.mrb[0].mxu0
    %4183 = vdwg.mxu0
    %v4184 = vmul.f32 %v4028, 0.25
    %v4185 = vmul.f32 %v4029, 0.25
    %4188 = vrot.lane.b32.xlu0 %v3436, 8
    %v4189 = vpop.permute.xlu0 %4188
    %4190 = vrot.lane.b32.xlu0 %v3513, 8
    %v4191 = vpop.permute.xlu0 %4190
    %4196 = vrot.lane.b32.xlu0 %v3770, 16
    %v4197 = vpop.permute.xlu0 %4196
    %4198 = vrot.lane.b32.xlu0 %v3847, 16
    %v4199 = vpop.permute.xlu0 %4198
    %4204 = vrot.lane.b32.xlu0 %v4104, 24
    %v4205 = vpop.permute.xlu0 %4204
    %4206 = vrot.lane.b32.xlu0 %v4181, 24
    %v4207 = vpop.permute.xlu0 %4206
    %v4210 = vsel %vm777, %v3102, %v4189
    %v4211 = vsel %vm777, %v3179, %v4191
    %v4212 = vsel %vm2130, %v4210, %v4197
    %v4213 = vsel %vm2130, %v4211, %v4199
    %v4214 = vsel %vm2133, %v4212, %v4205
    %v4215 = vsel %vm2133, %v4213, %v4207
    %s4216 = scalar_lea.vmem %s5, 32
    %v4217 = vld [vmem:[%s4216] sm:$0xff]
    %v4218 = vld [vmem:[%s4216 + $0x8] sm:$0xff]
    %v4219 = vld [vmem:[%s4216 + $0x10] sm:$0xff]
    %v4220 = vld [vmem:[%s4216 + $0x18] sm:$0xff]
    %v4222 = vsel %vm627, %v4214, 0
    %4224 = vmatprep.subr.mxu0 0.0
    %4225 = vmatpush1.msra.mxu0 %v4217
    %4226 = vmatprep.subr.mxu0 0.0
    %4227 = vmatpush1.msra.mxu0 %v4218
    %4228 = vmatprep.subr.mxu0 0.0
    %4229 = vmatpush1.msra.mxu0 %v4219
    %4230 = vmatprep.subr.mxu0 0.0
    %4231 = vmatpush1.msra.mxu0 %v4220
    %4232 = vmatprep.subr.mxu0 0.0
    %4233 = vmatpush1.msra.mxu0 0.0
    %4234 = vmatprep.subr.mxu0 0.0
    %4235 = vmatpush1.msra.mxu0 0.0
    %4236 = vmatprep.subr.mxu0 0.0
    %4237 = vmatpush1.msra.mxu0 0.0
    %4238 = vmatprep.subr.mxu0 0.0
    %4239 = vmatpush1.msra.mxu0 0.0
    %4240 = vmatprep.subr.mxu0 0.0
    %4241 = vmatpush1.msra.mxu0 0.0
    %4242 = vmatprep.subr.mxu0 0.0
    %4243 = vmatpush1.msra.mxu0 0.0
    %4244 = vmatprep.subr.mxu0 0.0
    %4245 = vmatpush1.msra.mxu0 0.0
    %4246 = vmatprep.subr.mxu0 0.0
    %4247 = vmatpush1.msra.mxu0 0.0
    %4248 = vmatprep.subr.mxu0 0.0
    %4249 = vmatpush1.msra.mxu0 0.0
    %4250 = vmatprep.subr.mxu0 0.0
    %4251 = vmatpush1.msra.mxu0 0.0
    %4252 = vmatprep.subr.mxu0 0.0
    %4253 = vmatpush1.msra.mxu0 0.0
    %4254 = vmatprep.subr.mxu0 0.0
    %4255 = vmatpush1.msra.mxu0 0.0
    %4256 = vmatprep.subr.mxu0 0.0
    %4257 = vmatpush1.msra.mxu0 0.0
    %4258 = vmatprep.subr.mxu0 0.0
    %4259 = vmatpush1.msra.mxu0 0.0
    %4260 = vmatprep.subr.mxu0 0.0
    %4261 = vmatpush1.msra.mxu0 0.0
    %4262 = vmatprep.subr.mxu0 0.0
    %4263 = vmatpush1.msra.mxu0 0.0
    %4264 = vmatprep.subr.mxu0 0.0
    %4265 = vmatpush1.msra.mxu0 0.0
    %4266 = vmatprep.subr.mxu0 0.0
    %4267 = vmatpush1.msra.mxu0 0.0
    %4268 = vmatprep.subr.mxu0 0.0
    %4269 = vmatpush1.msra.mxu0 0.0
    %4270 = vmatprep.subr.mxu0 0.0
    %4271 = vmatpush1.msra.mxu0 0.0
    %4272 = vmatprep.subr.mxu0 0.0
    %4273 = vmatpush1.msra.mxu0 0.0
    %4274 = vmatprep.subr.mxu0 0.0
    %4275 = vmatpush1.msra.mxu0 0.0
    %4276 = vmatprep.subr.mxu0 0.0
    %4277 = vmatpush1.msra.mxu0 0.0
    %4278 = vmatprep.subr.mxu0 0.0
    %4279 = vmatpush1.msra.mxu0 0.0
    %4280 = vmatprep.subr.mxu0 0.0
    %4281 = vmatpush1.msra.mxu0 0.0
    %4282 = vmatprep.subr.mxu0 0.0
    %4283 = vmatpush1.msra.mxu0 0.0
    %4284 = vmatprep.subr.mxu0 0.0
    %4285 = vmatpush1.msra.mxu0 0.0
    %4286 = vmatprep.subr.mxu0 0.0
    %4287 = vmatpush1.msra.mxu0 0.0
    %4288 = vmatprep.mubr.f32.mxu0 0.0
    %4289 = vmatmul.mubr.f32.gmra.mrb[0].mxu0 %v4222
    %v4290 = vpop.f32.mrb[0].mxu0
    %v4291 = vadd.f32 0.0, %v4290
    %v4292 = vpop.f32.mrb[0].mxu0
    %4293 = vdwg.mxu0
    %v4295 = vsel %vm627, %v4215, 0
    %4297 = vmatprep.subr.mxu0 0.0
    %4298 = vmatpush1.msra.mxu0 %v4217
    %4299 = vmatprep.subr.mxu0 0.0
    %4300 = vmatpush1.msra.mxu0 %v4218
    %4301 = vmatprep.subr.mxu0 0.0
    %4302 = vmatpush1.msra.mxu0 %v4219
    %4303 = vmatprep.subr.mxu0 0.0
    %4304 = vmatpush1.msra.mxu0 %v4220
    %4305 = vmatprep.subr.mxu0 0.0
    %4306 = vmatpush1.msra.mxu0 0.0
    %4307 = vmatprep.subr.mxu0 0.0
    %4308 = vmatpush1.msra.mxu0 0.0
    %4309 = vmatprep.subr.mxu0 0.0
    %4310 = vmatpush1.msra.mxu0 0.0
    %4311 = vmatprep.subr.mxu0 0.0
    %4312 = vmatpush1.msra.mxu0 0.0
    %4313 = vmatprep.subr.mxu0 0.0
    %4314 = vmatpush1.msra.mxu0 0.0
    %4315 = vmatprep.subr.mxu0 0.0
    %4316 = vmatpush1.msra.mxu0 0.0
    %4317 = vmatprep.subr.mxu0 0.0
    %4318 = vmatpush1.msra.mxu0 0.0
    %4319 = vmatprep.subr.mxu0 0.0
    %4320 = vmatpush1.msra.mxu0 0.0
    %4321 = vmatprep.subr.mxu0 0.0
    %4322 = vmatpush1.msra.mxu0 0.0
    %4323 = vmatprep.subr.mxu0 0.0
    %4324 = vmatpush1.msra.mxu0 0.0
    %4325 = vmatprep.subr.mxu0 0.0
    %4326 = vmatpush1.msra.mxu0 0.0
    %4327 = vmatprep.subr.mxu0 0.0
    %4328 = vmatpush1.msra.mxu0 0.0
    %4329 = vmatprep.subr.mxu0 0.0
    %4330 = vmatpush1.msra.mxu0 0.0
    %4331 = vmatprep.subr.mxu0 0.0
    %4332 = vmatpush1.msra.mxu0 0.0
    %4333 = vmatprep.subr.mxu0 0.0
    %4334 = vmatpush1.msra.mxu0 0.0
    %4335 = vmatprep.subr.mxu0 0.0
    %4336 = vmatpush1.msra.mxu0 0.0
    %4337 = vmatprep.subr.mxu0 0.0
    %4338 = vmatpush1.msra.mxu0 0.0
    %4339 = vmatprep.subr.mxu0 0.0
    %4340 = vmatpush1.msra.mxu0 0.0
    %4341 = vmatprep.subr.mxu0 0.0
    %4342 = vmatpush1.msra.mxu0 0.0
    %4343 = vmatprep.subr.mxu0 0.0
    %4344 = vmatpush1.msra.mxu0 0.0
    %4345 = vmatprep.subr.mxu0 0.0
    %4346 = vmatpush1.msra.mxu0 0.0
    %4347 = vmatprep.subr.mxu0 0.0
    %4348 = vmatpush1.msra.mxu0 0.0
    %4349 = vmatprep.subr.mxu0 0.0
    %4350 = vmatpush1.msra.mxu0 0.0
    %4351 = vmatprep.subr.mxu0 0.0
    %4352 = vmatpush1.msra.mxu0 0.0
    %4353 = vmatprep.subr.mxu0 0.0
    %4354 = vmatpush1.msra.mxu0 0.0
    %4355 = vmatprep.subr.mxu0 0.0
    %4356 = vmatpush1.msra.mxu0 0.0
    %4357 = vmatprep.subr.mxu0 0.0
    %4358 = vmatpush1.msra.mxu0 0.0
    %4359 = vmatprep.subr.mxu0 0.0
    %4360 = vmatpush1.msra.mxu0 0.0
    %4361 = vmatprep.mubr.f32.mxu0 0.0
    %4362 = vmatmul.mubr.f32.gmra.mrb[0].mxu0 %v4295
    %v4363 = vpop.f32.mrb[0].mxu0
    %v4364 = vadd.f32 0.0, %v4363
    %v4365 = vpop.f32.mrb[0].mxu0
    %4366 = vdwg.mxu0
    %v4367 = vadd.f32 %v2663, %v4291
    %v4368 = vadd.f32 %v2664, %v4364
    %s4369 = scalar_lea.vmem %s6, 1
    %v4370 = vld [vmem:[%s4369] sm:$0x1]
    %v4372 = vlaneseq
    %v4373 = vshrl.u32 %v4372, 7
    %v4374 = vsub.s32 0, %v4373
    %v4375 = vrot.slane %v4370, %v4374
    %v4377 = vadd.f32 %v4367, %v4375
    %v4378 = vadd.f32 %v4368, %v4375
    %v4379 = vsel %vm588, %v4377, 0.0
    %4380 = vadd.xlane.f32.xlu0 %v4379
    %v4381 = vpop.xlane.xlu0 %4380
    %v4382 = vsel %vm588, %v4378, 0.0
    %4383 = vadd.xlane.f32.xlu0 %v4382
    %v4384 = vpop.xlane.xlu0 %4383
    %v4385 = vmul.f32 %v4381, %v595
    %v4386 = vmul.f32 %v4384, %v595
    %v4387 = vsub.f32 %v4377, %v4385
    %v4388 = vsub.f32 %v4378, %v4386
    %v4389 = vmul.f32 %v4387, %v4387
    %v4390 = vmul.f32 %v4388, %v4388
    %v4391 = vsel %vm588, %v4389, 0.0
    %4392 = vadd.xlane.f32.xlu0 %v4391
    %v4393 = vpop.xlane.xlu0 %4392
    %v4394 = vsel %vm588, %v4390, 0.0
    %4395 = vadd.xlane.f32.xlu0 %v4394
    %v4396 = vpop.xlane.xlu0 %4395
    %v4397 = vmul.f32 %v4393, %v595
    %v4398 = vmul.f32 %v4396, %v595
    %v4399 = vadd.f32 %v4397, 1e-06
    %v4400 = vadd.f32 %v4398, 1e-06
    %v4401 = vrsqrt.pop %v4399
    %v4402 = vrsqrt.pop %v4400
    %v4403 = vmul.f32 %v4387, %v4401
    %v4404 = vmul.f32 %v4388, %v4402
    %s4405 = scalar_lea.vmem %s7, 32
    %v4406 = vld [vmem:[%s4405] sm:$0xff]
    %v4407 = vld [vmem:[%s4405 + $0x8] sm:$0xff]
    %v4408 = vld [vmem:[%s4405 + $0x10] sm:$0xff]
    %v4409 = vld [vmem:[%s4405 + $0x18] sm:$0xff]
    %s4410 = scalar_lea.vmem %s8, 1
    %v4411 = vld [vmem:[%s4410] sm:$0x1]
    %v4413 = vlaneseq
    %v4414 = vshrl.u32 %v4413, 7
    %v4415 = vsub.s32 0, %v4414
    %v4416 = vrot.slane %v4411, %v4415
    %v4419 = vsel %vm627, %v4403, 0
    %4421 = vmatprep.subr.mxu0 0.0
    %4422 = vmatpush1.msra.mxu0 %v4406
    %4423 = vmatprep.subr.mxu0 0.0
    %4424 = vmatpush1.msra.mxu0 %v4407
    %4425 = vmatprep.subr.mxu0 0.0
    %4426 = vmatpush1.msra.mxu0 %v4408
    %4427 = vmatprep.subr.mxu0 0.0
    %4428 = vmatpush1.msra.mxu0 %v4409
    %4429 = vmatprep.subr.mxu0 0.0
    %4430 = vmatpush1.msra.mxu0 0.0
    %4431 = vmatprep.subr.mxu0 0.0
    %4432 = vmatpush1.msra.mxu0 0.0
    %4433 = vmatprep.subr.mxu0 0.0
    %4434 = vmatpush1.msra.mxu0 0.0
    %4435 = vmatprep.subr.mxu0 0.0
    %4436 = vmatpush1.msra.mxu0 0.0
    %4437 = vmatprep.subr.mxu0 0.0
    %4438 = vmatpush1.msra.mxu0 0.0
    %4439 = vmatprep.subr.mxu0 0.0
    %4440 = vmatpush1.msra.mxu0 0.0
    %4441 = vmatprep.subr.mxu0 0.0
    %4442 = vmatpush1.msra.mxu0 0.0
    %4443 = vmatprep.subr.mxu0 0.0
    %4444 = vmatpush1.msra.mxu0 0.0
    %4445 = vmatprep.subr.mxu0 0.0
    %4446 = vmatpush1.msra.mxu0 0.0
    %4447 = vmatprep.subr.mxu0 0.0
    %4448 = vmatpush1.msra.mxu0 0.0
    %4449 = vmatprep.subr.mxu0 0.0
    %4450 = vmatpush1.msra.mxu0 0.0
    %4451 = vmatprep.subr.mxu0 0.0
    %4452 = vmatpush1.msra.mxu0 0.0
    %4453 = vmatprep.subr.mxu0 0.0
    %4454 = vmatpush1.msra.mxu0 0.0
    %4455 = vmatprep.subr.mxu0 0.0
    %4456 = vmatpush1.msra.mxu0 0.0
    %4457 = vmatprep.subr.mxu0 0.0
    %4458 = vmatpush1.msra.mxu0 0.0
    %4459 = vmatprep.subr.mxu0 0.0
    %4460 = vmatpush1.msra.mxu0 0.0
    %4461 = vmatprep.subr.mxu0 0.0
    %4462 = vmatpush1.msra.mxu0 0.0
    %4463 = vmatprep.subr.mxu0 0.0
    %4464 = vmatpush1.msra.mxu0 0.0
    %4465 = vmatprep.subr.mxu0 0.0
    %4466 = vmatpush1.msra.mxu0 0.0
    %4467 = vmatprep.subr.mxu0 0.0
    %4468 = vmatpush1.msra.mxu0 0.0
    %4469 = vmatprep.subr.mxu0 0.0
    %4470 = vmatpush1.msra.mxu0 0.0
    %4471 = vmatprep.subr.mxu0 0.0
    %4472 = vmatpush1.msra.mxu0 0.0
    %4473 = vmatprep.subr.mxu0 0.0
    %4474 = vmatpush1.msra.mxu0 0.0
    %4475 = vmatprep.subr.mxu0 0.0
    %4476 = vmatpush1.msra.mxu0 0.0
    %4477 = vmatprep.subr.mxu0 0.0
    %4478 = vmatpush1.msra.mxu0 0.0
    %4479 = vmatprep.subr.mxu0 0.0
    %4480 = vmatpush1.msra.mxu0 0.0
    %4481 = vmatprep.subr.mxu0 0.0
    %4482 = vmatpush1.msra.mxu0 0.0
    %4483 = vmatprep.subr.mxu0 0.0
    %4484 = vmatpush1.msra.mxu0 0.0
    %4485 = vmatprep.mubr.f32.mxu0 0.0
    %4486 = vmatmul.mubr.f32.gmra.mrb[0].mxu0 %v4419
    %v4487 = vpop.f32.mrb[0].mxu0
    %v4488 = vadd.f32 %v4416, %v4487
    %v4489 = vpop.f32.mrb[0].mxu0
    %4490 = vdwg.mxu0
    %v4492 = vsel %vm627, %v4404, 0
    %4494 = vmatprep.subr.mxu0 0.0
    %4495 = vmatpush1.msra.mxu0 %v4406
    %4496 = vmatprep.subr.mxu0 0.0
    %4497 = vmatpush1.msra.mxu0 %v4407
    %4498 = vmatprep.subr.mxu0 0.0
    %4499 = vmatpush1.msra.mxu0 %v4408
    %4500 = vmatprep.subr.mxu0 0.0
    %4501 = vmatpush1.msra.mxu0 %v4409
    %4502 = vmatprep.subr.mxu0 0.0
    %4503 = vmatpush1.msra.mxu0 0.0
    %4504 = vmatprep.subr.mxu0 0.0
    %4505 = vmatpush1.msra.mxu0 0.0
    %4506 = vmatprep.subr.mxu0 0.0
    %4507 = vmatpush1.msra.mxu0 0.0
    %4508 = vmatprep.subr.mxu0 0.0
    %4509 = vmatpush1.msra.mxu0 0.0
    %4510 = vmatprep.subr.mxu0 0.0
    %4511 = vmatpush1.msra.mxu0 0.0
    %4512 = vmatprep.subr.mxu0 0.0
    %4513 = vmatpush1.msra.mxu0 0.0
    %4514 = vmatprep.subr.mxu0 0.0
    %4515 = vmatpush1.msra.mxu0 0.0
    %4516 = vmatprep.subr.mxu0 0.0
    %4517 = vmatpush1.msra.mxu0 0.0
    %4518 = vmatprep.subr.mxu0 0.0
    %4519 = vmatpush1.msra.mxu0 0.0
    %4520 = vmatprep.subr.mxu0 0.0
    %4521 = vmatpush1.msra.mxu0 0.0
    %4522 = vmatprep.subr.mxu0 0.0
    %4523 = vmatpush1.msra.mxu0 0.0
    %4524 = vmatprep.subr.mxu0 0.0
    %4525 = vmatpush1.msra.mxu0 0.0
    %4526 = vmatprep.subr.mxu0 0.0
    %4527 = vmatpush1.msra.mxu0 0.0
    %4528 = vmatprep.subr.mxu0 0.0
    %4529 = vmatpush1.msra.mxu0 0.0
    %4530 = vmatprep.subr.mxu0 0.0
    %4531 = vmatpush1.msra.mxu0 0.0
    %4532 = vmatprep.subr.mxu0 0.0
    %4533 = vmatpush1.msra.mxu0 0.0
    %4534 = vmatprep.subr.mxu0 0.0
    %4535 = vmatpush1.msra.mxu0 0.0
    %4536 = vmatprep.subr.mxu0 0.0
    %4537 = vmatpush1.msra.mxu0 0.0
    %4538 = vmatprep.subr.mxu0 0.0
    %4539 = vmatpush1.msra.mxu0 0.0
    %4540 = vmatprep.subr.mxu0 0.0
    %4541 = vmatpush1.msra.mxu0 0.0
    %4542 = vmatprep.subr.mxu0 0.0
    %4543 = vmatpush1.msra.mxu0 0.0
    %4544 = vmatprep.subr.mxu0 0.0
    %4545 = vmatpush1.msra.mxu0 0.0
    %4546 = vmatprep.subr.mxu0 0.0
    %4547 = vmatpush1.msra.mxu0 0.0
    %4548 = vmatprep.subr.mxu0 0.0
    %4549 = vmatpush1.msra.mxu0 0.0
    %4550 = vmatprep.subr.mxu0 0.0
    %4551 = vmatpush1.msra.mxu0 0.0
    %4552 = vmatprep.subr.mxu0 0.0
    %4553 = vmatpush1.msra.mxu0 0.0
    %4554 = vmatprep.subr.mxu0 0.0
    %4555 = vmatpush1.msra.mxu0 0.0
    %4556 = vmatprep.subr.mxu0 0.0
    %4557 = vmatpush1.msra.mxu0 0.0
    %4558 = vmatprep.mubr.f32.mxu0 0.0
    %4559 = vmatmul.mubr.f32.gmra.mrb[0].mxu0 %v4492
    %v4560 = vpop.f32.mrb[0].mxu0
    %v4561 = vadd.f32 %v4416, %v4560
    %v4562 = vpop.f32.mrb[0].mxu0
    %4563 = vdwg.mxu0
    %v4564 = vmul.f32 %v4488, 0.5
    %v4565 = vmul.f32 %v4561, 0.5
    %v4566 = vmul.f32 %v4488, 0.044715
    %v4567 = vmul.f32 %v4561, 0.044715
    %v4568 = vmul.f32 %v4566, %v4488
    %v4569 = vmul.f32 %v4567, %v4561
    %v4570 = vmul.f32 %v4568, %v4488
    %v4571 = vmul.f32 %v4569, %v4561
    %v4572 = vadd.f32 %v4488, %v4570
    %v4573 = vadd.f32 %v4561, %v4571
    %v4574 = vmul.f32 %v4572, 0.7978846
    %v4575 = vmul.f32 %v4573, 0.7978846
    %v4576 = vtanh.pop %v4574
    %v4577 = vtanh.pop %v4575
    %v4578 = vadd.f32 %v4576, 1.0
    %v4579 = vadd.f32 %v4577, 1.0
    %v4580 = vmul.f32 %v4564, %v4578
    %v4581 = vmul.f32 %v4565, %v4579
    %s4582 = scalar_lea.vmem %s9, 128
    %v4583 = vld [vmem:[%s4582] sm:$0xff]
    %v4584 = vld [vmem:[%s4582 + $0x8] sm:$0xff]
    %v4585 = vld [vmem:[%s4582 + $0x10] sm:$0xff]
    %v4586 = vld [vmem:[%s4582 + $0x18] sm:$0xff]
    %v4587 = vld [vmem:[%s4582 + $0x20] sm:$0xff]
    %v4588 = vld [vmem:[%s4582 + $0x28] sm:$0xff]
    %v4589 = vld [vmem:[%s4582 + $0x30] sm:$0xff]
    %v4590 = vld [vmem:[%s4582 + $0x38] sm:$0xff]
    %v4591 = vld [vmem:[%s4582 + $0x40] sm:$0xff]
    %v4592 = vld [vmem:[%s4582 + $0x48] sm:$0xff]
    %v4593 = vld [vmem:[%s4582 + $0x50] sm:$0xff]
    %v4594 = vld [vmem:[%s4582 + $0x58] sm:$0xff]
    %v4595 = vld [vmem:[%s4582 + $0x60] sm:$0xff]
    %v4596 = vld [vmem:[%s4582 + $0x68] sm:$0xff]
    %v4597 = vld [vmem:[%s4582 + $0x70] sm:$0xff]
    %v4598 = vld [vmem:[%s4582 + $0x78] sm:$0xff]
    %4599 = vmatprep.subr.mxu0 0.0
    %4600 = vmatpush1.msra.mxu0 %v4583
    %4601 = vmatprep.subr.mxu0 0.0
    %4602 = vmatpush1.msra.mxu0 %v4584
    %4603 = vmatprep.subr.mxu0 0.0
    %4604 = vmatpush1.msra.mxu0 %v4585
    %4605 = vmatprep.subr.mxu0 0.0
    %4606 = vmatpush1.msra.mxu0 %v4586
    %4607 = vmatprep.subr.mxu0 0.0
    %4608 = vmatpush1.msra.mxu0 %v4587
    %4609 = vmatprep.subr.mxu0 0.0
    %4610 = vmatpush1.msra.mxu0 %v4588
    %4611 = vmatprep.subr.mxu0 0.0
    %4612 = vmatpush1.msra.mxu0 %v4589
    %4613 = vmatprep.subr.mxu0 0.0
    %4614 = vmatpush1.msra.mxu0 %v4590
    %4615 = vmatprep.subr.mxu0 0.0
    %4616 = vmatpush1.msra.mxu0 %v4591
    %4617 = vmatprep.subr.mxu0 0.0
    %4618 = vmatpush1.msra.mxu0 %v4592
    %4619 = vmatprep.subr.mxu0 0.0
    %4620 = vmatpush1.msra.mxu0 %v4593
    %4621 = vmatprep.subr.mxu0 0.0
    %4622 = vmatpush1.msra.mxu0 %v4594
    %4623 = vmatprep.subr.mxu0 0.0
    %4624 = vmatpush1.msra.mxu0 %v4595
    %4625 = vmatprep.subr.mxu0 0.0
    %4626 = vmatpush1.msra.mxu0 %v4596
    %4627 = vmatprep.subr.mxu0 0.0
    %4628 = vmatpush1.msra.mxu0 %v4597
    %4629 = vmatprep.subr.mxu0 0.0
    %4630 = vmatpush1.msra.mxu0 %v4598
    %4631 = vmatprep.subr.mxu0 0.0
    %4632 = vmatpush1.msra.mxu0 0.0
    %4633 = vmatprep.subr.mxu0 0.0
    %4634 = vmatpush1.msra.mxu0 0.0
    %4635 = vmatprep.subr.mxu0 0.0
    %4636 = vmatpush1.msra.mxu0 0.0
    %4637 = vmatprep.subr.mxu0 0.0
    %4638 = vmatpush1.msra.mxu0 0.0
    %4639 = vmatprep.subr.mxu0 0.0
    %4640 = vmatpush1.msra.mxu0 0.0
    %4641 = vmatprep.subr.mxu0 0.0
    %4642 = vmatpush1.msra.mxu0 0.0
    %4643 = vmatprep.subr.mxu0 0.0
    %4644 = vmatpush1.msra.mxu0 0.0
    %4645 = vmatprep.subr.mxu0 0.0
    %4646 = vmatpush1.msra.mxu0 0.0
    %4647 = vmatprep.subr.mxu0 0.0
    %4648 = vmatpush1.msra.mxu0 0.0
    %4649 = vmatprep.subr.mxu0 0.0
    %4650 = vmatpush1.msra.mxu0 0.0
    %4651 = vmatprep.subr.mxu0 0.0
    %4652 = vmatpush1.msra.mxu0 0.0
    %4653 = vmatprep.subr.mxu0 0.0
    %4654 = vmatpush1.msra.mxu0 0.0
    %4655 = vmatprep.subr.mxu0 0.0
    %4656 = vmatpush1.msra.mxu0 0.0
    %4657 = vmatprep.subr.mxu0 0.0
    %4658 = vmatpush1.msra.mxu0 0.0
    %4659 = vmatprep.subr.mxu0 0.0
    %4660 = vmatpush1.msra.mxu0 0.0
    %4661 = vmatprep.subr.mxu0 0.0
    %4662 = vmatpush1.msra.mxu0 0.0
    %4663 = vmatprep.mubr.f32.mxu0 0.0
    %4664 = vmatmul.mubr.f32.gmra.mrb[0].mxu0 %v4580
    %v4665 = vpop.f32.mrb[0].mxu0
    %v4666 = vadd.f32 0.0, %v4665
    %v4667 = vpop.f32.mrb[0].mxu0
    %4668 = vdwg.mxu0
    %4669 = vmatprep.subr.mxu0 0.0
    %4670 = vmatpush1.msra.mxu0 %v4583
    %4671 = vmatprep.subr.mxu0 0.0
    %4672 = vmatpush1.msra.mxu0 %v4584
    %4673 = vmatprep.subr.mxu0 0.0
    %4674 = vmatpush1.msra.mxu0 %v4585
    %4675 = vmatprep.subr.mxu0 0.0
    %4676 = vmatpush1.msra.mxu0 %v4586
    %4677 = vmatprep.subr.mxu0 0.0
    %4678 = vmatpush1.msra.mxu0 %v4587
    %4679 = vmatprep.subr.mxu0 0.0
    %4680 = vmatpush1.msra.mxu0 %v4588
    %4681 = vmatprep.subr.mxu0 0.0
    %4682 = vmatpush1.msra.mxu0 %v4589
    %4683 = vmatprep.subr.mxu0 0.0
    %4684 = vmatpush1.msra.mxu0 %v4590
    %4685 = vmatprep.subr.mxu0 0.0
    %4686 = vmatpush1.msra.mxu0 %v4591
    %4687 = vmatprep.subr.mxu0 0.0
    %4688 = vmatpush1.msra.mxu0 %v4592
    %4689 = vmatprep.subr.mxu0 0.0
    %4690 = vmatpush1.msra.mxu0 %v4593
    %4691 = vmatprep.subr.mxu0 0.0
    %4692 = vmatpush1.msra.mxu0 %v4594
    %4693 = vmatprep.subr.mxu0 0.0
    %4694 = vmatpush1.msra.mxu0 %v4595
    %4695 = vmatprep.subr.mxu0 0.0
    %4696 = vmatpush1.msra.mxu0 %v4596
    %4697 = vmatprep.subr.mxu0 0.0
    %4698 = vmatpush1.msra.mxu0 %v4597
    %4699 = vmatprep.subr.mxu0 0.0
    %4700 = vmatpush1.msra.mxu0 %v4598
    %4701 = vmatprep.subr.mxu0 0.0
    %4702 = vmatpush1.msra.mxu0 0.0
    %4703 = vmatprep.subr.mxu0 0.0
    %4704 = vmatpush1.msra.mxu0 0.0
    %4705 = vmatprep.subr.mxu0 0.0
    %4706 = vmatpush1.msra.mxu0 0.0
    %4707 = vmatprep.subr.mxu0 0.0
    %4708 = vmatpush1.msra.mxu0 0.0
    %4709 = vmatprep.subr.mxu0 0.0
    %4710 = vmatpush1.msra.mxu0 0.0
    %4711 = vmatprep.subr.mxu0 0.0
    %4712 = vmatpush1.msra.mxu0 0.0
    %4713 = vmatprep.subr.mxu0 0.0
    %4714 = vmatpush1.msra.mxu0 0.0
    %4715 = vmatprep.subr.mxu0 0.0
    %4716 = vmatpush1.msra.mxu0 0.0
    %4717 = vmatprep.subr.mxu0 0.0
    %4718 = vmatpush1.msra.mxu0 0.0
    %4719 = vmatprep.subr.mxu0 0.0
    %4720 = vmatpush1.msra.mxu0 0.0
    %4721 = vmatprep.subr.mxu0 0.0
    %4722 = vmatpush1.msra.mxu0 0.0
    %4723 = vmatprep.subr.mxu0 0.0
    %4724 = vmatpush1.msra.mxu0 0.0
    %4725 = vmatprep.subr.mxu0 0.0
    %4726 = vmatpush1.msra.mxu0 0.0
    %4727 = vmatprep.subr.mxu0 0.0
    %4728 = vmatpush1.msra.mxu0 0.0
    %4729 = vmatprep.subr.mxu0 0.0
    %4730 = vmatpush1.msra.mxu0 0.0
    %4731 = vmatprep.subr.mxu0 0.0
    %4732 = vmatpush1.msra.mxu0 0.0
    %4733 = vmatprep.mubr.f32.mxu0 0.0
    %4734 = vmatmul.mubr.f32.gmra.mrb[0].mxu0 %v4581
    %v4735 = vpop.f32.mrb[0].mxu0
    %v4736 = vadd.f32 0.0, %v4735
    %v4737 = vpop.f32.mrb[0].mxu0
    %4738 = vdwg.mxu0
    %v4739 = vadd.f32 %v4377, %v4666
    %v4740 = vadd.f32 %v4378, %v4736
    %s4741 = scalar_lea.vmem %s10, 1
    %v4742 = vld [vmem:[%s4741] sm:$0x1]
    %v4744 = vlaneseq
    %v4745 = vshrl.u32 %v4744, 7
    %v4746 = vsub.s32 0, %v4745
    %v4747 = vrot.slane %v4742, %v4746
    %v4749 = vadd.f32 %v4739, %v4747
    %v4750 = vadd.f32 %v4740, %v4747
    %v4751 = vsel %vm588, %v4749, 0.0
    %4752 = vadd.xlane.f32.xlu0 %v4751
    %v4753 = vpop.xlane.xlu0 %4752
    %v4754 = vsel %vm588, %v4750, 0.0
    %4755 = vadd.xlane.f32.xlu0 %v4754
    %v4756 = vpop.xlane.xlu0 %4755
    %v4757 = vmul.f32 %v4753, %v595
    %v4758 = vmul.f32 %v4756, %v595
    %v4759 = vsub.f32 %v4749, %v4757
    %v4760 = vsub.f32 %v4750, %v4758
    %v4761 = vmul.f32 %v4759, %v4759
    %v4762 = vmul.f32 %v4760, %v4760
    %v4763 = vsel %vm588, %v4761, 0.0
    %4764 = vadd.xlane.f32.xlu0 %v4763
    %v4765 = vpop.xlane.xlu0 %4764
    %v4766 = vsel %vm588, %v4762, 0.0
    %4767 = vadd.xlane.f32.xlu0 %v4766
    %v4768 = vpop.xlane.xlu0 %4767
    %v4769 = vmul.f32 %v4765, %v595
    %v4770 = vmul.f32 %v4768, %v595
    %v4771 = vadd.f32 %v4769, 1e-06
    %v4772 = vadd.f32 %v4770, 1e-06
    %v4773 = vrsqrt.pop %v4771
    %v4774 = vrsqrt.pop %v4772
    %v4775 = vmul.f32 %v4759, %v4773
    %v4776 = vmul.f32 %v4760, %v4774
    %v4777 = vld [vmem:[%s11] sm:$0x1]
    %v4779 = vlaneseq
    %v4780 = vshrl.u32 %v4779, 7
    %v4781 = vsub.s32 0, %v4780
    %v4782 = vrot.slane %v4777, %v4781
    %v4784 = vmul.f32 %v4775, %v4782
    %v4785 = vmul.f32 %v4776, %v4782
    %v4786 = vld [vmem:[%s12] sm:$0x1]
    %v4788 = vlaneseq
    %v4789 = vshrl.u32 %v4788, 7
    %v4790 = vsub.s32 0, %v4789
    %v4791 = vrot.slane %v4786, %v4790
    %v4793 = vadd.f32 %v4784, %v4791
    %v4794 = vadd.f32 %v4785, %v4791
    %v4797 = vrot.slane %v4793, 1
    %v4798 = vrot.slane %v4794, 1
    %vm4801 = vcmask 257024
    %v4802 = vsel %vm4801, %v4797, 0.0
    %v4803 = vrot.slane %v4802, 4
    %v4804 = vadd.f32 %v4802, %v4803
    %v4805 = vrot.slane %v4804, 2
    %v4806 = vadd.f32 %v4804, %v4805
    %v4807 = vrot.slane %v4806, 1
    %v4808 = vadd.f32 %v4806, %v4807
    %v4809 = vsel %vm4801, %v4798, 0.0
    %v4810 = vrot.slane %v4809, 4
    %v4811 = vadd.f32 %v4809, %v4810
    %v4812 = vrot.slane %v4811, 2
    %v4813 = vadd.f32 %v4811, %v4812
    %v4814 = vrot.slane %v4813, 1
    %v4815 = vadd.f32 %v4813, %v4814
    %v4816 = vrcp.pop 4.0
    %v4817 = vmul.f32 %v4808, %v4816
    %v4818 = vmul.f32 %v4815, %v4816
    %4821 = vrot.lane.b32.xlu0 %v4817, 32
    %v4822 = vpop.permute.xlu0 %4821
    %4823 = vrot.lane.b32.xlu0 %v4818, 32
    %v4824 = vpop.permute.xlu0 %4823
    %v4827 = vsel %vm627, %v4793, %v4822
    %v4828 = vsel %vm627, %v4794, %v4824
    %vm4829 = vcmask 516096
    %4830 = vst.msk [vmem:[#allocation3] sm:$0x1] %vm4829, %v4827
    %4831 = vst.msk [vmem:[#allocation3 + $0x1] sm:$0x1] %vm4829, %v4828
    %4834 = vrot.lane.b32.xlu0 %v4184, 127
    %v4835 = vpop.permute.xlu0 %4834
    %4836 = vrot.lane.b32.xlu0 %v4185, 127
    %v4837 = vpop.permute.xlu0 %4836
    %vm4840 = vcmask 24576
    %4841 = vst.msk [vmem:[%s14] sm:$0x1] %vm4840, %v4835
    %4842 = vst.msk [vmem:[%s14 + $0x1] sm:$0x1] %vm4840, %v4837
    // Predicated region
    $region54: #{image_dino_encoder.1} parent=1 // pred_check
      _
    $region55: #{image_dino_encoder.1} parent=1 // pred_check_branch
      %4844 = sbr.rel (0) target = $region57
    $region56: #{image_dino_encoder.1} parent=1 // pred_region
      %s4846 = ssub.s32 32, 32
      %4847 = vsyncadd [#allocation4], %s4846
      %s4848 = sshll.u32 [#allocation3], 4
      %s4849 = int_to_ptr.vmem [resolvable:$true] %s4848
      %4854 = dma.vmem_to_hbm [thread:$0]  %s4849, 32, %s13, [#allocation4], 16, 16, 1
    $region57: #{image_dino_encoder.1} parent=1 // pred_fallthru
      _
    // Predicated region
    $region58: #{image_dino_encoder.1} parent=1 // pred_check
      _
    $region59: #{image_dino_encoder.1} parent=1 // pred_check_branch
      %4856 = sbr.rel (0) target = $region61
    $region60: #{image_dino_encoder.1} parent=1 // pred_region
      _
    $region61: #{image_dino_encoder.1} parent=1 // pred_fallthru
      _
    // Predicated region
    $region62: #{image_dino_encoder.1} parent=1 // pred_check
      _
    $region63: #{image_dino_encoder.1} parent=1 // pred_check_branch
      %4858 = sbr.rel (0) target = $region65
    $region64: #{image_dino_encoder.1} parent=1 // pred_region
      %4859 = dma.done [#allocation4], 32
    $region65: #{image_dino_encoder.1} parent=1 // pred_fallthru
      _
    // Predicated region
    $region66: #{image_dino_encoder.1} parent=1 // pred_check
      _
    $region67: #{image_dino_encoder.1} parent=1 // pred_check_branch
      %4861 = sbr.rel (0) target = $region69
    $region68: #{image_dino_encoder.1} parent=1 // pred_region
      _
    $region69: #{image_dino_encoder.1} parent=1 // pred_fallthru
      _
    %4862 = vsyncpa [#allocation4], 1

</llo_original>
